<compile_context>
chip_gen: v7x
topology: tpu7x:2x2x1
jax: 0.10.0
libtpu: 0.0.40
codegen_flags: <defaults>
</compile_context>

<pallas_src>
import jax
import jax.numpy as jnp
from jax.experimental import pallas as pl
from jax.experimental.pallas import tpu as pltpu


# ----------------------------------------------------------------------------
# Pallas kernel
# ----------------------------------------------------------------------------
def _decoder_block_kernel(x_ref, w_ref, o_ref):
    """Fused nearest-2x-upsample + 3x3 conv + ReLU for one image / row tile.

    x_ref : (H+2, W+2, Cin)      bf16  zero-padded low-res image (resident)
    w_ref : (4, 4*Cin, Cpad)     bf16  per-phase K-packed weights
    o_ref : (TH, 2, W, 2*Cpad)   bf16  out[i, a, j, b*Cpad + c] = y[2i+a, 2j+b, c]
    """
    th, _, w, two_cpad = o_ref.shape
    cpad = two_cpad // 2
    cin = x_ref.shape[-1]

    row0 = pl.program_id(1) * th        # first low-res row of this tile

    # Padded-image start offsets for the two output phases along each axis:
    #   phase 0 -> taps at padded rows/cols {i+0, i+1}; phase 1 -> {i+1, i+2}.
    off = ((0, 1), (1, 2))

    for a in range(2):                  # output row phase
        for b in range(2):              # output col phase
            # K-packed LHS: the 4 tap windows concatenated along channels in
            # tap order (ry, rx) — must match _pack_phase_weights.
            lhs = jnp.concatenate(
                [x_ref[pl.ds(row0 + off[a][ry], th),
                       off[b][rx]:off[b][rx] + w, :]
                 for ry in range(2) for rx in range(2)],
                axis=-1,
            ).reshape(th * w, 4 * cin)

            acc = jnp.dot(lhs, w_ref[a * 2 + b],
                          preferred_element_type=jnp.float32)

            # ReLU in f32, cast to bf16, lane-dense store (width Cpad >= 128 at
            # a 128-aligned offset; b-major channel-minor layout makes the
            # final reshape to (N, 2H, 2W, C) free).
            o_ref[:, a, :, b * cpad:(b + 1) * cpad] = (
                jnp.maximum(acc, 0.0).reshape(th, w, cpad).astype(o_ref.dtype))


# ----------------------------------------------------------------------------
# Host-side helpers
# ----------------------------------------------------------------------------
def _round_up(x, m):
    return ((x + m - 1) // m) * m


def _pack_phase_weights(w_hwio, cpad):
    """Fold the 3x3 HWIO kernel into 4 K-packed matrices [4, 4*Cin, Cpad].

    Phase p = a*2 + b; inside each phase the 4 taps (ry, rx) are concatenated
    along the Cin (K) axis in the order ry-major, rx-minor, where
      W_eff[a,b,ry,rx] = sum_{ky in Ky(a,ry), kx in Kx(b,rx)} w[ky, kx]
      Ky(0,*) = {0}, {1,2};   Ky(1,*) = {0,1}, {2}   (same for Kx with b).
    Output channels are zero-padded from Cout to Cpad.
    """
    _, _, cin, cout = w_hwio.shape
    sets = (((0,), (1, 2)), ((0, 1), (2,)))
    phases = []
    for a in range(2):
        for b in range(2):
            taps = []
            for ry in range(2):
                for rx in range(2):
                    acc = jnp.zeros((cin, cout), w_hwio.dtype)
                    for ky in sets[a][ry]:
                        for kx in sets[b][rx]:
                            acc = acc + w_hwio[ky, kx]
                    taps.append(acc)
            phases.append(jnp.concatenate(taps, axis=0))     # (4*Cin, Cout)
    wp = jnp.stack(phases, axis=0)                            # (4, 4*Cin, Cout)
    if cpad != cout:
        wp = jnp.pad(wp, ((0, 0), (0, 0), (0, cpad - cout)))
    return wp


def _pick_row_tile(h, w, cpad, target_bytes=2 << 20):
    """Largest divisor of H whose bf16 output block stays under target_bytes."""
    row_bytes = 2 * w * (2 * cpad) * 2            # one low-res row, bf16
    max_rows = max(1, target_bytes // row_bytes)
    if h <= max_rows:
        return h
    for th in range(int(max_rows), 0, -1):
        if h % th == 0:
            return th
    return h


def decoder_block_forward_nhwc(x_nhwc, w_hwio, *, row_tile=None):
    """y = relu(conv3x3_pad1(upsample_nearest_2x(x))) for NHWC x, HWIO w.

    Returns bf16 NHWC output of shape (N, 2H, 2W, Cout).
    """
    n, h, w, cin = x_nhwc.shape
    kh, kw, wcin, cout = w_hwio.shape
    assert (kh, kw) == (3, 3) and wcin == cin

    cpad = _round_up(cout, 128)                    # lane-dense / unmasked stores
    th = row_tile if row_tile is not None else _pick_row_tile(h, w, cpad)
    assert h % th == 0, (h, th)

    # NOTE: the 1-pixel zero pad is a single cheap XLA pass over the (4x
    # smaller) low-res input; folding it into the kernel is a modest win left
    # for the halo-DMA variant.
    xp = jnp.pad(x_nhwc.astype(jnp.bfloat16), ((0, 0), (1, 1), (1, 1), (0, 0)))
    wp = _pack_phase_weights(w_hwio, cpad).astype(jnp.bfloat16)

    # VMEM budget from the actual (double-buffered) block sizes + headroom.
    in_block = (h + 2) * (w + 2) * cin * 2
    w_block = 4 * (4 * cin) * cpad * 2
    out_block = th * 2 * w * (2 * cpad) * 2
    vmem_limit = 2 * (in_block + w_block + out_block) + (4 << 20)
    vmem_limit = int(min(max(vmem_limit, 16 << 20), 96 << 20))

    grid = (n, h // th)

    out = pl.pallas_call(
        _decoder_block_kernel,
        out_shape=jax.ShapeDtypeStruct((n, h, 2, w, 2 * cpad), jnp.bfloat16),
        grid=grid,
        in_specs=[
            # Whole padded image per batch element; index ignores the row-tile
            # axis so the block stays resident (no re-DMA across row tiles).
            pl.BlockSpec((None, h + 2, w + 2, cin), lambda ni, hi: (ni, 0, 0, 0)),
            # Packed weights: single block, fetched once.
            pl.BlockSpec((4, 4 * cin, cpad), lambda ni, hi: (0, 0, 0)),
        ],
        out_specs=pl.BlockSpec((None, th, 2, w, 2 * cpad),
                               lambda ni, hi: (ni, hi, 0, 0, 0)),
        compiler_params=pltpu.CompilerParams(
            dimension_semantics=("parallel", "parallel"),
            vmem_limit_bytes=vmem_limit,
        ),
    )(xp, wp)

    # (N, H, 2, W, 2*Cpad) -> (N, H, 2, W, 2, Cpad) is free; the :cout slice is
    # a no-op when Cout is already a 128-multiple and otherwise fuses with any
    # downstream transpose/cast; final merge to (N, 2H, 2W, Cout) is row-major
    # free.
    y = out.reshape(n, h, 2, w, 2, cpad)[..., :cout]
    return y.reshape(n, 2 * h, 2 * w, cout)


def decoder_block_forward(x_nchw, w_hwio, *, row_tile=None):
    """NCHW-in / NCHW-f32-out wrapper matching the PyTorch module interface."""
    x = jnp.transpose(x_nchw, (0, 2, 3, 1))                    # NCHW -> NHWC
    y = decoder_block_forward_nhwc(x, w_hwio, row_tile=row_tile)
    # Single fused transpose+cast pass.  An NHWC model should call
    # decoder_block_forward_nhwc directly and skip it.
    return jnp.transpose(y, (0, 3, 1, 2)).astype(x_nchw.dtype)


# ----------------------------------------------------------------------------
# Pure-JAX reference (validation only)
# ----------------------------------------------------------------------------
def decoder_block_reference(x_nchw, w_hwio):
    x = jnp.transpose(x_nchw, (0, 2, 3, 1))
    up = jnp.repeat(jnp.repeat(x, 2, axis=1), 2, axis=2)       # nearest 2x
    y = jax.lax.conv_general_dilated(
        up, w_hwio, window_strides=(1, 1), padding=((1, 1), (1, 1)),
        dimension_numbers=("NHWC", "HWIO", "NHWC"))
    y = jnp.maximum(y, 0.0)
    return jnp.transpose(y, (0, 3, 1, 2))


# ----------------------------------------------------------------------------
if __name__ == "__main__":
    num_in, num_out = 32, 64
    batch, spatial = 2, 16

    key = jax.random.PRNGKey(0)
    kx, kw = jax.random.split(key)
    x = jax.random.normal(kx, (batch, num_in, spatial, spatial), jnp.float32)
    w = jax.random.normal(kw, (3, 3, num_in, num_out), jnp.float32) / jnp.sqrt(
        jnp.float32(9 * num_in))

    y = jax.jit(decoder_block_forward)(x, w)
    jax.block_until_ready(y)
    assert y.shape == (batch, num_out, 2 * spatial, 2 * spatial), y.shape
    assert bool(jnp.isfinite(y).all())

    y_ref = jax.jit(decoder_block_reference)(x, w)
    tol = 2e-2 * float(jnp.max(jnp.abs(y_ref))) + 5e-3          # bf16 MXU + bf16 out
    err = float(jnp.max(jnp.abs(y - y_ref)))
    assert err <= tol, (err, tol)

    # Also exercise the multi-row-tile path (grid = (2, 2)).
    y_rt = jax.jit(lambda a, b: decoder_block_forward(a, b, row_tile=8))(x, w)
    jax.block_until_ready(y_rt)
    err_rt = float(jnp.max(jnp.abs(y_rt - y_ref)))
    assert err_rt <= tol, (err_rt, tol)

    print("KERNEL_OK")
</pallas_src>

<mosaic_0001>
module attributes {stable_mosaic.version = 11 : i64} {
  func.func @_decoder_block_kernel(%arg0: i32, %arg1: i32, %arg2: memref<1x18x18x32xbf16, #tpu.memory_space<vmem>>, %arg3: memref<4x128x128xbf16, #tpu.memory_space<vmem>>, %arg4: memref<1x16x2x16x256xbf16, #tpu.memory_space<vmem>>) attributes {dimension_semantics = [#tpu.dimension_semantics<parallel>, #tpu.dimension_semantics<parallel>], iteration_bounds = array<i64: 2, 1>, scalar_prefetch = 0 : i64, scratch_operands = 0 : i64, tpu.core_type = #tpu.core_type<tc>, window_params = [{transform_indices = @transform_0, window_bounds = array<i64: 1, 18, 18, 32>}, {pipeline_mode = #tpu.pipeline_mode<synchronous>, transform_indices = @transform_1, window_bounds = array<i64: 4, 128, 128>}, {transform_indices = @transform_2, window_bounds = array<i64: 1, 16, 2, 16, 256>}]} {
    %c16_i32 = arith.constant 16 : i32
    %0 = arith.muli %arg1, %c16_i32 : i32
    %c0_i32 = arith.constant 0 : i32
    %1 = arith.addi %0, %c0_i32 : i32
    %c0 = arith.constant 0 : index
    %2 = arith.index_cast %1 : i32 to index
    %c0_0 = arith.constant 0 : index
    %c0_1 = arith.constant 0 : index
    %3 = vector.load %arg2[%c0, %2, %c0_0, %c0_1] : memref<1x18x18x32xbf16, #tpu.memory_space<vmem>>, vector<1x16x16x32xbf16>
    %4 = vector.shape_cast %3 : vector<1x16x16x32xbf16> to vector<16x16x32xbf16>
    %c0_i32_2 = arith.constant 0 : i32
    %5 = arith.addi %0, %c0_i32_2 : i32
    %c0_3 = arith.constant 0 : index
    %6 = arith.index_cast %5 : i32 to index
    %c1 = arith.constant 1 : index
    %c0_4 = arith.constant 0 : index
    %7 = vector.load %arg2[%c0_3, %6, %c1, %c0_4] : memref<1x18x18x32xbf16, #tpu.memory_space<vmem>>, vector<1x16x16x32xbf16>
    %8 = vector.shape_cast %7 : vector<1x16x16x32xbf16> to vector<16x16x32xbf16>
    %c1_i32 = arith.constant 1 : i32
    %9 = arith.addi %0, %c1_i32 : i32
    %c0_5 = arith.constant 0 : index
    %10 = arith.index_cast %9 : i32 to index
    %c0_6 = arith.constant 0 : index
    %c0_7 = arith.constant 0 : index
    %11 = vector.load %arg2[%c0_5, %10, %c0_6, %c0_7] : memref<1x18x18x32xbf16, #tpu.memory_space<vmem>>, vector<1x16x16x32xbf16>
    %12 = vector.shape_cast %11 : vector<1x16x16x32xbf16> to vector<16x16x32xbf16>
    %c1_i32_8 = arith.constant 1 : i32
    %13 = arith.addi %0, %c1_i32_8 : i32
    %c0_9 = arith.constant 0 : index
    %14 = arith.index_cast %13 : i32 to index
    %c1_10 = arith.constant 1 : index
    %c0_11 = arith.constant 0 : index
    %15 = vector.load %arg2[%c0_9, %14, %c1_10, %c0_11] : memref<1x18x18x32xbf16, #tpu.memory_space<vmem>>, vector<1x16x16x32xbf16>
    %16 = vector.shape_cast %15 : vector<1x16x16x32xbf16> to vector<16x16x32xbf16>
    %17 = tpu.concatenate %4, %8, %12, %16 in 2 : vector<16x16x32xbf16>, vector<16x16x32xbf16>, vector<16x16x32xbf16>, vector<16x16x32xbf16> -> vector<16x16x128xbf16>
    %18 = vector.shape_cast %17 : vector<16x16x128xbf16> to vector<256x128xbf16>
    %c0_12 = arith.constant 0 : index
    %c0_13 = arith.constant 0 : index
    %c0_14 = arith.constant 0 : index
    %19 = vector.load %arg3[%c0_12, %c0_13, %c0_14] : memref<4x128x128xbf16, #tpu.memory_space<vmem>>, vector<1x128x128xbf16>
    %20 = vector.shape_cast %19 : vector<1x128x128xbf16> to vector<128x128xbf16>
    %cst = arith.constant dense<0.000000e+00> : vector<256x128xf32>
    %21 = tpu.matmul %18, %20, %cst {dimension_numbers = #tpu.dot_dimension_numbers<[1], [0], [0], [1], [0, 0, 1, 1], [], []>} : vector<256x128xbf16>, vector<128x128xbf16>, vector<256x128xf32> -> vector<256x128xf32>
    %cst_15 = arith.constant 0.000000e+00 : f32
    %22 = vector.broadcast %cst_15 : f32 to vector<256x128xf32>
    %23 = arith.maximumf %21, %22 : vector<256x128xf32>
    %24 = vector.shape_cast %23 : vector<256x128xf32> to vector<16x16x128xf32>
    %25 = arith.truncf %24 : vector<16x16x128xf32> to vector<16x16x128xbf16>
    %c0_16 = arith.constant 0 : index
    %c0_17 = arith.constant 0 : index
    %c0_18 = arith.constant 0 : index
    %c0_19 = arith.constant 0 : index
    %c0_20 = arith.constant 0 : index
    %26 = vector.load %arg4[%c0_16, %c0_17, %c0_18, %c0_19, %c0_20] : memref<1x16x2x16x256xbf16, #tpu.memory_space<vmem>>, vector<1x16x1x16x128xbf16>
    %27 = vector.shape_cast %26 : vector<1x16x1x16x128xbf16> to vector<16x16x128xbf16>
    %28 = vector.shape_cast %25 : vector<16x16x128xbf16> to vector<1x16x1x16x128xbf16>
    tpu.vector_store %arg4[%c0_16, %c0_17, %c0_18, %c0_19, %c0_20], %28 {strides = array<i32>} : memref<1x16x2x16x256xbf16, #tpu.memory_space<vmem>>, vector<1x16x1x16x128xbf16>,
    %c0_i32_21 = arith.constant 0 : i32
    %29 = arith.addi %0, %c0_i32_21 : i32
    %c0_22 = arith.constant 0 : index
    %30 = arith.index_cast %29 : i32 to index
    %c1_23 = arith.constant 1 : index
    %c0_24 = arith.constant 0 : index
    %31 = vector.load %arg2[%c0_22, %30, %c1_23, %c0_24] : memref<1x18x18x32xbf16, #tpu.memory_space<vmem>>, vector<1x16x16x32xbf16>
    %32 = vector.shape_cast %31 : vector<1x16x16x32xbf16> to vector<16x16x32xbf16>
    %c0_i32_25 = arith.constant 0 : i32
    %33 = arith.addi %0, %c0_i32_25 : i32
    %c0_26 = arith.constant 0 : index
    %34 = arith.index_cast %33 : i32 to index
    %c2 = arith.constant 2 : index
    %c0_27 = arith.constant 0 : index
    %35 = vector.load %arg2[%c0_26, %34, %c2, %c0_27] : memref<1x18x18x32xbf16, #tpu.memory_space<vmem>>, vector<1x16x16x32xbf16>
    %36 = vector.shape_cast %35 : vector<1x16x16x32xbf16> to vector<16x16x32xbf16>
    %c1_i32_28 = arith.constant 1 : i32
    %37 = arith.addi %0, %c1_i32_28 : i32
    %c0_29 = arith.constant 0 : index
    %38 = arith.index_cast %37 : i32 to index
    %c1_30 = arith.constant 1 : index
    %c0_31 = arith.constant 0 : index
    %39 = vector.load %arg2[%c0_29, %38, %c1_30, %c0_31] : memref<1x18x18x32xbf16, #tpu.memory_space<vmem>>, vector<1x16x16x32xbf16>
    %40 = vector.shape_cast %39 : vector<1x16x16x32xbf16> to vector<16x16x32xbf16>
    %c1_i32_32 = arith.constant 1 : i32
    %41 = arith.addi %0, %c1_i32_32 : i32
    %c0_33 = arith.constant 0 : index
    %42 = arith.index_cast %41 : i32 to index
    %c2_34 = arith.constant 2 : index
    %c0_35 = arith.constant 0 : index
    %43 = vector.load %arg2[%c0_33, %42, %c2_34, %c0_35] : memref<1x18x18x32xbf16, #tpu.memory_space<vmem>>, vector<1x16x16x32xbf16>
    %44 = vector.shape_cast %43 : vector<1x16x16x32xbf16> to vector<16x16x32xbf16>
    %45 = tpu.concatenate %32, %36, %40, %44 in 2 : vector<16x16x32xbf16>, vector<16x16x32xbf16>, vector<16x16x32xbf16>, vector<16x16x32xbf16> -> vector<16x16x128xbf16>
    %46 = vector.shape_cast %45 : vector<16x16x128xbf16> to vector<256x128xbf16>
    %c1_36 = arith.constant 1 : index
    %c0_37 = arith.constant 0 : index
    %c0_38 = arith.constant 0 : index
    %47 = vector.load %arg3[%c1_36, %c0_37, %c0_38] : memref<4x128x128xbf16, #tpu.memory_space<vmem>>, vector<1x128x128xbf16>
    %48 = vector.shape_cast %47 : vector<1x128x128xbf16> to vector<128x128xbf16>
    %cst_39 = arith.constant dense<0.000000e+00> : vector<256x128xf32>
    %49 = tpu.matmul %46, %48, %cst_39 {dimension_numbers = #tpu.dot_dimension_numbers<[1], [0], [0], [1], [0, 0, 1, 1], [], []>} : vector<256x128xbf16>, vector<128x128xbf16>, vector<256x128xf32> -> vector<256x128xf32>
    %cst_40 = arith.constant 0.000000e+00 : f32
    %50 = vector.broadcast %cst_40 : f32 to vector<256x128xf32>
    %51 = arith.maximumf %49, %50 : vector<256x128xf32>
    %52 = vector.shape_cast %51 : vector<256x128xf32> to vector<16x16x128xf32>
    %53 = arith.truncf %52 : vector<16x16x128xf32> to vector<16x16x128xbf16>
    %c0_41 = arith.constant 0 : index
    %c0_42 = arith.constant 0 : index
    %c0_43 = arith.constant 0 : index
    %c0_44 = arith.constant 0 : index
    %c128 = arith.constant 128 : index
    %54 = vector.load %arg4[%c0_41, %c0_42, %c0_43, %c0_44, %c128] : memref<1x16x2x16x256xbf16, #tpu.memory_space<vmem>>, vector<1x16x1x16x128xbf16>
    %55 = vector.shape_cast %54 : vector<1x16x1x16x128xbf16> to vector<16x16x128xbf16>
    %56 = vector.shape_cast %53 : vector<16x16x128xbf16> to vector<1x16x1x16x128xbf16>
    tpu.vector_store %arg4[%c0_41, %c0_42, %c0_43, %c0_44, %c128], %56 {strides = array<i32>} : memref<1x16x2x16x256xbf16, #tpu.memory_space<vmem>>, vector<1x16x1x16x128xbf16>,
    %c1_i32_45 = arith.constant 1 : i32
    %57 = arith.addi %0, %c1_i32_45 : i32
    %c0_46 = arith.constant 0 : index
    %58 = arith.index_cast %57 : i32 to index
    %c0_47 = arith.constant 0 : index
    %c0_48 = arith.constant 0 : index
    %59 = vector.load %arg2[%c0_46, %58, %c0_47, %c0_48] : memref<1x18x18x32xbf16, #tpu.memory_space<vmem>>, vector<1x16x16x32xbf16>
    %60 = vector.shape_cast %59 : vector<1x16x16x32xbf16> to vector<16x16x32xbf16>
    %c1_i32_49 = arith.constant 1 : i32
    %61 = arith.addi %0, %c1_i32_49 : i32
    %c0_50 = arith.constant 0 : index
    %62 = arith.index_cast %61 : i32 to index
    %c1_51 = arith.constant 1 : index
    %c0_52 = arith.constant 0 : index
    %63 = vector.load %arg2[%c0_50, %62, %c1_51, %c0_52] : memref<1x18x18x32xbf16, #tpu.memory_space<vmem>>, vector<1x16x16x32xbf16>
    %64 = vector.shape_cast %63 : vector<1x16x16x32xbf16> to vector<16x16x32xbf16>
    %c2_i32 = arith.constant 2 : i32
    %65 = arith.addi %0, %c2_i32 : i32
    %c0_53 = arith.constant 0 : index
    %66 = arith.index_cast %65 : i32 to index
    %c0_54 = arith.constant 0 : index
    %c0_55 = arith.constant 0 : index
    %67 = vector.load %arg2[%c0_53, %66, %c0_54, %c0_55] : memref<1x18x18x32xbf16, #tpu.memory_space<vmem>>, vector<1x16x16x32xbf16>
    %68 = vector.shape_cast %67 : vector<1x16x16x32xbf16> to vector<16x16x32xbf16>
    %c2_i32_56 = arith.constant 2 : i32
    %69 = arith.addi %0, %c2_i32_56 : i32
    %c0_57 = arith.constant 0 : index
    %70 = arith.index_cast %69 : i32 to index
    %c1_58 = arith.constant 1 : index
    %c0_59 = arith.constant 0 : index
    %71 = vector.load %arg2[%c0_57, %70, %c1_58, %c0_59] : memref<1x18x18x32xbf16, #tpu.memory_space<vmem>>, vector<1x16x16x32xbf16>
    %72 = vector.shape_cast %71 : vector<1x16x16x32xbf16> to vector<16x16x32xbf16>
    %73 = tpu.concatenate %60, %64, %68, %72 in 2 : vector<16x16x32xbf16>, vector<16x16x32xbf16>, vector<16x16x32xbf16>, vector<16x16x32xbf16> -> vector<16x16x128xbf16>
    %74 = vector.shape_cast %73 : vector<16x16x128xbf16> to vector<256x128xbf16>
    %c2_60 = arith.constant 2 : index
    %c0_61 = arith.constant 0 : index
    %c0_62 = arith.constant 0 : index
    %75 = vector.load %arg3[%c2_60, %c0_61, %c0_62] : memref<4x128x128xbf16, #tpu.memory_space<vmem>>, vector<1x128x128xbf16>
    %76 = vector.shape_cast %75 : vector<1x128x128xbf16> to vector<128x128xbf16>
    %cst_63 = arith.constant dense<0.000000e+00> : vector<256x128xf32>
    %77 = tpu.matmul %74, %76, %cst_63 {dimension_numbers = #tpu.dot_dimension_numbers<[1], [0], [0], [1], [0, 0, 1, 1], [], []>} : vector<256x128xbf16>, vector<128x128xbf16>, vector<256x128xf32> -> vector<256x128xf32>
    %cst_64 = arith.constant 0.000000e+00 : f32
    %78 = vector.broadcast %cst_64 : f32 to vector<256x128xf32>
    %79 = arith.maximumf %77, %78 : vector<256x128xf32>
    %80 = vector.shape_cast %79 : vector<256x128xf32> to vector<16x16x128xf32>
    %81 = arith.truncf %80 : vector<16x16x128xf32> to vector<16x16x128xbf16>
    %c0_65 = arith.constant 0 : index
    %c0_66 = arith.constant 0 : index
    %c1_67 = arith.constant 1 : index
    %c0_68 = arith.constant 0 : index
    %c0_69 = arith.constant 0 : index
    %82 = vector.load %arg4[%c0_65, %c0_66, %c1_67, %c0_68, %c0_69] : memref<1x16x2x16x256xbf16, #tpu.memory_space<vmem>>, vector<1x16x1x16x128xbf16>
    %83 = vector.shape_cast %82 : vector<1x16x1x16x128xbf16> to vector<16x16x128xbf16>
    %84 = vector.shape_cast %81 : vector<16x16x128xbf16> to vector<1x16x1x16x128xbf16>
    tpu.vector_store %arg4[%c0_65, %c0_66, %c1_67, %c0_68, %c0_69], %84 {strides = array<i32>} : memref<1x16x2x16x256xbf16, #tpu.memory_space<vmem>>, vector<1x16x1x16x128xbf16>,
    %c1_i32_70 = arith.constant 1 : i32
    %85 = arith.addi %0, %c1_i32_70 : i32
    %c0_71 = arith.constant 0 : index
    %86 = arith.index_cast %85 : i32 to index
    %c1_72 = arith.constant 1 : index
    %c0_73 = arith.constant 0 : index
    %87 = vector.load %arg2[%c0_71, %86, %c1_72, %c0_73] : memref<1x18x18x32xbf16, #tpu.memory_space<vmem>>, vector<1x16x16x32xbf16>
    %88 = vector.shape_cast %87 : vector<1x16x16x32xbf16> to vector<16x16x32xbf16>
    %c1_i32_74 = arith.constant 1 : i32
    %89 = arith.addi %0, %c1_i32_74 : i32
    %c0_75 = arith.constant 0 : index
    %90 = arith.index_cast %89 : i32 to index
    %c2_76 = arith.constant 2 : index
    %c0_77 = arith.constant 0 : index
    %91 = vector.load %arg2[%c0_75, %90, %c2_76, %c0_77] : memref<1x18x18x32xbf16, #tpu.memory_space<vmem>>, vector<1x16x16x32xbf16>
    %92 = vector.shape_cast %91 : vector<1x16x16x32xbf16> to vector<16x16x32xbf16>
    %c2_i32_78 = arith.constant 2 : i32
    %93 = arith.addi %0, %c2_i32_78 : i32
    %c0_79 = arith.constant 0 : index
    %94 = arith.index_cast %93 : i32 to index
    %c1_80 = arith.constant 1 : index
    %c0_81 = arith.constant 0 : index
    %95 = vector.load %arg2[%c0_79, %94, %c1_80, %c0_81] : memref<1x18x18x32xbf16, #tpu.memory_space<vmem>>, vector<1x16x16x32xbf16>
    %96 = vector.shape_cast %95 : vector<1x16x16x32xbf16> to vector<16x16x32xbf16>
    %c2_i32_82 = arith.constant 2 : i32
    %97 = arith.addi %0, %c2_i32_82 : i32
    %c0_83 = arith.constant 0 : index
    %98 = arith.index_cast %97 : i32 to index
    %c2_84 = arith.constant 2 : index
    %c0_85 = arith.constant 0 : index
    %99 = vector.load %arg2[%c0_83, %98, %c2_84, %c0_85] : memref<1x18x18x32xbf16, #tpu.memory_space<vmem>>, vector<1x16x16x32xbf16>
    %100 = vector.shape_cast %99 : vector<1x16x16x32xbf16> to vector<16x16x32xbf16>
    %101 = tpu.concatenate %88, %92, %96, %100 in 2 : vector<16x16x32xbf16>, vector<16x16x32xbf16>, vector<16x16x32xbf16>, vector<16x16x32xbf16> -> vector<16x16x128xbf16>
    %102 = vector.shape_cast %101 : vector<16x16x128xbf16> to vector<256x128xbf16>
    %c3 = arith.constant 3 : index
    %c0_86 = arith.constant 0 : index
    %c0_87 = arith.constant 0 : index
    %103 = vector.load %arg3[%c3, %c0_86, %c0_87] : memref<4x128x128xbf16, #tpu.memory_space<vmem>>, vector<1x128x128xbf16>
    %104 = vector.shape_cast %103 : vector<1x128x128xbf16> to vector<128x128xbf16>
    %cst_88 = arith.constant dense<0.000000e+00> : vector<256x128xf32>
    %105 = tpu.matmul %102, %104, %cst_88 {dimension_numbers = #tpu.dot_dimension_numbers<[1], [0], [0], [1], [0, 0, 1, 1], [], []>} : vector<256x128xbf16>, vector<128x128xbf16>, vector<256x128xf32> -> vector<256x128xf32>
    %cst_89 = arith.constant 0.000000e+00 : f32
    %106 = vector.broadcast %cst_89 : f32 to vector<256x128xf32>
    %107 = arith.maximumf %105, %106 : vector<256x128xf32>
    %108 = vector.shape_cast %107 : vector<256x128xf32> to vector<16x16x128xf32>
    %109 = arith.truncf %108 : vector<16x16x128xf32> to vector<16x16x128xbf16>
    %c0_90 = arith.constant 0 : index
    %c0_91 = arith.constant 0 : index
    %c1_92 = arith.constant 1 : index
    %c0_93 = arith.constant 0 : index
    %c128_94 = arith.constant 128 : index
    %110 = vector.load %arg4[%c0_90, %c0_91, %c1_92, %c0_93, %c128_94] : memref<1x16x2x16x256xbf16, #tpu.memory_space<vmem>>, vector<1x16x1x16x128xbf16>
    %111 = vector.shape_cast %110 : vector<1x16x1x16x128xbf16> to vector<16x16x128xbf16>
    %112 = vector.shape_cast %109 : vector<16x16x128xbf16> to vector<1x16x1x16x128xbf16>
    tpu.vector_store %arg4[%c0_90, %c0_91, %c1_92, %c0_93, %c128_94], %112 {strides = array<i32>} : memref<1x16x2x16x256xbf16, #tpu.memory_space<vmem>>, vector<1x16x1x16x128xbf16>,
    return
  }
  func.func @transform_0(%arg0: i32, %arg1: i32) -> (i32, i32, i32, i32) {
    %c0_i32 = arith.constant 0 : i32
    %c0_i32_0 = arith.constant 0 : i32
    %c0_i32_1 = arith.constant 0 : i32
    %c0_i32_2 = arith.constant 0 : i32
    return %arg0, %c0_i32, %c0_i32_0, %c0_i32_1 : i32, i32, i32, i32
  }
  func.func @transform_1(%arg0: i32, %arg1: i32) -> (i32, i32, i32) {
    %c0_i32 = arith.constant 0 : i32
    %c0_i32_0 = arith.constant 0 : i32
    %c0_i32_1 = arith.constant 0 : i32
    %c0_i32_2 = arith.constant 0 : i32
    return %c0_i32, %c0_i32_0, %c0_i32_1 : i32, i32, i32
  }
  func.func @transform_2(%arg0: i32, %arg1: i32) -> (i32, i32, i32, i32, i32) {
    %c0_i32 = arith.constant 0 : i32
    %c0_i32_0 = arith.constant 0 : i32
    %c0_i32_1 = arith.constant 0 : i32
    %c0_i32_2 = arith.constant 0 : i32
    return %arg0, %arg1, %c0_i32, %c0_i32_0, %c0_i32_1 : i32, i32, i32, i32, i32
  }
}

</mosaic_0001>

<llo_original>
// kernel: decoder_block_forward.1
$region0: #{decoder_block_forward.1}
  #allocation0 [shape = 'u32[]', space=smem, size = 0x4, offset = 0x4, fixed_abs, tag = 'smem constant byte address 0x4 - core index']
  #allocation1 [shape = 'u32[144,128]{1,0:T(1,128)}', space=vmem, size = 0x12000, scoped, tag = 'internal scratch']
  %s0 = inlined_call_operand.vmem [shape: bf16[2,18,18,32], index: 0, kind: input, shape index: {}]
  %s1 = inlined_call_operand.vmem [shape: bf16[4,128,128], index: 1, kind: input, shape index: {}]
  %s2 = inlined_call_operand.vmem [shape: bf16[2,16,2,16,256], index: 2, kind: output, shape index: {}]
  %s3 = sld [smem:[#allocation0]]
  $region41: #{decoder_block_forward.1} parent=0
    _
  %s5 = ssub.s32 1, %s3
  %s6 = scalar_select 0, %s5, %s3
  loop: start=0, step=1, limit=4
  $region2: #{decoder_block_forward.1} parent=0 // loop_pre_header
    _
  $region3: #{decoder_block_forward.1} parent=0 // loop_header
    %s8 = sphi 0, %s12
    %p9 = scmp.ge.s32.totalorder %s8, 4
    %s15 = sphi 0, %s27
    %s16 = sphi 0, %s23
    %s17 = sphi 0, %s15
    %s18 = sphi 0, %s16
    %s19 = sphi 0, %s17
    %s20 = sphi 0, %s18
    %s30 = sphi 0, %s32
    %s33 = sphi 0, %s30
    %s34 = sphi 0, %s33
    %s50 = sphi 0, %s34
    %s54 = sphi 0, %s54
    %s56 = sphi 0, %s54
    %s57 = sphi 0, %s56
    %s71 = sphi 0, %s57
    %s79 = sphi 0, %s81
    %s82 = sphi 0, %s79
    %s83 = sphi 0, %s82
    %s99 = sphi 0, %s83
  $region4: #{decoder_block_forward.1} parent=0 // loop_header_branch
    %11 = sbr.rel (%p9) target = $region8
  $region5: #{decoder_block_forward.1} parent=0 // loop_body
    %s13 = ssub.s32 %s8, 1
    %s14 = ssub.s32 %s8, 2
    %s21 = sadd.s32 1, %s16
    %p22 = scmp.ge.s32.totalorder %s21, 1
    %s23 = scalar_select %p22, 0, %s21
    %s24 = sadd.s32 1, %s15
    %s25 = scalar_select %p22, %s24, %s15
    %p26 = scmp.ge.s32.totalorder %s25, 2
    %s27 = scalar_select %p26, 0, %s25
    %s28 = ssub.s32 %s15, %s27
    %p29 = scmp.eq.s32.totalorder %s28, 0
    %s31 = sadd.s32 %s30, 1
    %s32 = scalar_select %p29, %s30, %s31
    %p35 = pneg %p29
    %p36 = scmp.eq.s32.totalorder %s8, 1
    %p37 = por %p35, %p36
    %p38 = scmp.ne.s32.totalorder %s30, %s33
    %p39 = scmp.eq.s32.totalorder %s8, 0
    %p40 = por %p38, %p39
    %p41 = scmp.ne.s32.totalorder %s30, %s33
    %p42 = scmp.eq.s32.totalorder %s13, 1
    %p43 = por %p41, %p42
    %p44 = scmp.ne.s32.totalorder %s33, %s34
    %p45 = scmp.eq.s32.totalorder %s13, 0
    %p46 = por %p44, %p45
    %p47 = scmp.ne.s32.totalorder %s33, %s34
    %p48 = scmp.eq.s32.totalorder %s14, 1
    %p49 = por %p47, %p48
    %p51 = scmp.ne.s32.totalorder %s34, %s50
    %p52 = scmp.eq.s32.totalorder %s14, 0
    %p53 = por %p51, %p52
    %s55 = sadd.s32 %s54, 1
    %p58 = scmp.eq.s32.totalorder %s8, 1
    %p59 = scmp.ne.s32.totalorder %s54, %s56
    %p60 = scmp.eq.s32.totalorder %s8, 0
    %p61 = por %p59, %p60
    %p62 = scmp.ne.s32.totalorder %s54, %s56
    %p63 = scmp.eq.s32.totalorder %s13, 1
    %p64 = por %p62, %p63
    %p65 = scmp.ne.s32.totalorder %s56, %s57
    %p66 = scmp.eq.s32.totalorder %s13, 0
    %p67 = por %p65, %p66
    %p68 = scmp.ne.s32.totalorder %s56, %s57
    %p69 = scmp.eq.s32.totalorder %s14, 1
    %p70 = por %p68, %p69
    %p72 = scmp.ne.s32.totalorder %s57, %s71
    %p73 = scmp.eq.s32.totalorder %s14, 0
    %p74 = por %p72, %p73
    %s75 = ssub.s32 %s15, %s27
    %s76 = ssub.s32 %s16, %s23
    %s77 = sor.u32 %s75, %s76
    %p78 = scmp.eq.s32.totalorder %s77, 0
    %s80 = sadd.s32 %s79, 1
    %s81 = scalar_select %p78, %s79, %s80
    %p84 = pneg %p78
    %p85 = scmp.eq.s32.totalorder %s8, 1
    %p86 = por %p84, %p85
    %p87 = scmp.ne.s32.totalorder %s79, %s82
    %p88 = scmp.eq.s32.totalorder %s8, 0
    %p89 = por %p87, %p88
    %p90 = scmp.ne.s32.totalorder %s79, %s82
    %p91 = scmp.eq.s32.totalorder %s13, 1
    %p92 = por %p90, %p91
    %p93 = scmp.ne.s32.totalorder %s82, %s83
    %p94 = scmp.eq.s32.totalorder %s13, 0
    %p95 = por %p93, %p94
    %p96 = scmp.ne.s32.totalorder %s82, %s83
    %p97 = scmp.eq.s32.totalorder %s14, 1
    %p98 = por %p96, %p97
    %p100 = scmp.ne.s32.totalorder %s83, %s99
    %p101 = scmp.eq.s32.totalorder %s14, 0
    %p102 = por %p100, %p101
    %p103 = scmp.le.s32.totalorder 1, %s8
    %p104 = scmp.lt.s32.totalorder %s8, 3
    %p105 = pnand %p103, %p104
    %p106 = pneg %p105
    // Predicated region
    $region9: #{decoder_block_forward.1} parent=5 // pred_check
      _
    $region10: #{decoder_block_forward.1} parent=5 // pred_check_branch
      %108 = sbr.rel (%p105) target = $region12
    $region11: #{decoder_block_forward.1} parent=5 // pred_region
      %s109 = ssub.s32 %s8, 1
      // Predicated region
      $region13: #{decoder_block_forward.1} parent=11 // pred_check
        %p110 = pneg %p67
      $region14: #{decoder_block_forward.1} parent=11 // pred_check_branch
        %112 = sbr.rel (%p110) target = $region16
      $region15: #{decoder_block_forward.1} parent=11 // pred_region
        _
      $region16: #{decoder_block_forward.1} parent=11 // pred_fallthru
        _
    $region12: #{decoder_block_forward.1} parent=5 // pred_fallthru
      _
    %p113 = scmp.lt.s32.totalorder %s8, 2
    // Predicated region
    $region17: #{decoder_block_forward.1} parent=5 // pred_check
      %p114 = pneg %p113
    $region18: #{decoder_block_forward.1} parent=5 // pred_check_branch
      %116 = sbr.rel (%p114) target = $region20
    $region19: #{decoder_block_forward.1} parent=5 // pred_region
      // Predicated region
      $region21: #{decoder_block_forward.1} parent=19 // pred_check
        %p117 = pneg %p40
      $region22: #{decoder_block_forward.1} parent=19 // pred_check_branch
        %119 = sbr.rel (%p117) target = $region24
      $region23: #{decoder_block_forward.1} parent=19 // pred_region
        %p120 = scmp.lt.s32.totalorder %s15, 1
        %s121 = scalar_select %p120, %s15, 1
        %s122 = smul.addr %s121, 54
        %s123 = smul.addr %s122, 4
        %s124 = scalar_lea.vmem %s0, %s123
      $region24: #{decoder_block_forward.1} parent=19 // pred_fallthru
        _
    $region20: #{decoder_block_forward.1} parent=5 // pred_fallthru
      _
    %p125 = scmp.le.s32.totalorder 1, %s8
    %p126 = scmp.lt.s32.totalorder %s8, 3
    %p127 = pnand %p125, %p126
    %p128 = pneg %p127
    // Predicated region
    $region25: #{decoder_block_forward.1} parent=5 // pred_check
      _
    $region26: #{decoder_block_forward.1} parent=5 // pred_check_branch
      %130 = sbr.rel (%p127) target = $region28
    $region27: #{decoder_block_forward.1} parent=5 // pred_region
      %s131 = ssub.s32 %s8, 1
      %p132 = scmp.lt.s32.totalorder %s17, 1
      %s133 = scalar_select %p132, %s17, 1
      %s134 = smul.addr %s133, 54
      %s135 = smul.addr %s134, 4
      %s136 = scalar_lea.vmem %s0, %s135
      %p137 = pneg %p46
      %p138 = pneg %p43
      %p139 = pneg %p67
      %p140 = pneg %p64
      %p141 = pneg %p95
      %p142 = pneg %p92
      %s143 = smul.u32 16, %s18
      %p144 = scmp.lt.s32.totalorder %s17, 1
      %s145 = scalar_select %p144, %s17, 1
      %p146 = scmp.lt.s32.totalorder %s143, 15
      %s147 = scalar_select %p146, %s143, 15
      %s148 = smul.addr %s147, 8
      %s149 = smul.addr %s145, 128
      %s150 = sadd.s32 %s148, %s149
      %s151 = smul.addr %s150, 4
      %s152 = scalar_lea.vmem %s2, %s151
      %p153 = scmp.lt.s32.totalorder %s17, 1
      %s154 = scalar_select %p153, %s17, 1
      %s155 = smul.addr %s154, 54
      %s156 = smul.addr %s155, 4
      %s157 = scalar_lea.vmem %s0, %s156
      %s158 = smul.u32 16, %s18
      %p159 = scmp.lt.s32.totalorder %s17, 1
      %s160 = scalar_select %p159, %s17, 1
      %p161 = scmp.lt.s32.totalorder %s158, 15
      %s162 = scalar_select %p161, %s158, 15
      %s163 = smul.addr %s162, 8
      %s164 = smul.addr %s160, 128
      %s165 = sadd.s32 %s163, %s164
      %s166 = smul.addr %s165, 4
      %s167 = scalar_lea.vmem %s2, %s166
      %s168 = smul.u32 16, %s18
      %s170 = smul.u32 %s18, 16
      %s171 = smul.u32 %s170, 3
      %s172 = smul.addr %s171, 4
      %s173 = scalar_lea.vmem %s157, %s172
      %v174 = vld [vmem:[%s173] sm:$0xf]
      %v175 = vld [vmem:[%s173 + $0x4] sm:$0xf]
      %v176 = vld [vmem:[%s173 + $0xc] sm:$0xf]
      %v177 = vld [vmem:[%s173 + $0x10] sm:$0xf]
      %v178 = vld [vmem:[%s173 + $0x18] sm:$0xf]
      %v179 = vld [vmem:[%s173 + $0x1c] sm:$0xf]
      %v180 = vld [vmem:[%s173 + $0x24] sm:$0xf]
      %v181 = vld [vmem:[%s173 + $0x28] sm:$0xf]
      %v182 = vld [vmem:[%s173 + $0x30] sm:$0xf]
      %v183 = vld [vmem:[%s173 + $0x34] sm:$0xf]
      %v184 = vld [vmem:[%s173 + $0x3c] sm:$0xf]
      %v185 = vld [vmem:[%s173 + $0x40] sm:$0xf]
      %v186 = vld [vmem:[%s173 + $0x48] sm:$0xf]
      %v187 = vld [vmem:[%s173 + $0x4c] sm:$0xf]
      %v188 = vld [vmem:[%s173 + $0x54] sm:$0xf]
      %v189 = vld [vmem:[%s173 + $0x58] sm:$0xf]
      %v190 = vld [vmem:[%s173 + $0x60] sm:$0xf]
      %v191 = vld [vmem:[%s173 + $0x64] sm:$0xf]
      %v192 = vld [vmem:[%s173 + $0x6c] sm:$0xf]
      %v193 = vld [vmem:[%s173 + $0x70] sm:$0xf]
      %v194 = vld [vmem:[%s173 + $0x78] sm:$0xf]
      %v195 = vld [vmem:[%s173 + $0x7c] sm:$0xf]
      %v196 = vld [vmem:[%s173 + $0x84] sm:$0xf]
      %v197 = vld [vmem:[%s173 + $0x88] sm:$0xf]
      %v198 = vld [vmem:[%s173 + $0x90] sm:$0xf]
      %v199 = vld [vmem:[%s173 + $0x94] sm:$0xf]
      %v200 = vld [vmem:[%s173 + $0x9c] sm:$0xf]
      %v201 = vld [vmem:[%s173 + $0xa0] sm:$0xf]
      %v202 = vld [vmem:[%s173 + $0xa8] sm:$0xf]
      %v203 = vld [vmem:[%s173 + $0xac] sm:$0xf]
      %v204 = vld [vmem:[%s173 + $0xb4] sm:$0xf]
      %v205 = vld [vmem:[%s173 + $0xb8] sm:$0xf]
      %v206 = vld [vmem:[%s173 + $0x8] sm:$0x1]
      %v207 = vld [vmem:[%s173 + $0x14] sm:$0x1]
      %v208 = vld [vmem:[%s173 + $0x20] sm:$0x1]
      %v209 = vld [vmem:[%s173 + $0x2c] sm:$0x1]
      %v210 = vld [vmem:[%s173 + $0x38] sm:$0x1]
      %v211 = vld [vmem:[%s173 + $0x44] sm:$0x1]
      %v212 = vld [vmem:[%s173 + $0x50] sm:$0x1]
      %v213 = vld [vmem:[%s173 + $0x5c] sm:$0x1]
      %v214 = vld [vmem:[%s173 + $0x68] sm:$0x1]
      %v215 = vld [vmem:[%s173 + $0x74] sm:$0x1]
      %v216 = vld [vmem:[%s173 + $0x80] sm:$0x1]
      %v217 = vld [vmem:[%s173 + $0x8c] sm:$0x1]
      %v218 = vld [vmem:[%s173 + $0x98] sm:$0x1]
      %v219 = vld [vmem:[%s173 + $0xa4] sm:$0x1]
      %v220 = vld [vmem:[%s173 + $0xb0] sm:$0x1]
      %v221 = vld [vmem:[%s173 + $0xbc] sm:$0x1]
      %s222 = sadd.s32 %s170, 1
      %s223 = smul.u32 %s222, 3
      %s224 = smul.addr %s223, 4
      %s225 = scalar_lea.vmem %s157, %s224
      %v226 = vld [vmem:[%s225] sm:$0xf]
      %v227 = vld [vmem:[%s225 + $0x4] sm:$0xf]
      %v228 = vld [vmem:[%s225 + $0xc] sm:$0xf]
      %v229 = vld [vmem:[%s225 + $0x10] sm:$0xf]
      %v230 = vld [vmem:[%s225 + $0x18] sm:$0xf]
      %v231 = vld [vmem:[%s225 + $0x1c] sm:$0xf]
      %v232 = vld [vmem:[%s225 + $0x24] sm:$0xf]
      %v233 = vld [vmem:[%s225 + $0x28] sm:$0xf]
      %v234 = vld [vmem:[%s225 + $0x30] sm:$0xf]
      %v235 = vld [vmem:[%s225 + $0x34] sm:$0xf]
      %v236 = vld [vmem:[%s225 + $0x3c] sm:$0xf]
      %v237 = vld [vmem:[%s225 + $0x40] sm:$0xf]
      %v238 = vld [vmem:[%s225 + $0x48] sm:$0xf]
      %v239 = vld [vmem:[%s225 + $0x4c] sm:$0xf]
      %v240 = vld [vmem:[%s225 + $0x54] sm:$0xf]
      %v241 = vld [vmem:[%s225 + $0x58] sm:$0xf]
      %v242 = vld [vmem:[%s225 + $0x60] sm:$0xf]
      %v243 = vld [vmem:[%s225 + $0x64] sm:$0xf]
      %v244 = vld [vmem:[%s225 + $0x6c] sm:$0xf]
      %v245 = vld [vmem:[%s225 + $0x70] sm:$0xf]
      %v246 = vld [vmem:[%s225 + $0x78] sm:$0xf]
      %v247 = vld [vmem:[%s225 + $0x7c] sm:$0xf]
      %v248 = vld [vmem:[%s225 + $0x84] sm:$0xf]
      %v249 = vld [vmem:[%s225 + $0x88] sm:$0xf]
      %v250 = vld [vmem:[%s225 + $0x90] sm:$0xf]
      %v251 = vld [vmem:[%s225 + $0x94] sm:$0xf]
      %v252 = vld [vmem:[%s225 + $0x9c] sm:$0xf]
      %v253 = vld [vmem:[%s225 + $0xa0] sm:$0xf]
      %v254 = vld [vmem:[%s225 + $0xa8] sm:$0xf]
      %v255 = vld [vmem:[%s225 + $0xac] sm:$0xf]
      %v256 = vld [vmem:[%s225 + $0xb4] sm:$0xf]
      %v257 = vld [vmem:[%s225 + $0xb8] sm:$0xf]
      %v258 = vld [vmem:[%s225 + $0x8] sm:$0x1]
      %v259 = vld [vmem:[%s225 + $0x14] sm:$0x1]
      %v260 = vld [vmem:[%s225 + $0x20] sm:$0x1]
      %v261 = vld [vmem:[%s225 + $0x2c] sm:$0x1]
      %v262 = vld [vmem:[%s225 + $0x38] sm:$0x1]
      %v263 = vld [vmem:[%s225 + $0x44] sm:$0x1]
      %v264 = vld [vmem:[%s225 + $0x50] sm:$0x1]
      %v265 = vld [vmem:[%s225 + $0x5c] sm:$0x1]
      %v266 = vld [vmem:[%s225 + $0x68] sm:$0x1]
      %v267 = vld [vmem:[%s225 + $0x74] sm:$0x1]
      %v268 = vld [vmem:[%s225 + $0x80] sm:$0x1]
      %v269 = vld [vmem:[%s225 + $0x8c] sm:$0x1]
      %v270 = vld [vmem:[%s225 + $0x98] sm:$0x1]
      %v271 = vld [vmem:[%s225 + $0xa4] sm:$0x1]
      %v272 = vld [vmem:[%s225 + $0xb0] sm:$0x1]
      %v273 = vld [vmem:[%s225 + $0xbc] sm:$0x1]
      %v306 = vunpack.c.l.b16 %v174
      %v307 = vunpack.c.l.b16 %v175
      %v308 = vunpack.c.l.b16 %v176
      %v309 = vunpack.c.l.b16 %v177
      %v310 = vunpack.c.l.b16 %v178
      %v311 = vunpack.c.l.b16 %v179
      %v312 = vunpack.c.l.b16 %v180
      %v313 = vunpack.c.l.b16 %v181
      %v314 = vunpack.c.l.b16 %v182
      %v315 = vunpack.c.l.b16 %v183
      %v316 = vunpack.c.l.b16 %v184
      %v317 = vunpack.c.l.b16 %v185
      %v318 = vunpack.c.l.b16 %v186
      %v319 = vunpack.c.l.b16 %v187
      %v320 = vunpack.c.l.b16 %v188
      %v321 = vunpack.c.l.b16 %v189
      %v322 = vunpack.c.l.b16 %v190
      %v323 = vunpack.c.l.b16 %v191
      %v324 = vunpack.c.l.b16 %v192
      %v325 = vunpack.c.l.b16 %v193
      %v326 = vunpack.c.l.b16 %v194
      %v327 = vunpack.c.l.b16 %v195
      %v328 = vunpack.c.l.b16 %v196
      %v329 = vunpack.c.l.b16 %v197
      %v330 = vunpack.c.l.b16 %v198
      %v331 = vunpack.c.l.b16 %v199
      %v332 = vunpack.c.l.b16 %v200
      %v333 = vunpack.c.l.b16 %v201
      %v334 = vunpack.c.l.b16 %v202
      %v335 = vunpack.c.l.b16 %v203
      %v336 = vunpack.c.l.b16 %v204
      %v337 = vunpack.c.l.b16 %v205
      %v338 = vpack.c.b16 %v307, %v306
      %v339 = vpack.c.b16 %v309, %v308
      %v340 = vpack.c.b16 %v311, %v310
      %v341 = vpack.c.b16 %v313, %v312
      %v342 = vpack.c.b16 %v315, %v314
      %v343 = vpack.c.b16 %v317, %v316
      %v344 = vpack.c.b16 %v319, %v318
      %v345 = vpack.c.b16 %v321, %v320
      %v346 = vpack.c.b16 %v323, %v322
      %v347 = vpack.c.b16 %v325, %v324
      %v348 = vpack.c.b16 %v327, %v326
      %v349 = vpack.c.b16 %v329, %v328
      %v350 = vpack.c.b16 %v331, %v330
      %v351 = vpack.c.b16 %v333, %v332
      %v352 = vpack.c.b16 %v335, %v334
      %v353 = vpack.c.b16 %v337, %v336
      %v370 = vunpack.c.l.b16 %v206
      %v371 = vunpack.c.l.b16 %v207
      %v372 = vunpack.c.l.b16 %v208
      %v373 = vunpack.c.l.b16 %v209
      %v374 = vunpack.c.l.b16 %v210
      %v375 = vunpack.c.l.b16 %v211
      %v376 = vunpack.c.l.b16 %v212
      %v377 = vunpack.c.l.b16 %v213
      %v378 = vunpack.c.l.b16 %v214
      %v379 = vunpack.c.l.b16 %v215
      %v380 = vunpack.c.l.b16 %v216
      %v381 = vunpack.c.l.b16 %v217
      %v382 = vunpack.c.l.b16 %v218
      %v383 = vunpack.c.l.b16 %v219
      %v384 = vunpack.c.l.b16 %v220
      %v385 = vunpack.c.l.b16 %v221
      %v386 = vpack.c.b16 %v370, %v370
      %v387 = vpack.c.b16 %v371, %v371
      %v388 = vpack.c.b16 %v372, %v372
      %v389 = vpack.c.b16 %v373, %v373
      %v390 = vpack.c.b16 %v374, %v374
      %v391 = vpack.c.b16 %v375, %v375
      %v392 = vpack.c.b16 %v376, %v376
      %v393 = vpack.c.b16 %v377, %v377
      %v394 = vpack.c.b16 %v378, %v378
      %v395 = vpack.c.b16 %v379, %v379
      %v396 = vpack.c.b16 %v380, %v380
      %v397 = vpack.c.b16 %v381, %v381
      %v398 = vpack.c.b16 %v382, %v382
      %v399 = vpack.c.b16 %v383, %v383
      %v400 = vpack.c.b16 %v384, %v384
      %v401 = vpack.c.b16 %v385, %v385
      %vm402 = vsmask.f32 7424
      %v404 = vshrl.u32 %v338, 16
      %v406 = vshll.u32 %v338, 16
      %v408 = vrot.slane %v406, 1
      %v409 = vor.u32 %v404, %v408
      %v411 = vshll.u32 %v386, 16
      %v413 = vrot.slane %v411, 1
      %v414 = vsel %vm402, %v409, %v413
      %v416 = vshrl.u32 %v339, 16
      %v418 = vshll.u32 %v339, 16
      %v420 = vrot.slane %v418, 1
      %v421 = vor.u32 %v416, %v420
      %v423 = vshll.u32 %v387, 16
      %v425 = vrot.slane %v423, 1
      %v426 = vsel %vm402, %v421, %v425
      %v428 = vshrl.u32 %v340, 16
      %v430 = vshll.u32 %v340, 16
      %v432 = vrot.slane %v430, 1
      %v433 = vor.u32 %v428, %v432
      %v435 = vshll.u32 %v388, 16
      %v437 = vrot.slane %v435, 1
      %v438 = vsel %vm402, %v433, %v437
      %v440 = vshrl.u32 %v341, 16
      %v442 = vshll.u32 %v341, 16
      %v444 = vrot.slane %v442, 1
      %v445 = vor.u32 %v440, %v444
      %v447 = vshll.u32 %v389, 16
      %v449 = vrot.slane %v447, 1
      %v450 = vsel %vm402, %v445, %v449
      %v452 = vshrl.u32 %v342, 16
      %v454 = vshll.u32 %v342, 16
      %v456 = vrot.slane %v454, 1
      %v457 = vor.u32 %v452, %v456
      %v459 = vshll.u32 %v390, 16
      %v461 = vrot.slane %v459, 1
      %v462 = vsel %vm402, %v457, %v461
      %v464 = vshrl.u32 %v343, 16
      %v466 = vshll.u32 %v343, 16
      %v468 = vrot.slane %v466, 1
      %v469 = vor.u32 %v464, %v468
      %v471 = vshll.u32 %v391, 16
      %v473 = vrot.slane %v471, 1
      %v474 = vsel %vm402, %v469, %v473
      %v476 = vshrl.u32 %v344, 16
      %v478 = vshll.u32 %v344, 16
      %v480 = vrot.slane %v478, 1
      %v481 = vor.u32 %v476, %v480
      %v483 = vshll.u32 %v392, 16
      %v485 = vrot.slane %v483, 1
      %v486 = vsel %vm402, %v481, %v485
      %v488 = vshrl.u32 %v345, 16
      %v490 = vshll.u32 %v345, 16
      %v492 = vrot.slane %v490, 1
      %v493 = vor.u32 %v488, %v492
      %v495 = vshll.u32 %v393, 16
      %v497 = vrot.slane %v495, 1
      %v498 = vsel %vm402, %v493, %v497
      %v500 = vshrl.u32 %v346, 16
      %v502 = vshll.u32 %v346, 16
      %v504 = vrot.slane %v502, 1
      %v505 = vor.u32 %v500, %v504
      %v507 = vshll.u32 %v394, 16
      %v509 = vrot.slane %v507, 1
      %v510 = vsel %vm402, %v505, %v509
      %v512 = vshrl.u32 %v347, 16
      %v514 = vshll.u32 %v347, 16
      %v516 = vrot.slane %v514, 1
      %v517 = vor.u32 %v512, %v516
      %v519 = vshll.u32 %v395, 16
      %v521 = vrot.slane %v519, 1
      %v522 = vsel %vm402, %v517, %v521
      %v524 = vshrl.u32 %v348, 16
      %v526 = vshll.u32 %v348, 16
      %v528 = vrot.slane %v526, 1
      %v529 = vor.u32 %v524, %v528
      %v531 = vshll.u32 %v396, 16
      %v533 = vrot.slane %v531, 1
      %v534 = vsel %vm402, %v529, %v533
      %v536 = vshrl.u32 %v349, 16
      %v538 = vshll.u32 %v349, 16
      %v540 = vrot.slane %v538, 1
      %v541 = vor.u32 %v536, %v540
      %v543 = vshll.u32 %v397, 16
      %v545 = vrot.slane %v543, 1
      %v546 = vsel %vm402, %v541, %v545
      %v548 = vshrl.u32 %v350, 16
      %v550 = vshll.u32 %v350, 16
      %v552 = vrot.slane %v550, 1
      %v553 = vor.u32 %v548, %v552
      %v555 = vshll.u32 %v398, 16
      %v557 = vrot.slane %v555, 1
      %v558 = vsel %vm402, %v553, %v557
      %v560 = vshrl.u32 %v351, 16
      %v562 = vshll.u32 %v351, 16
      %v564 = vrot.slane %v562, 1
      %v565 = vor.u32 %v560, %v564
      %v567 = vshll.u32 %v399, 16
      %v569 = vrot.slane %v567, 1
      %v570 = vsel %vm402, %v565, %v569
      %v572 = vshrl.u32 %v352, 16
      %v574 = vshll.u32 %v352, 16
      %v576 = vrot.slane %v574, 1
      %v577 = vor.u32 %v572, %v576
      %v579 = vshll.u32 %v400, 16
      %v581 = vrot.slane %v579, 1
      %v582 = vsel %vm402, %v577, %v581
      %v584 = vshrl.u32 %v353, 16
      %v586 = vshll.u32 %v353, 16
      %v588 = vrot.slane %v586, 1
      %v589 = vor.u32 %v584, %v588
      %v591 = vshll.u32 %v401, 16
      %v593 = vrot.slane %v591, 1
      %v594 = vsel %vm402, %v589, %v593
      %595 = vrot.lane.b32.xlu0 %v414, 32
      %v596 = vpop.permute.xlu0 %595
      %597 = vrot.lane.b32.xlu0 %v426, 32
      %v598 = vpop.permute.xlu0 %597
      %599 = vrot.lane.b32.xlu0 %v438, 32
      %v600 = vpop.permute.xlu0 %599
      %601 = vrot.lane.b32.xlu0 %v450, 32
      %v602 = vpop.permute.xlu0 %601
      %603 = vrot.lane.b32.xlu0 %v462, 32
      %v604 = vpop.permute.xlu0 %603
      %605 = vrot.lane.b32.xlu0 %v474, 32
      %v606 = vpop.permute.xlu0 %605
      %607 = vrot.lane.b32.xlu0 %v486, 32
      %v608 = vpop.permute.xlu0 %607
      %609 = vrot.lane.b32.xlu0 %v498, 32
      %v610 = vpop.permute.xlu0 %609
      %611 = vrot.lane.b32.xlu0 %v510, 32
      %v612 = vpop.permute.xlu0 %611
      %613 = vrot.lane.b32.xlu0 %v522, 32
      %v614 = vpop.permute.xlu0 %613
      %615 = vrot.lane.b32.xlu0 %v534, 32
      %v616 = vpop.permute.xlu0 %615
      %617 = vrot.lane.b32.xlu0 %v546, 32
      %v618 = vpop.permute.xlu0 %617
      %619 = vrot.lane.b32.xlu0 %v558, 32
      %v620 = vpop.permute.xlu0 %619
      %621 = vrot.lane.b32.xlu0 %v570, 32
      %v622 = vpop.permute.xlu0 %621
      %623 = vrot.lane.b32.xlu0 %v582, 32
      %v624 = vpop.permute.xlu0 %623
      %625 = vrot.lane.b32.xlu0 %v594, 32
      %v626 = vpop.permute.xlu0 %625
      %v659 = vunpack.c.l.b16 %v226
      %v660 = vunpack.c.l.b16 %v227
      %v661 = vunpack.c.l.b16 %v228
      %v662 = vunpack.c.l.b16 %v229
      %v663 = vunpack.c.l.b16 %v230
      %v664 = vunpack.c.l.b16 %v231
      %v665 = vunpack.c.l.b16 %v232
      %v666 = vunpack.c.l.b16 %v233
      %v667 = vunpack.c.l.b16 %v234
      %v668 = vunpack.c.l.b16 %v235
      %v669 = vunpack.c.l.b16 %v236
      %v670 = vunpack.c.l.b16 %v237
      %v671 = vunpack.c.l.b16 %v238
      %v672 = vunpack.c.l.b16 %v239
      %v673 = vunpack.c.l.b16 %v240
      %v674 = vunpack.c.l.b16 %v241
      %v675 = vunpack.c.l.b16 %v242
      %v676 = vunpack.c.l.b16 %v243
      %v677 = vunpack.c.l.b16 %v244
      %v678 = vunpack.c.l.b16 %v245
      %v679 = vunpack.c.l.b16 %v246
      %v680 = vunpack.c.l.b16 %v247
      %v681 = vunpack.c.l.b16 %v248
      %v682 = vunpack.c.l.b16 %v249
      %v683 = vunpack.c.l.b16 %v250
      %v684 = vunpack.c.l.b16 %v251
      %v685 = vunpack.c.l.b16 %v252
      %v686 = vunpack.c.l.b16 %v253
      %v687 = vunpack.c.l.b16 %v254
      %v688 = vunpack.c.l.b16 %v255
      %v689 = vunpack.c.l.b16 %v256
      %v690 = vunpack.c.l.b16 %v257
      %v691 = vpack.c.b16 %v660, %v659
      %v692 = vpack.c.b16 %v662, %v661
      %v693 = vpack.c.b16 %v664, %v663
      %v694 = vpack.c.b16 %v666, %v665
      %v695 = vpack.c.b16 %v668, %v667
      %v696 = vpack.c.b16 %v670, %v669
      %v697 = vpack.c.b16 %v672, %v671
      %v698 = vpack.c.b16 %v674, %v673
      %v699 = vpack.c.b16 %v676, %v675
      %v700 = vpack.c.b16 %v678, %v677
      %v701 = vpack.c.b16 %v680, %v679
      %v702 = vpack.c.b16 %v682, %v681
      %v703 = vpack.c.b16 %v684, %v683
      %v704 = vpack.c.b16 %v686, %v685
      %v705 = vpack.c.b16 %v688, %v687
      %v706 = vpack.c.b16 %v690, %v689
      %707 = vrot.lane.b32.xlu0 %v691, 64
      %v708 = vpop.permute.xlu0 %707
      %709 = vrot.lane.b32.xlu0 %v692, 64
      %v710 = vpop.permute.xlu0 %709
      %711 = vrot.lane.b32.xlu0 %v693, 64
      %v712 = vpop.permute.xlu0 %711
      %713 = vrot.lane.b32.xlu0 %v694, 64
      %v714 = vpop.permute.xlu0 %713
      %715 = vrot.lane.b32.xlu0 %v695, 64
      %v716 = vpop.permute.xlu0 %715
      %717 = vrot.lane.b32.xlu0 %v696, 64
      %v718 = vpop.permute.xlu0 %717
      %719 = vrot.lane.b32.xlu0 %v697, 64
      %v720 = vpop.permute.xlu0 %719
      %721 = vrot.lane.b32.xlu0 %v698, 64
      %v722 = vpop.permute.xlu0 %721
      %723 = vrot.lane.b32.xlu0 %v699, 64
      %v724 = vpop.permute.xlu0 %723
      %725 = vrot.lane.b32.xlu0 %v700, 64
      %v726 = vpop.permute.xlu0 %725
      %727 = vrot.lane.b32.xlu0 %v701, 64
      %v728 = vpop.permute.xlu0 %727
      %729 = vrot.lane.b32.xlu0 %v702, 64
      %v730 = vpop.permute.xlu0 %729
      %731 = vrot.lane.b32.xlu0 %v703, 64
      %v732 = vpop.permute.xlu0 %731
      %733 = vrot.lane.b32.xlu0 %v704, 64
      %v734 = vpop.permute.xlu0 %733
      %735 = vrot.lane.b32.xlu0 %v705, 64
      %v736 = vpop.permute.xlu0 %735
      %737 = vrot.lane.b32.xlu0 %v706, 64
      %v738 = vpop.permute.xlu0 %737
      %v755 = vunpack.c.l.b16 %v258
      %v756 = vunpack.c.l.b16 %v259
      %v757 = vunpack.c.l.b16 %v260
      %v758 = vunpack.c.l.b16 %v261
      %v759 = vunpack.c.l.b16 %v262
      %v760 = vunpack.c.l.b16 %v263
      %v761 = vunpack.c.l.b16 %v264
      %v762 = vunpack.c.l.b16 %v265
      %v763 = vunpack.c.l.b16 %v266
      %v764 = vunpack.c.l.b16 %v267
      %v765 = vunpack.c.l.b16 %v268
      %v766 = vunpack.c.l.b16 %v269
      %v767 = vunpack.c.l.b16 %v270
      %v768 = vunpack.c.l.b16 %v271
      %v769 = vunpack.c.l.b16 %v272
      %v770 = vunpack.c.l.b16 %v273
      %v771 = vpack.c.b16 %v755, %v755
      %v772 = vpack.c.b16 %v756, %v756
      %v773 = vpack.c.b16 %v757, %v757
      %v774 = vpack.c.b16 %v758, %v758
      %v775 = vpack.c.b16 %v759, %v759
      %v776 = vpack.c.b16 %v760, %v760
      %v777 = vpack.c.b16 %v761, %v761
      %v778 = vpack.c.b16 %v762, %v762
      %v779 = vpack.c.b16 %v763, %v763
      %v780 = vpack.c.b16 %v764, %v764
      %v781 = vpack.c.b16 %v765, %v765
      %v782 = vpack.c.b16 %v766, %v766
      %v783 = vpack.c.b16 %v767, %v767
      %v784 = vpack.c.b16 %v768, %v768
      %v785 = vpack.c.b16 %v769, %v769
      %v786 = vpack.c.b16 %v770, %v770
      %v788 = vshrl.u32 %v691, 16
      %v790 = vshll.u32 %v691, 16
      %v792 = vrot.slane %v790, 1
      %v793 = vor.u32 %v788, %v792
      %v795 = vshll.u32 %v771, 16
      %v797 = vrot.slane %v795, 1
      %v798 = vsel %vm402, %v793, %v797
      %v800 = vshrl.u32 %v692, 16
      %v802 = vshll.u32 %v692, 16
      %v804 = vrot.slane %v802, 1
      %v805 = vor.u32 %v800, %v804
      %v807 = vshll.u32 %v772, 16
      %v809 = vrot.slane %v807, 1
      %v810 = vsel %vm402, %v805, %v809
      %v812 = vshrl.u32 %v693, 16
      %v814 = vshll.u32 %v693, 16
      %v816 = vrot.slane %v814, 1
      %v817 = vor.u32 %v812, %v816
      %v819 = vshll.u32 %v773, 16
      %v821 = vrot.slane %v819, 1
      %v822 = vsel %vm402, %v817, %v821
      %v824 = vshrl.u32 %v694, 16
      %v826 = vshll.u32 %v694, 16
      %v828 = vrot.slane %v826, 1
      %v829 = vor.u32 %v824, %v828
      %v831 = vshll.u32 %v774, 16
      %v833 = vrot.slane %v831, 1
      %v834 = vsel %vm402, %v829, %v833
      %v836 = vshrl.u32 %v695, 16
      %v838 = vshll.u32 %v695, 16
      %v840 = vrot.slane %v838, 1
      %v841 = vor.u32 %v836, %v840
      %v843 = vshll.u32 %v775, 16
      %v845 = vrot.slane %v843, 1
      %v846 = vsel %vm402, %v841, %v845
      %v848 = vshrl.u32 %v696, 16
      %v850 = vshll.u32 %v696, 16
      %v852 = vrot.slane %v850, 1
      %v853 = vor.u32 %v848, %v852
      %v855 = vshll.u32 %v776, 16
      %v857 = vrot.slane %v855, 1
      %v858 = vsel %vm402, %v853, %v857
      %v860 = vshrl.u32 %v697, 16
      %v862 = vshll.u32 %v697, 16
      %v864 = vrot.slane %v862, 1
      %v865 = vor.u32 %v860, %v864
      %v867 = vshll.u32 %v777, 16
      %v869 = vrot.slane %v867, 1
      %v870 = vsel %vm402, %v865, %v869
      %v872 = vshrl.u32 %v698, 16
      %v874 = vshll.u32 %v698, 16
      %v876 = vrot.slane %v874, 1
      %v877 = vor.u32 %v872, %v876
      %v879 = vshll.u32 %v778, 16
      %v881 = vrot.slane %v879, 1
      %v882 = vsel %vm402, %v877, %v881
      %v884 = vshrl.u32 %v699, 16
      %v886 = vshll.u32 %v699, 16
      %v888 = vrot.slane %v886, 1
      %v889 = vor.u32 %v884, %v888
      %v891 = vshll.u32 %v779, 16
      %v893 = vrot.slane %v891, 1
      %v894 = vsel %vm402, %v889, %v893
      %v896 = vshrl.u32 %v700, 16
      %v898 = vshll.u32 %v700, 16
      %v900 = vrot.slane %v898, 1
      %v901 = vor.u32 %v896, %v900
      %v903 = vshll.u32 %v780, 16
      %v905 = vrot.slane %v903, 1
      %v906 = vsel %vm402, %v901, %v905
      %v908 = vshrl.u32 %v701, 16
      %v910 = vshll.u32 %v701, 16
      %v912 = vrot.slane %v910, 1
      %v913 = vor.u32 %v908, %v912
      %v915 = vshll.u32 %v781, 16
      %v917 = vrot.slane %v915, 1
      %v918 = vsel %vm402, %v913, %v917
      %v920 = vshrl.u32 %v702, 16
      %v922 = vshll.u32 %v702, 16
      %v924 = vrot.slane %v922, 1
      %v925 = vor.u32 %v920, %v924
      %v927 = vshll.u32 %v782, 16
      %v929 = vrot.slane %v927, 1
      %v930 = vsel %vm402, %v925, %v929
      %v932 = vshrl.u32 %v703, 16
      %v934 = vshll.u32 %v703, 16
      %v936 = vrot.slane %v934, 1
      %v937 = vor.u32 %v932, %v936
      %v939 = vshll.u32 %v783, 16
      %v941 = vrot.slane %v939, 1
      %v942 = vsel %vm402, %v937, %v941
      %v944 = vshrl.u32 %v704, 16
      %v946 = vshll.u32 %v704, 16
      %v948 = vrot.slane %v946, 1
      %v949 = vor.u32 %v944, %v948
      %v951 = vshll.u32 %v784, 16
      %v953 = vrot.slane %v951, 1
      %v954 = vsel %vm402, %v949, %v953
      %v956 = vshrl.u32 %v705, 16
      %v958 = vshll.u32 %v705, 16
      %v960 = vrot.slane %v958, 1
      %v961 = vor.u32 %v956, %v960
      %v963 = vshll.u32 %v785, 16
      %v965 = vrot.slane %v963, 1
      %v966 = vsel %vm402, %v961, %v965
      %v968 = vshrl.u32 %v706, 16
      %v970 = vshll.u32 %v706, 16
      %v972 = vrot.slane %v970, 1
      %v973 = vor.u32 %v968, %v972
      %v975 = vshll.u32 %v786, 16
      %v977 = vrot.slane %v975, 1
      %v978 = vsel %vm402, %v973, %v977
      %979 = vrot.lane.b32.xlu0 %v798, 96
      %v980 = vpop.permute.xlu0 %979
      %981 = vrot.lane.b32.xlu0 %v810, 96
      %v982 = vpop.permute.xlu0 %981
      %983 = vrot.lane.b32.xlu0 %v822, 96
      %v984 = vpop.permute.xlu0 %983
      %985 = vrot.lane.b32.xlu0 %v834, 96
      %v986 = vpop.permute.xlu0 %985
      %987 = vrot.lane.b32.xlu0 %v846, 96
      %v988 = vpop.permute.xlu0 %987
      %989 = vrot.lane.b32.xlu0 %v858, 96
      %v990 = vpop.permute.xlu0 %989
      %991 = vrot.lane.b32.xlu0 %v870, 96
      %v992 = vpop.permute.xlu0 %991
      %993 = vrot.lane.b32.xlu0 %v882, 96
      %v994 = vpop.permute.xlu0 %993
      %995 = vrot.lane.b32.xlu0 %v894, 96
      %v996 = vpop.permute.xlu0 %995
      %997 = vrot.lane.b32.xlu0 %v906, 96
      %v998 = vpop.permute.xlu0 %997
      %999 = vrot.lane.b32.xlu0 %v918, 96
      %v1000 = vpop.permute.xlu0 %999
      %1001 = vrot.lane.b32.xlu0 %v930, 96
      %v1002 = vpop.permute.xlu0 %1001
      %1003 = vrot.lane.b32.xlu0 %v942, 96
      %v1004 = vpop.permute.xlu0 %1003
      %1005 = vrot.lane.b32.xlu0 %v954, 96
      %v1006 = vpop.permute.xlu0 %1005
      %1007 = vrot.lane.b32.xlu0 %v966, 96
      %v1008 = vpop.permute.xlu0 %1007
      %1009 = vrot.lane.b32.xlu0 %v978, 96
      %v1010 = vpop.permute.xlu0 %1009
      %vm1011 = vcmask 261120
      %v1013 = vsel %vm1011, %v338, %v596
      %v1015 = vsel %vm1011, %v339, %v598
      %v1017 = vsel %vm1011, %v340, %v600
      %v1019 = vsel %vm1011, %v341, %v602
      %v1021 = vsel %vm1011, %v342, %v604
      %v1023 = vsel %vm1011, %v343, %v606
      %v1025 = vsel %vm1011, %v344, %v608
      %v1027 = vsel %vm1011, %v345, %v610
      %v1029 = vsel %vm1011, %v346, %v612
      %v1031 = vsel %vm1011, %v347, %v614
      %v1033 = vsel %vm1011, %v348, %v616
      %v1035 = vsel %vm1011, %v349, %v618
      %v1037 = vsel %vm1011, %v350, %v620
      %v1039 = vsel %vm1011, %v351, %v622
      %v1041 = vsel %vm1011, %v352, %v624
      %v1043 = vsel %vm1011, %v353, %v626
      %vm1044 = vcmask 523264
      %v1046 = vsel %vm1044, %v1013, %v708
      %v1048 = vsel %vm1044, %v1015, %v710
      %v1050 = vsel %vm1044, %v1017, %v712
      %v1052 = vsel %vm1044, %v1019, %v714
      %v1054 = vsel %vm1044, %v1021, %v716
      %v1056 = vsel %vm1044, %v1023, %v718
      %v1058 = vsel %vm1044, %v1025, %v720
      %v1060 = vsel %vm1044, %v1027, %v722
      %v1062 = vsel %vm1044, %v1029, %v724
      %v1064 = vsel %vm1044, %v1031, %v726
      %v1066 = vsel %vm1044, %v1033, %v728
      %v1068 = vsel %vm1044, %v1035, %v730
      %v1070 = vsel %vm1044, %v1037, %v732
      %v1072 = vsel %vm1044, %v1039, %v734
      %v1074 = vsel %vm1044, %v1041, %v736
      %v1076 = vsel %vm1044, %v1043, %v738
      %vm1077 = vcmask 785408
      %v1079 = vsel %vm1077, %v1046, %v980
      %v1082 = vsel %vm1077, %v1048, %v982
      %v1085 = vsel %vm1077, %v1050, %v984
      %v1088 = vsel %vm1077, %v1052, %v986
      %v1091 = vsel %vm1077, %v1054, %v988
      %v1094 = vsel %vm1077, %v1056, %v990
      %v1097 = vsel %vm1077, %v1058, %v992
      %v1100 = vsel %vm1077, %v1060, %v994
      %v1103 = vsel %vm1077, %v1062, %v996
      %v1106 = vsel %vm1077, %v1064, %v998
      %v1109 = vsel %vm1077, %v1066, %v1000
      %v1112 = vsel %vm1077, %v1068, %v1002
      %v1115 = vsel %vm1077, %v1070, %v1004
      %v1118 = vsel %vm1077, %v1072, %v1006
      %v1121 = vsel %vm1077, %v1074, %v1008
      %v1124 = vsel %vm1077, %v1076, %v1010
      %v1126 = vld [vmem:[%s1] sm:$0xf]
      %v1127 = vld [vmem:[%s1 + $0x4] sm:$0xf]
      %v1128 = vld [vmem:[%s1 + $0x8] sm:$0xf]
      %v1129 = vld [vmem:[%s1 + $0xc] sm:$0xf]
      %v1130 = vld [vmem:[%s1 + $0x10] sm:$0xf]
      %v1131 = vld [vmem:[%s1 + $0x14] sm:$0xf]
      %v1132 = vld [vmem:[%s1 + $0x18] sm:$0xf]
      %v1133 = vld [vmem:[%s1 + $0x1c] sm:$0xf]
      %v1134 = vld [vmem:[%s1 + $0x20] sm:$0xf]
      %v1135 = vld [vmem:[%s1 + $0x24] sm:$0xf]
      %v1136 = vld [vmem:[%s1 + $0x28] sm:$0xf]
      %v1137 = vld [vmem:[%s1 + $0x2c] sm:$0xf]
      %v1138 = vld [vmem:[%s1 + $0x30] sm:$0xf]
      %v1139 = vld [vmem:[%s1 + $0x34] sm:$0xf]
      %v1140 = vld [vmem:[%s1 + $0x38] sm:$0xf]
      %v1141 = vld [vmem:[%s1 + $0x3c] sm:$0xf]
      %v1158 = vunpack.c.l.b16 %v1126
      %v1159 = vunpack.c.l.b16 %v1127
      %v1160 = vunpack.c.l.b16 %v1128
      %v1161 = vunpack.c.l.b16 %v1129
      %v1162 = vunpack.c.l.b16 %v1130
      %v1163 = vunpack.c.l.b16 %v1131
      %v1164 = vunpack.c.l.b16 %v1132
      %v1165 = vunpack.c.l.b16 %v1133
      %v1166 = vunpack.c.l.b16 %v1134
      %v1167 = vunpack.c.l.b16 %v1135
      %v1168 = vunpack.c.l.b16 %v1136
      %v1169 = vunpack.c.l.b16 %v1137
      %v1170 = vunpack.c.l.b16 %v1138
      %v1171 = vunpack.c.l.b16 %v1139
      %v1172 = vunpack.c.l.b16 %v1140
      %v1173 = vunpack.c.l.b16 %v1141
      %v1174 = vpack.c.b16 %v1159, %v1158
      %v1175 = vpack.c.b16 %v1161, %v1160
      %v1176 = vpack.c.b16 %v1163, %v1162
      %v1177 = vpack.c.b16 %v1165, %v1164
      %v1178 = vpack.c.b16 %v1167, %v1166
      %v1179 = vpack.c.b16 %v1169, %v1168
      %v1180 = vpack.c.b16 %v1171, %v1170
      %v1181 = vpack.c.b16 %v1173, %v1172
      %1190 = vmatprep.subr.bf16.mxu0 0
      %1191 = vmatpush1.bf16.msra.mxu0 %v1174
      %1192 = vmatprep.subr.bf16.mxu0 0
      %1193 = vmatpush1.bf16.msra.mxu0 %v1175
      %1194 = vmatprep.subr.bf16.mxu0 0
      %1195 = vmatpush1.bf16.msra.mxu0 %v1176
      %1196 = vmatprep.subr.bf16.mxu0 0
      %1197 = vmatpush1.bf16.msra.mxu0 %v1177
      %1198 = vmatprep.subr.bf16.mxu0 0
      %1199 = vmatpush1.bf16.msra.mxu0 %v1178
      %1200 = vmatprep.subr.bf16.mxu0 0
      %1201 = vmatpush1.bf16.msra.mxu0 %v1179
      %1202 = vmatprep.subr.bf16.mxu0 0
      %1203 = vmatpush1.bf16.msra.mxu0 %v1180
      %1204 = vmatprep.subr.bf16.mxu0 0
      %1205 = vmatpush1.bf16.msra.mxu0 %v1181
      %1206 = vmatprep.subr.bf16.mxu0 0
      %1207 = vmatpush1.bf16.msra.mxu0 0
      %1208 = vmatprep.subr.bf16.mxu0 0
      %1209 = vmatpush1.bf16.msra.mxu0 0
      %1210 = vmatprep.subr.bf16.mxu0 0
      %1211 = vmatpush1.bf16.msra.mxu0 0
      %1212 = vmatprep.subr.bf16.mxu0 0
      %1213 = vmatpush1.bf16.msra.mxu0 0
      %1214 = vmatprep.subr.bf16.mxu0 0
      %1215 = vmatpush1.bf16.msra.mxu0 0
      %1216 = vmatprep.subr.bf16.mxu0 0
      %1217 = vmatpush1.bf16.msra.mxu0 0
      %1218 = vmatprep.subr.bf16.mxu0 0
      %1219 = vmatpush1.bf16.msra.mxu0 0
      %1220 = vmatprep.subr.bf16.mxu0 0
      %1221 = vmatpush1.bf16.msra.mxu0 0
      %1222 = vmatprep.mubr.bf16.mxu0 0
      %1223 = vmatmul.mubr.bf16.gmra.mrb[0].mxu0 %v1079
      %v1224 = vpop.f32.mrb[0].mxu0
      %v1225 = vadd.f32 0.0, %v1224
      %v1226 = vpop.f32.mrb[0].mxu0
      %v1227 = vpop.f32.mrb[0].mxu0
      %v1228 = vadd.f32 0.0, %v1227
      %v1229 = vpop.f32.mrb[0].mxu0
      %1230 = vmatprep.mubr.bf16.mxu0 0
      %1231 = vmatmul.mubr.bf16.gmra.mrb[0].mxu0 %v1082
      %v1232 = vpop.f32.mrb[0].mxu0
      %v1233 = vadd.f32 0.0, %v1232
      %v1234 = vpop.f32.mrb[0].mxu0
      %v1235 = vpop.f32.mrb[0].mxu0
      %v1236 = vadd.f32 0.0, %v1235
      %v1237 = vpop.f32.mrb[0].mxu0
      %1238 = vmatprep.mubr.bf16.mxu0 0
      %1239 = vmatmul.mubr.bf16.gmra.mrb[0].mxu0 %v1085
      %v1240 = vpop.f32.mrb[0].mxu0
      %v1241 = vadd.f32 0.0, %v1240
      %v1242 = vpop.f32.mrb[0].mxu0
      %v1243 = vpop.f32.mrb[0].mxu0
      %v1244 = vadd.f32 0.0, %v1243
      %v1245 = vpop.f32.mrb[0].mxu0
      %1246 = vmatprep.mubr.bf16.mxu0 0
      %1247 = vmatmul.mubr.bf16.gmra.mrb[0].mxu0 %v1088
      %v1248 = vpop.f32.mrb[0].mxu0
      %v1249 = vadd.f32 0.0, %v1248
      %v1250 = vpop.f32.mrb[0].mxu0
      %v1251 = vpop.f32.mrb[0].mxu0
      %v1252 = vadd.f32 0.0, %v1251
      %v1253 = vpop.f32.mrb[0].mxu0
      %1254 = vmatprep.mubr.bf16.mxu0 0
      %1255 = vmatmul.mubr.bf16.gmra.mrb[0].mxu0 %v1091
      %v1256 = vpop.f32.mrb[0].mxu0
      %v1257 = vadd.f32 0.0, %v1256
      %v1258 = vpop.f32.mrb[0].mxu0
      %v1259 = vpop.f32.mrb[0].mxu0
      %v1260 = vadd.f32 0.0, %v1259
      %v1261 = vpop.f32.mrb[0].mxu0
      %1262 = vmatprep.mubr.bf16.mxu0 0
      %1263 = vmatmul.mubr.bf16.gmra.mrb[0].mxu0 %v1094
      %v1264 = vpop.f32.mrb[0].mxu0
      %v1265 = vadd.f32 0.0, %v1264
      %v1266 = vpop.f32.mrb[0].mxu0
      %v1267 = vpop.f32.mrb[0].mxu0
      %v1268 = vadd.f32 0.0, %v1267
      %v1269 = vpop.f32.mrb[0].mxu0
      %1270 = vmatprep.mubr.bf16.mxu0 0
      %1271 = vmatmul.mubr.bf16.gmra.mrb[0].mxu0 %v1097
      %v1272 = vpop.f32.mrb[0].mxu0
      %v1273 = vadd.f32 0.0, %v1272
      %v1274 = vpop.f32.mrb[0].mxu0
      %v1275 = vpop.f32.mrb[0].mxu0
      %v1276 = vadd.f32 0.0, %v1275
      %v1277 = vpop.f32.mrb[0].mxu0
      %1278 = vmatprep.mubr.bf16.mxu0 0
      %1279 = vmatmul.mubr.bf16.gmra.mrb[0].mxu0 %v1100
      %v1280 = vpop.f32.mrb[0].mxu0
      %v1281 = vadd.f32 0.0, %v1280
      %v1282 = vpop.f32.mrb[0].mxu0
      %v1283 = vpop.f32.mrb[0].mxu0
      %v1284 = vadd.f32 0.0, %v1283
      %v1285 = vpop.f32.mrb[0].mxu0
      %1286 = vmatprep.mubr.bf16.mxu0 0
      %1287 = vmatmul.mubr.bf16.gmra.mrb[0].mxu0 %v1103
      %v1288 = vpop.f32.mrb[0].mxu0
      %v1289 = vadd.f32 0.0, %v1288
      %v1290 = vpop.f32.mrb[0].mxu0
      %v1291 = vpop.f32.mrb[0].mxu0
      %v1292 = vadd.f32 0.0, %v1291
      %v1293 = vpop.f32.mrb[0].mxu0
      %1294 = vmatprep.mubr.bf16.mxu0 0
      %1295 = vmatmul.mubr.bf16.gmra.mrb[0].mxu0 %v1106
      %v1296 = vpop.f32.mrb[0].mxu0
      %v1297 = vadd.f32 0.0, %v1296
      %v1298 = vpop.f32.mrb[0].mxu0
      %v1299 = vpop.f32.mrb[0].mxu0
      %v1300 = vadd.f32 0.0, %v1299
      %v1301 = vpop.f32.mrb[0].mxu0
      %1302 = vmatprep.mubr.bf16.mxu0 0
      %1303 = vmatmul.mubr.bf16.gmra.mrb[0].mxu0 %v1109
      %v1304 = vpop.f32.mrb[0].mxu0
      %v1305 = vadd.f32 0.0, %v1304
      %v1306 = vpop.f32.mrb[0].mxu0
      %v1307 = vpop.f32.mrb[0].mxu0
      %v1308 = vadd.f32 0.0, %v1307
      %v1309 = vpop.f32.mrb[0].mxu0
      %1310 = vmatprep.mubr.bf16.mxu0 0
      %1311 = vmatmul.mubr.bf16.gmra.mrb[0].mxu0 %v1112
      %v1312 = vpop.f32.mrb[0].mxu0
      %v1313 = vadd.f32 0.0, %v1312
      %v1314 = vpop.f32.mrb[0].mxu0
      %v1315 = vpop.f32.mrb[0].mxu0
      %v1316 = vadd.f32 0.0, %v1315
      %v1317 = vpop.f32.mrb[0].mxu0
      %1318 = vmatprep.mubr.bf16.mxu0 0
      %1319 = vmatmul.mubr.bf16.gmra.mrb[0].mxu0 %v1115
      %v1320 = vpop.f32.mrb[0].mxu0
      %v1321 = vadd.f32 0.0, %v1320
      %v1322 = vpop.f32.mrb[0].mxu0
      %v1323 = vpop.f32.mrb[0].mxu0
      %v1324 = vadd.f32 0.0, %v1323
      %v1325 = vpop.f32.mrb[0].mxu0
      %1326 = vmatprep.mubr.bf16.mxu0 0
      %1327 = vmatmul.mubr.bf16.gmra.mrb[0].mxu0 %v1118
      %v1328 = vpop.f32.mrb[0].mxu0
      %v1329 = vadd.f32 0.0, %v1328
      %v1330 = vpop.f32.mrb[0].mxu0
      %v1331 = vpop.f32.mrb[0].mxu0
      %v1332 = vadd.f32 0.0, %v1331
      %v1333 = vpop.f32.mrb[0].mxu0
      %1334 = vmatprep.mubr.bf16.mxu0 0
      %1335 = vmatmul.mubr.bf16.gmra.mrb[0].mxu0 %v1121
      %v1336 = vpop.f32.mrb[0].mxu0
      %v1337 = vadd.f32 0.0, %v1336
      %v1338 = vpop.f32.mrb[0].mxu0
      %v1339 = vpop.f32.mrb[0].mxu0
      %v1340 = vadd.f32 0.0, %v1339
      %v1341 = vpop.f32.mrb[0].mxu0
      %1342 = vmatprep.mubr.bf16.mxu0 0
      %1343 = vmatmul.mubr.bf16.gmra.mrb[0].mxu0 %v1124
      %v1344 = vpop.f32.mrb[0].mxu0
      %v1345 = vadd.f32 0.0, %v1344
      %v1346 = vpop.f32.mrb[0].mxu0
      %v1347 = vpop.f32.mrb[0].mxu0
      %v1348 = vadd.f32 0.0, %v1347
      %v1349 = vpop.f32.mrb[0].mxu0
      %1350 = vdwg.mxu0
      %v1351 = vmax.f32 %v1225, 0.0
      %v1352 = vmax.f32 %v1228, 0.0
      %v1353 = vmax.f32 %v1233, 0.0
      %v1354 = vmax.f32 %v1236, 0.0
      %v1355 = vmax.f32 %v1241, 0.0
      %v1356 = vmax.f32 %v1244, 0.0
      %v1357 = vmax.f32 %v1249, 0.0
      %v1358 = vmax.f32 %v1252, 0.0
      %v1359 = vmax.f32 %v1257, 0.0
      %v1360 = vmax.f32 %v1260, 0.0
      %v1361 = vmax.f32 %v1265, 0.0
      %v1362 = vmax.f32 %v1268, 0.0
      %v1363 = vmax.f32 %v1273, 0.0
      %v1364 = vmax.f32 %v1276, 0.0
      %v1365 = vmax.f32 %v1281, 0.0
      %v1366 = vmax.f32 %v1284, 0.0
      %v1367 = vmax.f32 %v1289, 0.0
      %v1368 = vmax.f32 %v1292, 0.0
      %v1369 = vmax.f32 %v1297, 0.0
      %v1370 = vmax.f32 %v1300, 0.0
      %v1371 = vmax.f32 %v1305, 0.0
      %v1372 = vmax.f32 %v1308, 0.0
      %v1373 = vmax.f32 %v1313, 0.0
      %v1374 = vmax.f32 %v1316, 0.0
      %v1375 = vmax.f32 %v1321, 0.0
      %v1376 = vmax.f32 %v1324, 0.0
      %v1377 = vmax.f32 %v1329, 0.0
      %v1378 = vmax.f32 %v1332, 0.0
      %v1379 = vmax.f32 %v1337, 0.0
      %v1380 = vmax.f32 %v1340, 0.0
      %v1381 = vmax.f32 %v1345, 0.0
      %v1382 = vmax.f32 %v1348, 0.0
      %v1383 = vpack.c.bf16 %v1352, %v1351
      %v1384 = vpack.c.bf16 %v1354, %v1353
      %v1385 = vpack.c.bf16 %v1356, %v1355
      %v1386 = vpack.c.bf16 %v1358, %v1357
      %v1387 = vpack.c.bf16 %v1360, %v1359
      %v1388 = vpack.c.bf16 %v1362, %v1361
      %v1389 = vpack.c.bf16 %v1364, %v1363
      %v1390 = vpack.c.bf16 %v1366, %v1365
      %v1391 = vpack.c.bf16 %v1368, %v1367
      %v1392 = vpack.c.bf16 %v1370, %v1369
      %v1393 = vpack.c.bf16 %v1372, %v1371
      %v1394 = vpack.c.bf16 %v1374, %v1373
      %v1395 = vpack.c.bf16 %v1376, %v1375
      %v1396 = vpack.c.bf16 %v1378, %v1377
      %v1397 = vpack.c.bf16 %v1380, %v1379
      %v1398 = vpack.c.bf16 %v1382, %v1381
      %v1415 = vunpack.c.l.b16 %v1383
      %v1416 = vunpack.c.h.b16 %v1383
      %v1417 = vunpack.c.l.b16 %v1384
      %v1418 = vunpack.c.h.b16 %v1384
      %v1419 = vunpack.c.l.b16 %v1385
      %v1420 = vunpack.c.h.b16 %v1385
      %v1421 = vunpack.c.l.b16 %v1386
      %v1422 = vunpack.c.h.b16 %v1386
      %v1423 = vunpack.c.l.b16 %v1387
      %v1424 = vunpack.c.h.b16 %v1387
      %v1425 = vunpack.c.l.b16 %v1388
      %v1426 = vunpack.c.h.b16 %v1388
      %v1427 = vunpack.c.l.b16 %v1389
      %v1428 = vunpack.c.h.b16 %v1389
      %v1429 = vunpack.c.l.b16 %v1390
      %v1430 = vunpack.c.h.b16 %v1390
      %v1431 = vunpack.c.l.b16 %v1391
      %v1432 = vunpack.c.h.b16 %v1391
      %v1433 = vunpack.c.l.b16 %v1392
      %v1434 = vunpack.c.h.b16 %v1392
      %v1435 = vunpack.c.l.b16 %v1393
      %v1436 = vunpack.c.h.b16 %v1393
      %v1437 = vunpack.c.l.b16 %v1394
      %v1438 = vunpack.c.h.b16 %v1394
      %v1439 = vunpack.c.l.b16 %v1395
      %v1440 = vunpack.c.h.b16 %v1395
      %v1441 = vunpack.c.l.b16 %v1396
      %v1442 = vunpack.c.h.b16 %v1396
      %v1443 = vunpack.c.l.b16 %v1397
      %v1444 = vunpack.c.h.b16 %v1397
      %v1445 = vunpack.c.l.b16 %v1398
      %v1446 = vunpack.c.h.b16 %v1398
      %v1447 = vpack.c.b16 %v1415, %v1415
      %v1448 = vpack.c.b16 %v1416, %v1416
      %v1449 = vpack.c.b16 %v1417, %v1417
      %v1450 = vpack.c.b16 %v1418, %v1418
      %v1451 = vpack.c.b16 %v1419, %v1419
      %v1452 = vpack.c.b16 %v1420, %v1420
      %v1453 = vpack.c.b16 %v1421, %v1421
      %v1454 = vpack.c.b16 %v1422, %v1422
      %v1455 = vpack.c.b16 %v1423, %v1423
      %v1456 = vpack.c.b16 %v1424, %v1424
      %v1457 = vpack.c.b16 %v1425, %v1425
      %v1458 = vpack.c.b16 %v1426, %v1426
      %v1459 = vpack.c.b16 %v1427, %v1427
      %v1460 = vpack.c.b16 %v1428, %v1428
      %v1461 = vpack.c.b16 %v1429, %v1429
      %v1462 = vpack.c.b16 %v1430, %v1430
      %v1463 = vpack.c.b16 %v1431, %v1431
      %v1464 = vpack.c.b16 %v1432, %v1432
      %v1465 = vpack.c.b16 %v1433, %v1433
      %v1466 = vpack.c.b16 %v1434, %v1434
      %v1467 = vpack.c.b16 %v1435, %v1435
      %v1468 = vpack.c.b16 %v1436, %v1436
      %v1469 = vpack.c.b16 %v1437, %v1437
      %v1470 = vpack.c.b16 %v1438, %v1438
      %v1471 = vpack.c.b16 %v1439, %v1439
      %v1472 = vpack.c.b16 %v1440, %v1440
      %v1473 = vpack.c.b16 %v1441, %v1441
      %v1474 = vpack.c.b16 %v1442, %v1442
      %v1475 = vpack.c.b16 %v1443, %v1443
      %v1476 = vpack.c.b16 %v1444, %v1444
      %v1477 = vpack.c.b16 %v1445, %v1445
      %v1478 = vpack.c.b16 %v1446, %v1446
      %1511 = vst [vmem:[%s167] sm:$0xf] %v1447
      %1512 = vst [vmem:[%s167 + $0x8] sm:$0xf] %v1448
      %1513 = vst [vmem:[%s167 + $0x20] sm:$0xf] %v1449
      %1514 = vst [vmem:[%s167 + $0x28] sm:$0xf] %v1450
      %1515 = vst [vmem:[%s167 + $0x40] sm:$0xf] %v1451
      %1516 = vst [vmem:[%s167 + $0x48] sm:$0xf] %v1452
      %1517 = vst [vmem:[%s167 + $0x60] sm:$0xf] %v1453
      %1518 = vst [vmem:[%s167 + $0x68] sm:$0xf] %v1454
      %1519 = vst [vmem:[%s167 + $0x80] sm:$0xf] %v1455
      %1520 = vst [vmem:[%s167 + $0x88] sm:$0xf] %v1456
      %1521 = vst [vmem:[%s167 + $0xa0] sm:$0xf] %v1457
      %1522 = vst [vmem:[%s167 + $0xa8] sm:$0xf] %v1458
      %1523 = vst [vmem:[%s167 + $0xc0] sm:$0xf] %v1459
      %1524 = vst [vmem:[%s167 + $0xc8] sm:$0xf] %v1460
      %1525 = vst [vmem:[%s167 + $0xe0] sm:$0xf] %v1461
      %1526 = vst [vmem:[%s167 + $0xe8] sm:$0xf] %v1462
      %1527 = vst [vmem:[%s167 + $0x100] sm:$0xf] %v1463
      %1528 = vst [vmem:[%s167 + $0x108] sm:$0xf] %v1464
      %1529 = vst [vmem:[%s167 + $0x120] sm:$0xf] %v1465
      %1530 = vst [vmem:[%s167 + $0x128] sm:$0xf] %v1466
      %1531 = vst [vmem:[%s167 + $0x140] sm:$0xf] %v1467
      %1532 = vst [vmem:[%s167 + $0x148] sm:$0xf] %v1468
      %1533 = vst [vmem:[%s167 + $0x160] sm:$0xf] %v1469
      %1534 = vst [vmem:[%s167 + $0x168] sm:$0xf] %v1470
      %1535 = vst [vmem:[%s167 + $0x180] sm:$0xf] %v1471
      %1536 = vst [vmem:[%s167 + $0x188] sm:$0xf] %v1472
      %1537 = vst [vmem:[%s167 + $0x1a0] sm:$0xf] %v1473
      %1538 = vst [vmem:[%s167 + $0x1a8] sm:$0xf] %v1474
      %1539 = vst [vmem:[%s167 + $0x1c0] sm:$0xf] %v1475
      %1540 = vst [vmem:[%s167 + $0x1c8] sm:$0xf] %v1476
      %1541 = vst [vmem:[%s167 + $0x1e0] sm:$0xf] %v1477
      %1542 = vst [vmem:[%s167 + $0x1e8] sm:$0xf] %v1478
      %v1543 = vld [vmem:[%s173] sm:$0xf]
      %v1544 = vld [vmem:[%s173 + $0x4] sm:$0xf]
      %v1545 = vld [vmem:[%s173 + $0x8] sm:$0x1]
      %v1546 = vld [vmem:[%s173 + $0xc] sm:$0xf]
      %v1547 = vld [vmem:[%s173 + $0x10] sm:$0xf]
      %v1548 = vld [vmem:[%s173 + $0x14] sm:$0x1]
      %v1549 = vld [vmem:[%s173 + $0x18] sm:$0xf]
      %v1550 = vld [vmem:[%s173 + $0x1c] sm:$0xf]
      %v1551 = vld [vmem:[%s173 + $0x20] sm:$0x1]
      %v1552 = vld [vmem:[%s173 + $0x24] sm:$0xf]
      %v1553 = vld [vmem:[%s173 + $0x28] sm:$0xf]
      %v1554 = vld [vmem:[%s173 + $0x2c] sm:$0x1]
      %v1555 = vld [vmem:[%s173 + $0x30] sm:$0xf]
      %v1556 = vld [vmem:[%s173 + $0x34] sm:$0xf]
      %v1557 = vld [vmem:[%s173 + $0x38] sm:$0x1]
      %v1558 = vld [vmem:[%s173 + $0x3c] sm:$0xf]
      %v1559 = vld [vmem:[%s173 + $0x40] sm:$0xf]
      %v1560 = vld [vmem:[%s173 + $0x44] sm:$0x1]
      %v1561 = vld [vmem:[%s173 + $0x48] sm:$0xf]
      %v1562 = vld [vmem:[%s173 + $0x4c] sm:$0xf]
      %v1563 = vld [vmem:[%s173 + $0x50] sm:$0x1]
      %v1564 = vld [vmem:[%s173 + $0x54] sm:$0xf]
      %v1565 = vld [vmem:[%s173 + $0x58] sm:$0xf]
      %v1566 = vld [vmem:[%s173 + $0x5c] sm:$0x1]
      %v1567 = vld [vmem:[%s173 + $0x60] sm:$0xf]
      %v1568 = vld [vmem:[%s173 + $0x64] sm:$0xf]
      %v1569 = vld [vmem:[%s173 + $0x68] sm:$0x1]
      %v1570 = vld [vmem:[%s173 + $0x6c] sm:$0xf]
      %v1571 = vld [vmem:[%s173 + $0x70] sm:$0xf]
      %v1572 = vld [vmem:[%s173 + $0x74] sm:$0x1]
      %v1573 = vld [vmem:[%s173 + $0x78] sm:$0xf]
      %v1574 = vld [vmem:[%s173 + $0x7c] sm:$0xf]
      %v1575 = vld [vmem:[%s173 + $0x80] sm:$0x1]
      %v1576 = vld [vmem:[%s173 + $0x84] sm:$0xf]
      %v1577 = vld [vmem:[%s173 + $0x88] sm:$0xf]
      %v1578 = vld [vmem:[%s173 + $0x8c] sm:$0x1]
      %v1579 = vld [vmem:[%s173 + $0x90] sm:$0xf]
      %v1580 = vld [vmem:[%s173 + $0x94] sm:$0xf]
      %v1581 = vld [vmem:[%s173 + $0x98] sm:$0x1]
      %v1582 = vld [vmem:[%s173 + $0x9c] sm:$0xf]
      %v1583 = vld [vmem:[%s173 + $0xa0] sm:$0xf]
      %v1584 = vld [vmem:[%s173 + $0xa4] sm:$0x1]
      %v1585 = vld [vmem:[%s173 + $0xa8] sm:$0xf]
      %v1586 = vld [vmem:[%s173 + $0xac] sm:$0xf]
      %v1587 = vld [vmem:[%s173 + $0xb0] sm:$0x1]
      %v1588 = vld [vmem:[%s173 + $0xb4] sm:$0xf]
      %v1589 = vld [vmem:[%s173 + $0xb8] sm:$0xf]
      %v1590 = vld [vmem:[%s173 + $0xbc] sm:$0x1]
      %v1591 = vld [vmem:[%s173] sm:$0xe]
      %v1592 = vld [vmem:[%s173 + $0xc] sm:$0xe]
      %v1593 = vld [vmem:[%s173 + $0x18] sm:$0xe]
      %v1594 = vld [vmem:[%s173 + $0x24] sm:$0xe]
      %v1595 = vld [vmem:[%s173 + $0x30] sm:$0xe]
      %v1596 = vld [vmem:[%s173 + $0x3c] sm:$0xe]
      %v1597 = vld [vmem:[%s173 + $0x48] sm:$0xe]
      %v1598 = vld [vmem:[%s173 + $0x54] sm:$0xe]
      %v1599 = vld [vmem:[%s173 + $0x60] sm:$0xe]
      %v1600 = vld [vmem:[%s173 + $0x6c] sm:$0xe]
      %v1601 = vld [vmem:[%s173 + $0x78] sm:$0xe]
      %v1602 = vld [vmem:[%s173 + $0x84] sm:$0xe]
      %v1603 = vld [vmem:[%s173 + $0x90] sm:$0xe]
      %v1604 = vld [vmem:[%s173 + $0x9c] sm:$0xe]
      %v1605 = vld [vmem:[%s173 + $0xa8] sm:$0xe]
      %v1606 = vld [vmem:[%s173 + $0xb4] sm:$0xe]
      %v1607 = vld [vmem:[%s225] sm:$0xf]
      %v1608 = vld [vmem:[%s225 + $0x4] sm:$0xf]
      %v1609 = vld [vmem:[%s225 + $0x8] sm:$0x1]
      %v1610 = vld [vmem:[%s225 + $0xc] sm:$0xf]
      %v1611 = vld [vmem:[%s225 + $0x10] sm:$0xf]
      %v1612 = vld [vmem:[%s225 + $0x14] sm:$0x1]
      %v1613 = vld [vmem:[%s225 + $0x18] sm:$0xf]
      %v1614 = vld [vmem:[%s225 + $0x1c] sm:$0xf]
      %v1615 = vld [vmem:[%s225 + $0x20] sm:$0x1]
      %v1616 = vld [vmem:[%s225 + $0x24] sm:$0xf]
      %v1617 = vld [vmem:[%s225 + $0x28] sm:$0xf]
      %v1618 = vld [vmem:[%s225 + $0x2c] sm:$0x1]
      %v1619 = vld [vmem:[%s225 + $0x30] sm:$0xf]
      %v1620 = vld [vmem:[%s225 + $0x34] sm:$0xf]
      %v1621 = vld [vmem:[%s225 + $0x38] sm:$0x1]
      %v1622 = vld [vmem:[%s225 + $0x3c] sm:$0xf]
      %v1623 = vld [vmem:[%s225 + $0x40] sm:$0xf]
      %v1624 = vld [vmem:[%s225 + $0x44] sm:$0x1]
      %v1625 = vld [vmem:[%s225 + $0x48] sm:$0xf]
      %v1626 = vld [vmem:[%s225 + $0x4c] sm:$0xf]
      %v1627 = vld [vmem:[%s225 + $0x50] sm:$0x1]
      %v1628 = vld [vmem:[%s225 + $0x54] sm:$0xf]
      %v1629 = vld [vmem:[%s225 + $0x58] sm:$0xf]
      %v1630 = vld [vmem:[%s225 + $0x5c] sm:$0x1]
      %v1631 = vld [vmem:[%s225 + $0x60] sm:$0xf]
      %v1632 = vld [vmem:[%s225 + $0x64] sm:$0xf]
      %v1633 = vld [vmem:[%s225 + $0x68] sm:$0x1]
      %v1634 = vld [vmem:[%s225 + $0x6c] sm:$0xf]
      %v1635 = vld [vmem:[%s225 + $0x70] sm:$0xf]
      %v1636 = vld [vmem:[%s225 + $0x74] sm:$0x1]
      %v1637 = vld [vmem:[%s225 + $0x78] sm:$0xf]
      %v1638 = vld [vmem:[%s225 + $0x7c] sm:$0xf]
      %v1639 = vld [vmem:[%s225 + $0x80] sm:$0x1]
      %v1640 = vld [vmem:[%s225 + $0x84] sm:$0xf]
      %v1641 = vld [vmem:[%s225 + $0x88] sm:$0xf]
      %v1642 = vld [vmem:[%s225 + $0x8c] sm:$0x1]
      %v1643 = vld [vmem:[%s225 + $0x90] sm:$0xf]
      %v1644 = vld [vmem:[%s225 + $0x94] sm:$0xf]
      %v1645 = vld [vmem:[%s225 + $0x98] sm:$0x1]
      %v1646 = vld [vmem:[%s225 + $0x9c] sm:$0xf]
      %v1647 = vld [vmem:[%s225 + $0xa0] sm:$0xf]
      %v1648 = vld [vmem:[%s225 + $0xa4] sm:$0x1]
      %v1649 = vld [vmem:[%s225 + $0xa8] sm:$0xf]
      %v1650 = vld [vmem:[%s225 + $0xac] sm:$0xf]
      %v1651 = vld [vmem:[%s225 + $0xb0] sm:$0x1]
      %v1652 = vld [vmem:[%s225 + $0xb4] sm:$0xf]
      %v1653 = vld [vmem:[%s225 + $0xb8] sm:$0xf]
      %v1654 = vld [vmem:[%s225 + $0xbc] sm:$0x1]
      %v1655 = vld [vmem:[%s225] sm:$0xe]
      %v1656 = vld [vmem:[%s225 + $0xc] sm:$0xe]
      %v1657 = vld [vmem:[%s225 + $0x18] sm:$0xe]
      %v1658 = vld [vmem:[%s225 + $0x24] sm:$0xe]
      %v1659 = vld [vmem:[%s225 + $0x30] sm:$0xe]
      %v1660 = vld [vmem:[%s225 + $0x3c] sm:$0xe]
      %v1661 = vld [vmem:[%s225 + $0x48] sm:$0xe]
      %v1662 = vld [vmem:[%s225 + $0x54] sm:$0xe]
      %v1663 = vld [vmem:[%s225 + $0x60] sm:$0xe]
      %v1664 = vld [vmem:[%s225 + $0x6c] sm:$0xe]
      %v1665 = vld [vmem:[%s225 + $0x78] sm:$0xe]
      %v1666 = vld [vmem:[%s225 + $0x84] sm:$0xe]
      %v1667 = vld [vmem:[%s225 + $0x90] sm:$0xe]
      %v1668 = vld [vmem:[%s225 + $0x9c] sm:$0xe]
      %v1669 = vld [vmem:[%s225 + $0xa8] sm:$0xe]
      %v1670 = vld [vmem:[%s225 + $0xb4] sm:$0xe]
      %v1719 = vunpack.c.l.b16 %v1543
      %v1720 = vunpack.c.l.b16 %v1544
      %v1721 = vunpack.c.l.b16 %v1545
      %v1722 = vunpack.c.l.b16 %v1546
      %v1723 = vunpack.c.l.b16 %v1547
      %v1724 = vunpack.c.l.b16 %v1548
      %v1725 = vunpack.c.l.b16 %v1549
      %v1726 = vunpack.c.l.b16 %v1550
      %v1727 = vunpack.c.l.b16 %v1551
      %v1728 = vunpack.c.l.b16 %v1552
      %v1729 = vunpack.c.l.b16 %v1553
      %v1730 = vunpack.c.l.b16 %v1554
      %v1731 = vunpack.c.l.b16 %v1555
      %v1732 = vunpack.c.l.b16 %v1556
      %v1733 = vunpack.c.l.b16 %v1557
      %v1734 = vunpack.c.l.b16 %v1558
      %v1735 = vunpack.c.l.b16 %v1559
      %v1736 = vunpack.c.l.b16 %v1560
      %v1737 = vunpack.c.l.b16 %v1561
      %v1738 = vunpack.c.l.b16 %v1562
      %v1739 = vunpack.c.l.b16 %v1563
      %v1740 = vunpack.c.l.b16 %v1564
      %v1741 = vunpack.c.l.b16 %v1565
      %v1742 = vunpack.c.l.b16 %v1566
      %v1743 = vunpack.c.l.b16 %v1567
      %v1744 = vunpack.c.l.b16 %v1568
      %v1745 = vunpack.c.l.b16 %v1569
      %v1746 = vunpack.c.l.b16 %v1570
      %v1747 = vunpack.c.l.b16 %v1571
      %v1748 = vunpack.c.l.b16 %v1572
      %v1749 = vunpack.c.l.b16 %v1573
      %v1750 = vunpack.c.l.b16 %v1574
      %v1751 = vunpack.c.l.b16 %v1575
      %v1752 = vunpack.c.l.b16 %v1576
      %v1753 = vunpack.c.l.b16 %v1577
      %v1754 = vunpack.c.l.b16 %v1578
      %v1755 = vunpack.c.l.b16 %v1579
      %v1756 = vunpack.c.l.b16 %v1580
      %v1757 = vunpack.c.l.b16 %v1581
      %v1758 = vunpack.c.l.b16 %v1582
      %v1759 = vunpack.c.l.b16 %v1583
      %v1760 = vunpack.c.l.b16 %v1584
      %v1761 = vunpack.c.l.b16 %v1585
      %v1762 = vunpack.c.l.b16 %v1586
      %v1763 = vunpack.c.l.b16 %v1587
      %v1764 = vunpack.c.l.b16 %v1588
      %v1765 = vunpack.c.l.b16 %v1589
      %v1766 = vunpack.c.l.b16 %v1590
      %v1767 = vpack.c.b16 %v1720, %v1719
      %v1768 = vpack.c.b16 %v1721, %v1721
      %v1769 = vpack.c.b16 %v1723, %v1722
      %v1770 = vpack.c.b16 %v1724, %v1724
      %v1771 = vpack.c.b16 %v1726, %v1725
      %v1772 = vpack.c.b16 %v1727, %v1727
      %v1773 = vpack.c.b16 %v1729, %v1728
      %v1774 = vpack.c.b16 %v1730, %v1730
      %v1775 = vpack.c.b16 %v1732, %v1731
      %v1776 = vpack.c.b16 %v1733, %v1733
      %v1777 = vpack.c.b16 %v1735, %v1734
      %v1778 = vpack.c.b16 %v1736, %v1736
      %v1779 = vpack.c.b16 %v1738, %v1737
      %v1780 = vpack.c.b16 %v1739, %v1739
      %v1781 = vpack.c.b16 %v1741, %v1740
      %v1782 = vpack.c.b16 %v1742, %v1742
      %v1783 = vpack.c.b16 %v1744, %v1743
      %v1784 = vpack.c.b16 %v1745, %v1745
      %v1785 = vpack.c.b16 %v1747, %v1746
      %v1786 = vpack.c.b16 %v1748, %v1748
      %v1787 = vpack.c.b16 %v1750, %v1749
      %v1788 = vpack.c.b16 %v1751, %v1751
      %v1789 = vpack.c.b16 %v1753, %v1752
      %v1790 = vpack.c.b16 %v1754, %v1754
      %v1791 = vpack.c.b16 %v1756, %v1755
      %v1792 = vpack.c.b16 %v1757, %v1757
      %v1793 = vpack.c.b16 %v1759, %v1758
      %v1794 = vpack.c.b16 %v1760, %v1760
      %v1795 = vpack.c.b16 %v1762, %v1761
      %v1796 = vpack.c.b16 %v1763, %v1763
      %v1797 = vpack.c.b16 %v1765, %v1764
      %v1798 = vpack.c.b16 %v1766, %v1766
      %v1815 = vunpack.c.l.b16 %v1591
      %v1816 = vunpack.c.l.b16 %v1592
      %v1817 = vunpack.c.l.b16 %v1593
      %v1818 = vunpack.c.l.b16 %v1594
      %v1819 = vunpack.c.l.b16 %v1595
      %v1820 = vunpack.c.l.b16 %v1596
      %v1821 = vunpack.c.l.b16 %v1597
      %v1822 = vunpack.c.l.b16 %v1598
      %v1823 = vunpack.c.l.b16 %v1599
      %v1824 = vunpack.c.l.b16 %v1600
      %v1825 = vunpack.c.l.b16 %v1601
      %v1826 = vunpack.c.l.b16 %v1602
      %v1827 = vunpack.c.l.b16 %v1603
      %v1828 = vunpack.c.l.b16 %v1604
      %v1829 = vunpack.c.l.b16 %v1605
      %v1830 = vunpack.c.l.b16 %v1606
      %v1831 = vpack.c.b16 %v1720, %v1815
      %v1832 = vpack.c.b16 %v1723, %v1816
      %v1833 = vpack.c.b16 %v1726, %v1817
      %v1834 = vpack.c.b16 %v1729, %v1818
      %v1835 = vpack.c.b16 %v1732, %v1819
      %v1836 = vpack.c.b16 %v1735, %v1820
      %v1837 = vpack.c.b16 %v1738, %v1821
      %v1838 = vpack.c.b16 %v1741, %v1822
      %v1839 = vpack.c.b16 %v1744, %v1823
      %v1840 = vpack.c.b16 %v1747, %v1824
      %v1841 = vpack.c.b16 %v1750, %v1825
      %v1842 = vpack.c.b16 %v1753, %v1826
      %v1843 = vpack.c.b16 %v1756, %v1827
      %v1844 = vpack.c.b16 %v1759, %v1828
      %v1845 = vpack.c.b16 %v1762, %v1829
      %v1846 = vpack.c.b16 %v1765, %v1830
      %v1848 = vshrl.u32 %v1831, 16
      %v1850 = vshll.u32 %v1831, 16
      %v1852 = vrot.slane %v1850, 1
      %v1853 = vor.u32 %v1848, %v1852
      %v1855 = vshll.u32 %v1768, 16
      %v1857 = vrot.slane %v1855, 1
      %v1858 = vsel %vm402, %v1853, %v1857
      %v1859 = vshrl.u32 %v1768, 16
      %v1862 = vshrl.u32 %v1832, 16
      %v1864 = vshll.u32 %v1832, 16
      %v1866 = vrot.slane %v1864, 1
      %v1867 = vor.u32 %v1862, %v1866
      %v1869 = vshll.u32 %v1770, 16
      %v1871 = vrot.slane %v1869, 1
      %v1872 = vsel %vm402, %v1867, %v1871
      %v1873 = vshrl.u32 %v1770, 16
      %v1876 = vshrl.u32 %v1833, 16
      %v1878 = vshll.u32 %v1833, 16
      %v1880 = vrot.slane %v1878, 1
      %v1881 = vor.u32 %v1876, %v1880
      %v1883 = vshll.u32 %v1772, 16
      %v1885 = vrot.slane %v1883, 1
      %v1886 = vsel %vm402, %v1881, %v1885
      %v1887 = vshrl.u32 %v1772, 16
      %v1890 = vshrl.u32 %v1834, 16
      %v1892 = vshll.u32 %v1834, 16
      %v1894 = vrot.slane %v1892, 1
      %v1895 = vor.u32 %v1890, %v1894
      %v1897 = vshll.u32 %v1774, 16
      %v1899 = vrot.slane %v1897, 1
      %v1900 = vsel %vm402, %v1895, %v1899
      %v1901 = vshrl.u32 %v1774, 16
      %v1904 = vshrl.u32 %v1835, 16
      %v1906 = vshll.u32 %v1835, 16
      %v1908 = vrot.slane %v1906, 1
      %v1909 = vor.u32 %v1904, %v1908
      %v1911 = vshll.u32 %v1776, 16
      %v1913 = vrot.slane %v1911, 1
      %v1914 = vsel %vm402, %v1909, %v1913
      %v1915 = vshrl.u32 %v1776, 16
      %v1918 = vshrl.u32 %v1836, 16
      %v1920 = vshll.u32 %v1836, 16
      %v1922 = vrot.slane %v1920, 1
      %v1923 = vor.u32 %v1918, %v1922
      %v1925 = vshll.u32 %v1778, 16
      %v1927 = vrot.slane %v1925, 1
      %v1928 = vsel %vm402, %v1923, %v1927
      %v1929 = vshrl.u32 %v1778, 16
      %v1932 = vshrl.u32 %v1837, 16
      %v1934 = vshll.u32 %v1837, 16
      %v1936 = vrot.slane %v1934, 1
      %v1937 = vor.u32 %v1932, %v1936
      %v1939 = vshll.u32 %v1780, 16
      %v1941 = vrot.slane %v1939, 1
      %v1942 = vsel %vm402, %v1937, %v1941
      %v1943 = vshrl.u32 %v1780, 16
      %v1946 = vshrl.u32 %v1838, 16
      %v1948 = vshll.u32 %v1838, 16
      %v1950 = vrot.slane %v1948, 1
      %v1951 = vor.u32 %v1946, %v1950
      %v1953 = vshll.u32 %v1782, 16
      %v1955 = vrot.slane %v1953, 1
      %v1956 = vsel %vm402, %v1951, %v1955
      %v1957 = vshrl.u32 %v1782, 16
      %v1960 = vshrl.u32 %v1839, 16
      %v1962 = vshll.u32 %v1839, 16
      %v1964 = vrot.slane %v1962, 1
      %v1965 = vor.u32 %v1960, %v1964
      %v1967 = vshll.u32 %v1784, 16
      %v1969 = vrot.slane %v1967, 1
      %v1970 = vsel %vm402, %v1965, %v1969
      %v1971 = vshrl.u32 %v1784, 16
      %v1974 = vshrl.u32 %v1840, 16
      %v1976 = vshll.u32 %v1840, 16
      %v1978 = vrot.slane %v1976, 1
      %v1979 = vor.u32 %v1974, %v1978
      %v1981 = vshll.u32 %v1786, 16
      %v1983 = vrot.slane %v1981, 1
      %v1984 = vsel %vm402, %v1979, %v1983
      %v1985 = vshrl.u32 %v1786, 16
      %v1988 = vshrl.u32 %v1841, 16
      %v1990 = vshll.u32 %v1841, 16
      %v1992 = vrot.slane %v1990, 1
      %v1993 = vor.u32 %v1988, %v1992
      %v1995 = vshll.u32 %v1788, 16
      %v1997 = vrot.slane %v1995, 1
      %v1998 = vsel %vm402, %v1993, %v1997
      %v1999 = vshrl.u32 %v1788, 16
      %v2002 = vshrl.u32 %v1842, 16
      %v2004 = vshll.u32 %v1842, 16
      %v2006 = vrot.slane %v2004, 1
      %v2007 = vor.u32 %v2002, %v2006
      %v2009 = vshll.u32 %v1790, 16
      %v2011 = vrot.slane %v2009, 1
      %v2012 = vsel %vm402, %v2007, %v2011
      %v2013 = vshrl.u32 %v1790, 16
      %v2016 = vshrl.u32 %v1843, 16
      %v2018 = vshll.u32 %v1843, 16
      %v2020 = vrot.slane %v2018, 1
      %v2021 = vor.u32 %v2016, %v2020
      %v2023 = vshll.u32 %v1792, 16
      %v2025 = vrot.slane %v2023, 1
      %v2026 = vsel %vm402, %v2021, %v2025
      %v2027 = vshrl.u32 %v1792, 16
      %v2030 = vshrl.u32 %v1844, 16
      %v2032 = vshll.u32 %v1844, 16
      %v2034 = vrot.slane %v2032, 1
      %v2035 = vor.u32 %v2030, %v2034
      %v2037 = vshll.u32 %v1794, 16
      %v2039 = vrot.slane %v2037, 1
      %v2040 = vsel %vm402, %v2035, %v2039
      %v2041 = vshrl.u32 %v1794, 16
      %v2044 = vshrl.u32 %v1845, 16
      %v2046 = vshll.u32 %v1845, 16
      %v2048 = vrot.slane %v2046, 1
      %v2049 = vor.u32 %v2044, %v2048
      %v2051 = vshll.u32 %v1796, 16
      %v2053 = vrot.slane %v2051, 1
      %v2054 = vsel %vm402, %v2049, %v2053
      %v2055 = vshrl.u32 %v1796, 16
      %v2058 = vshrl.u32 %v1846, 16
      %v2060 = vshll.u32 %v1846, 16
      %v2062 = vrot.slane %v2060, 1
      %v2063 = vor.u32 %v2058, %v2062
      %v2065 = vshll.u32 %v1798, 16
      %v2067 = vrot.slane %v2065, 1
      %v2068 = vsel %vm402, %v2063, %v2067
      %v2069 = vshrl.u32 %v1798, 16
      %2071 = vrot.lane.b32.xlu0 %v1858, 32
      %v2072 = vpop.permute.xlu0 %2071
      %2073 = vrot.lane.b32.xlu0 %v1859, 32
      %v2074 = vpop.permute.xlu0 %2073
      %2075 = vrot.lane.b32.xlu0 %v1872, 32
      %v2076 = vpop.permute.xlu0 %2075
      %2077 = vrot.lane.b32.xlu0 %v1873, 32
      %v2078 = vpop.permute.xlu0 %2077
      %2079 = vrot.lane.b32.xlu0 %v1886, 32
      %v2080 = vpop.permute.xlu0 %2079
      %2081 = vrot.lane.b32.xlu0 %v1887, 32
      %v2082 = vpop.permute.xlu0 %2081
      %2083 = vrot.lane.b32.xlu0 %v1900, 32
      %v2084 = vpop.permute.xlu0 %2083
      %2085 = vrot.lane.b32.xlu0 %v1901, 32
      %v2086 = vpop.permute.xlu0 %2085
      %2087 = vrot.lane.b32.xlu0 %v1914, 32
      %v2088 = vpop.permute.xlu0 %2087
      %2089 = vrot.lane.b32.xlu0 %v1915, 32
      %v2090 = vpop.permute.xlu0 %2089
      %2091 = vrot.lane.b32.xlu0 %v1928, 32
      %v2092 = vpop.permute.xlu0 %2091
      %2093 = vrot.lane.b32.xlu0 %v1929, 32
      %v2094 = vpop.permute.xlu0 %2093
      %2095 = vrot.lane.b32.xlu0 %v1942, 32
      %v2096 = vpop.permute.xlu0 %2095
      %2097 = vrot.lane.b32.xlu0 %v1943, 32
      %v2098 = vpop.permute.xlu0 %2097
      %2099 = vrot.lane.b32.xlu0 %v1956, 32
      %v2100 = vpop.permute.xlu0 %2099
      %2101 = vrot.lane.b32.xlu0 %v1957, 32
      %v2102 = vpop.permute.xlu0 %2101
      %2103 = vrot.lane.b32.xlu0 %v1970, 32
      %v2104 = vpop.permute.xlu0 %2103
      %2105 = vrot.lane.b32.xlu0 %v1971, 32
      %v2106 = vpop.permute.xlu0 %2105
      %2107 = vrot.lane.b32.xlu0 %v1984, 32
      %v2108 = vpop.permute.xlu0 %2107
      %2109 = vrot.lane.b32.xlu0 %v1985, 32
      %v2110 = vpop.permute.xlu0 %2109
      %2111 = vrot.lane.b32.xlu0 %v1998, 32
      %v2112 = vpop.permute.xlu0 %2111
      %2113 = vrot.lane.b32.xlu0 %v1999, 32
      %v2114 = vpop.permute.xlu0 %2113
      %2115 = vrot.lane.b32.xlu0 %v2012, 32
      %v2116 = vpop.permute.xlu0 %2115
      %2117 = vrot.lane.b32.xlu0 %v2013, 32
      %v2118 = vpop.permute.xlu0 %2117
      %2119 = vrot.lane.b32.xlu0 %v2026, 32
      %v2120 = vpop.permute.xlu0 %2119
      %2121 = vrot.lane.b32.xlu0 %v2027, 32
      %v2122 = vpop.permute.xlu0 %2121
      %2123 = vrot.lane.b32.xlu0 %v2040, 32
      %v2124 = vpop.permute.xlu0 %2123
      %2125 = vrot.lane.b32.xlu0 %v2041, 32
      %v2126 = vpop.permute.xlu0 %2125
      %2127 = vrot.lane.b32.xlu0 %v2054, 32
      %v2128 = vpop.permute.xlu0 %2127
      %2129 = vrot.lane.b32.xlu0 %v2055, 32
      %v2130 = vpop.permute.xlu0 %2129
      %2131 = vrot.lane.b32.xlu0 %v2068, 32
      %v2132 = vpop.permute.xlu0 %2131
      %2133 = vrot.lane.b32.xlu0 %v2069, 32
      %v2134 = vpop.permute.xlu0 %2133
      %v2183 = vunpack.c.l.b16 %v1607
      %v2184 = vunpack.c.l.b16 %v1608
      %v2185 = vunpack.c.l.b16 %v1609
      %v2186 = vunpack.c.l.b16 %v1610
      %v2187 = vunpack.c.l.b16 %v1611
      %v2188 = vunpack.c.l.b16 %v1612
      %v2189 = vunpack.c.l.b16 %v1613
      %v2190 = vunpack.c.l.b16 %v1614
      %v2191 = vunpack.c.l.b16 %v1615
      %v2192 = vunpack.c.l.b16 %v1616
      %v2193 = vunpack.c.l.b16 %v1617
      %v2194 = vunpack.c.l.b16 %v1618
      %v2195 = vunpack.c.l.b16 %v1619
      %v2196 = vunpack.c.l.b16 %v1620
      %v2197 = vunpack.c.l.b16 %v1621
      %v2198 = vunpack.c.l.b16 %v1622
      %v2199 = vunpack.c.l.b16 %v1623
      %v2200 = vunpack.c.l.b16 %v1624
      %v2201 = vunpack.c.l.b16 %v1625
      %v2202 = vunpack.c.l.b16 %v1626
      %v2203 = vunpack.c.l.b16 %v1627
      %v2204 = vunpack.c.l.b16 %v1628
      %v2205 = vunpack.c.l.b16 %v1629
      %v2206 = vunpack.c.l.b16 %v1630
      %v2207 = vunpack.c.l.b16 %v1631
      %v2208 = vunpack.c.l.b16 %v1632
      %v2209 = vunpack.c.l.b16 %v1633
      %v2210 = vunpack.c.l.b16 %v1634
      %v2211 = vunpack.c.l.b16 %v1635
      %v2212 = vunpack.c.l.b16 %v1636
      %v2213 = vunpack.c.l.b16 %v1637
      %v2214 = vunpack.c.l.b16 %v1638
      %v2215 = vunpack.c.l.b16 %v1639
      %v2216 = vunpack.c.l.b16 %v1640
      %v2217 = vunpack.c.l.b16 %v1641
      %v2218 = vunpack.c.l.b16 %v1642
      %v2219 = vunpack.c.l.b16 %v1643
      %v2220 = vunpack.c.l.b16 %v1644
      %v2221 = vunpack.c.l.b16 %v1645
      %v2222 = vunpack.c.l.b16 %v1646
      %v2223 = vunpack.c.l.b16 %v1647
      %v2224 = vunpack.c.l.b16 %v1648
      %v2225 = vunpack.c.l.b16 %v1649
      %v2226 = vunpack.c.l.b16 %v1650
      %v2227 = vunpack.c.l.b16 %v1651
      %v2228 = vunpack.c.l.b16 %v1652
      %v2229 = vunpack.c.l.b16 %v1653
      %v2230 = vunpack.c.l.b16 %v1654
      %v2231 = vpack.c.b16 %v2184, %v2183
      %v2232 = vpack.c.b16 %v2185, %v2185
      %v2233 = vpack.c.b16 %v2187, %v2186
      %v2234 = vpack.c.b16 %v2188, %v2188
      %v2235 = vpack.c.b16 %v2190, %v2189
      %v2236 = vpack.c.b16 %v2191, %v2191
      %v2237 = vpack.c.b16 %v2193, %v2192
      %v2238 = vpack.c.b16 %v2194, %v2194
      %v2239 = vpack.c.b16 %v2196, %v2195
      %v2240 = vpack.c.b16 %v2197, %v2197
      %v2241 = vpack.c.b16 %v2199, %v2198
      %v2242 = vpack.c.b16 %v2200, %v2200
      %v2243 = vpack.c.b16 %v2202, %v2201
      %v2244 = vpack.c.b16 %v2203, %v2203
      %v2245 = vpack.c.b16 %v2205, %v2204
      %v2246 = vpack.c.b16 %v2206, %v2206
      %v2247 = vpack.c.b16 %v2208, %v2207
      %v2248 = vpack.c.b16 %v2209, %v2209
      %v2249 = vpack.c.b16 %v2211, %v2210
      %v2250 = vpack.c.b16 %v2212, %v2212
      %v2251 = vpack.c.b16 %v2214, %v2213
      %v2252 = vpack.c.b16 %v2215, %v2215
      %v2253 = vpack.c.b16 %v2217, %v2216
      %v2254 = vpack.c.b16 %v2218, %v2218
      %v2255 = vpack.c.b16 %v2220, %v2219
      %v2256 = vpack.c.b16 %v2221, %v2221
      %v2257 = vpack.c.b16 %v2223, %v2222
      %v2258 = vpack.c.b16 %v2224, %v2224
      %v2259 = vpack.c.b16 %v2226, %v2225
      %v2260 = vpack.c.b16 %v2227, %v2227
      %v2261 = vpack.c.b16 %v2229, %v2228
      %v2262 = vpack.c.b16 %v2230, %v2230
      %2263 = vrot.lane.b32.xlu0 %v2231, 64
      %v2264 = vpop.permute.xlu0 %2263
      %2265 = vrot.lane.b32.xlu0 %v2232, 64
      %v2266 = vpop.permute.xlu0 %2265
      %2267 = vrot.lane.b32.xlu0 %v2233, 64
      %v2268 = vpop.permute.xlu0 %2267
      %2269 = vrot.lane.b32.xlu0 %v2234, 64
      %v2270 = vpop.permute.xlu0 %2269
      %2271 = vrot.lane.b32.xlu0 %v2235, 64
      %v2272 = vpop.permute.xlu0 %2271
      %2273 = vrot.lane.b32.xlu0 %v2236, 64
      %v2274 = vpop.permute.xlu0 %2273
      %2275 = vrot.lane.b32.xlu0 %v2237, 64
      %v2276 = vpop.permute.xlu0 %2275
      %2277 = vrot.lane.b32.xlu0 %v2238, 64
      %v2278 = vpop.permute.xlu0 %2277
      %2279 = vrot.lane.b32.xlu0 %v2239, 64
      %v2280 = vpop.permute.xlu0 %2279
      %2281 = vrot.lane.b32.xlu0 %v2240, 64
      %v2282 = vpop.permute.xlu0 %2281
      %2283 = vrot.lane.b32.xlu0 %v2241, 64
      %v2284 = vpop.permute.xlu0 %2283
      %2285 = vrot.lane.b32.xlu0 %v2242, 64
      %v2286 = vpop.permute.xlu0 %2285
      %2287 = vrot.lane.b32.xlu0 %v2243, 64
      %v2288 = vpop.permute.xlu0 %2287
      %2289 = vrot.lane.b32.xlu0 %v2244, 64
      %v2290 = vpop.permute.xlu0 %2289
      %2291 = vrot.lane.b32.xlu0 %v2245, 64
      %v2292 = vpop.permute.xlu0 %2291
      %2293 = vrot.lane.b32.xlu0 %v2246, 64
      %v2294 = vpop.permute.xlu0 %2293
      %2295 = vrot.lane.b32.xlu0 %v2247, 64
      %v2296 = vpop.permute.xlu0 %2295
      %2297 = vrot.lane.b32.xlu0 %v2248, 64
      %v2298 = vpop.permute.xlu0 %2297
      %2299 = vrot.lane.b32.xlu0 %v2249, 64
      %v2300 = vpop.permute.xlu0 %2299
      %2301 = vrot.lane.b32.xlu0 %v2250, 64
      %v2302 = vpop.permute.xlu0 %2301
      %2303 = vrot.lane.b32.xlu0 %v2251, 64
      %v2304 = vpop.permute.xlu0 %2303
      %2305 = vrot.lane.b32.xlu0 %v2252, 64
      %v2306 = vpop.permute.xlu0 %2305
      %2307 = vrot.lane.b32.xlu0 %v2253, 64
      %v2308 = vpop.permute.xlu0 %2307
      %2309 = vrot.lane.b32.xlu0 %v2254, 64
      %v2310 = vpop.permute.xlu0 %2309
      %2311 = vrot.lane.b32.xlu0 %v2255, 64
      %v2312 = vpop.permute.xlu0 %2311
      %2313 = vrot.lane.b32.xlu0 %v2256, 64
      %v2314 = vpop.permute.xlu0 %2313
      %2315 = vrot.lane.b32.xlu0 %v2257, 64
      %v2316 = vpop.permute.xlu0 %2315
      %2317 = vrot.lane.b32.xlu0 %v2258, 64
      %v2318 = vpop.permute.xlu0 %2317
      %2319 = vrot.lane.b32.xlu0 %v2259, 64
      %v2320 = vpop.permute.xlu0 %2319
      %2321 = vrot.lane.b32.xlu0 %v2260, 64
      %v2322 = vpop.permute.xlu0 %2321
      %2323 = vrot.lane.b32.xlu0 %v2261, 64
      %v2324 = vpop.permute.xlu0 %2323
      %2325 = vrot.lane.b32.xlu0 %v2262, 64
      %v2326 = vpop.permute.xlu0 %2325
      %v2343 = vunpack.c.l.b16 %v1655
      %v2344 = vunpack.c.l.b16 %v1656
      %v2345 = vunpack.c.l.b16 %v1657
      %v2346 = vunpack.c.l.b16 %v1658
      %v2347 = vunpack.c.l.b16 %v1659
      %v2348 = vunpack.c.l.b16 %v1660
      %v2349 = vunpack.c.l.b16 %v1661
      %v2350 = vunpack.c.l.b16 %v1662
      %v2351 = vunpack.c.l.b16 %v1663
      %v2352 = vunpack.c.l.b16 %v1664
      %v2353 = vunpack.c.l.b16 %v1665
      %v2354 = vunpack.c.l.b16 %v1666
      %v2355 = vunpack.c.l.b16 %v1667
      %v2356 = vunpack.c.l.b16 %v1668
      %v2357 = vunpack.c.l.b16 %v1669
      %v2358 = vunpack.c.l.b16 %v1670
      %v2359 = vpack.c.b16 %v2184, %v2343
      %v2360 = vpack.c.b16 %v2187, %v2344
      %v2361 = vpack.c.b16 %v2190, %v2345
      %v2362 = vpack.c.b16 %v2193, %v2346
      %v2363 = vpack.c.b16 %v2196, %v2347
      %v2364 = vpack.c.b16 %v2199, %v2348
      %v2365 = vpack.c.b16 %v2202, %v2349
      %v2366 = vpack.c.b16 %v2205, %v2350
      %v2367 = vpack.c.b16 %v2208, %v2351
      %v2368 = vpack.c.b16 %v2211, %v2352
      %v2369 = vpack.c.b16 %v2214, %v2353
      %v2370 = vpack.c.b16 %v2217, %v2354
      %v2371 = vpack.c.b16 %v2220, %v2355
      %v2372 = vpack.c.b16 %v2223, %v2356
      %v2373 = vpack.c.b16 %v2226, %v2357
      %v2374 = vpack.c.b16 %v2229, %v2358
      %v2376 = vshrl.u32 %v2359, 16
      %v2378 = vshll.u32 %v2359, 16
      %v2380 = vrot.slane %v2378, 1
      %v2381 = vor.u32 %v2376, %v2380
      %v2383 = vshll.u32 %v2232, 16
      %v2385 = vrot.slane %v2383, 1
      %v2386 = vsel %vm402, %v2381, %v2385
      %v2387 = vshrl.u32 %v2232, 16
      %v2390 = vshrl.u32 %v2360, 16
      %v2392 = vshll.u32 %v2360, 16
      %v2394 = vrot.slane %v2392, 1
      %v2395 = vor.u32 %v2390, %v2394
      %v2397 = vshll.u32 %v2234, 16
      %v2399 = vrot.slane %v2397, 1
      %v2400 = vsel %vm402, %v2395, %v2399
      %v2401 = vshrl.u32 %v2234, 16
      %v2404 = vshrl.u32 %v2361, 16
      %v2406 = vshll.u32 %v2361, 16
      %v2408 = vrot.slane %v2406, 1
      %v2409 = vor.u32 %v2404, %v2408
      %v2411 = vshll.u32 %v2236, 16
      %v2413 = vrot.slane %v2411, 1
      %v2414 = vsel %vm402, %v2409, %v2413
      %v2415 = vshrl.u32 %v2236, 16
      %v2418 = vshrl.u32 %v2362, 16
      %v2420 = vshll.u32 %v2362, 16
      %v2422 = vrot.slane %v2420, 1
      %v2423 = vor.u32 %v2418, %v2422
      %v2425 = vshll.u32 %v2238, 16
      %v2427 = vrot.slane %v2425, 1
      %v2428 = vsel %vm402, %v2423, %v2427
      %v2429 = vshrl.u32 %v2238, 16
      %v2432 = vshrl.u32 %v2363, 16
      %v2434 = vshll.u32 %v2363, 16
      %v2436 = vrot.slane %v2434, 1
      %v2437 = vor.u32 %v2432, %v2436
      %v2439 = vshll.u32 %v2240, 16
      %v2441 = vrot.slane %v2439, 1
      %v2442 = vsel %vm402, %v2437, %v2441
      %v2443 = vshrl.u32 %v2240, 16
      %v2446 = vshrl.u32 %v2364, 16
      %v2448 = vshll.u32 %v2364, 16
      %v2450 = vrot.slane %v2448, 1
      %v2451 = vor.u32 %v2446, %v2450
      %v2453 = vshll.u32 %v2242, 16
      %v2455 = vrot.slane %v2453, 1
      %v2456 = vsel %vm402, %v2451, %v2455
      %v2457 = vshrl.u32 %v2242, 16
      %v2460 = vshrl.u32 %v2365, 16
      %v2462 = vshll.u32 %v2365, 16
      %v2464 = vrot.slane %v2462, 1
      %v2465 = vor.u32 %v2460, %v2464
      %v2467 = vshll.u32 %v2244, 16
      %v2469 = vrot.slane %v2467, 1
      %v2470 = vsel %vm402, %v2465, %v2469
      %v2471 = vshrl.u32 %v2244, 16
      %v2474 = vshrl.u32 %v2366, 16
      %v2476 = vshll.u32 %v2366, 16
      %v2478 = vrot.slane %v2476, 1
      %v2479 = vor.u32 %v2474, %v2478
      %v2481 = vshll.u32 %v2246, 16
      %v2483 = vrot.slane %v2481, 1
      %v2484 = vsel %vm402, %v2479, %v2483
      %v2485 = vshrl.u32 %v2246, 16
      %v2488 = vshrl.u32 %v2367, 16
      %v2490 = vshll.u32 %v2367, 16
      %v2492 = vrot.slane %v2490, 1
      %v2493 = vor.u32 %v2488, %v2492
      %v2495 = vshll.u32 %v2248, 16
      %v2497 = vrot.slane %v2495, 1
      %v2498 = vsel %vm402, %v2493, %v2497
      %v2499 = vshrl.u32 %v2248, 16
      %v2502 = vshrl.u32 %v2368, 16
      %v2504 = vshll.u32 %v2368, 16
      %v2506 = vrot.slane %v2504, 1
      %v2507 = vor.u32 %v2502, %v2506
      %v2509 = vshll.u32 %v2250, 16
      %v2511 = vrot.slane %v2509, 1
      %v2512 = vsel %vm402, %v2507, %v2511
      %v2513 = vshrl.u32 %v2250, 16
      %v2516 = vshrl.u32 %v2369, 16
      %v2518 = vshll.u32 %v2369, 16
      %v2520 = vrot.slane %v2518, 1
      %v2521 = vor.u32 %v2516, %v2520
      %v2523 = vshll.u32 %v2252, 16
      %v2525 = vrot.slane %v2523, 1
      %v2526 = vsel %vm402, %v2521, %v2525
      %v2527 = vshrl.u32 %v2252, 16
      %v2530 = vshrl.u32 %v2370, 16
      %v2532 = vshll.u32 %v2370, 16
      %v2534 = vrot.slane %v2532, 1
      %v2535 = vor.u32 %v2530, %v2534
      %v2537 = vshll.u32 %v2254, 16
      %v2539 = vrot.slane %v2537, 1
      %v2540 = vsel %vm402, %v2535, %v2539
      %v2541 = vshrl.u32 %v2254, 16
      %v2544 = vshrl.u32 %v2371, 16
      %v2546 = vshll.u32 %v2371, 16
      %v2548 = vrot.slane %v2546, 1
      %v2549 = vor.u32 %v2544, %v2548
      %v2551 = vshll.u32 %v2256, 16
      %v2553 = vrot.slane %v2551, 1
      %v2554 = vsel %vm402, %v2549, %v2553
      %v2555 = vshrl.u32 %v2256, 16
      %v2558 = vshrl.u32 %v2372, 16
      %v2560 = vshll.u32 %v2372, 16
      %v2562 = vrot.slane %v2560, 1
      %v2563 = vor.u32 %v2558, %v2562
      %v2565 = vshll.u32 %v2258, 16
      %v2567 = vrot.slane %v2565, 1
      %v2568 = vsel %vm402, %v2563, %v2567
      %v2569 = vshrl.u32 %v2258, 16
      %v2572 = vshrl.u32 %v2373, 16
      %v2574 = vshll.u32 %v2373, 16
      %v2576 = vrot.slane %v2574, 1
      %v2577 = vor.u32 %v2572, %v2576
      %v2579 = vshll.u32 %v2260, 16
      %v2581 = vrot.slane %v2579, 1
      %v2582 = vsel %vm402, %v2577, %v2581
      %v2583 = vshrl.u32 %v2260, 16
      %v2586 = vshrl.u32 %v2374, 16
      %v2588 = vshll.u32 %v2374, 16
      %v2590 = vrot.slane %v2588, 1
      %v2591 = vor.u32 %v2586, %v2590
      %v2593 = vshll.u32 %v2262, 16
      %v2595 = vrot.slane %v2593, 1
      %v2596 = vsel %vm402, %v2591, %v2595
      %v2597 = vshrl.u32 %v2262, 16
      %2599 = vrot.lane.b32.xlu0 %v2386, 96
      %v2600 = vpop.permute.xlu0 %2599
      %2601 = vrot.lane.b32.xlu0 %v2387, 96
      %v2602 = vpop.permute.xlu0 %2601
      %2603 = vrot.lane.b32.xlu0 %v2400, 96
      %v2604 = vpop.permute.xlu0 %2603
      %2605 = vrot.lane.b32.xlu0 %v2401, 96
      %v2606 = vpop.permute.xlu0 %2605
      %2607 = vrot.lane.b32.xlu0 %v2414, 96
      %v2608 = vpop.permute.xlu0 %2607
      %2609 = vrot.lane.b32.xlu0 %v2415, 96
      %v2610 = vpop.permute.xlu0 %2609
      %2611 = vrot.lane.b32.xlu0 %v2428, 96
      %v2612 = vpop.permute.xlu0 %2611
      %2613 = vrot.lane.b32.xlu0 %v2429, 96
      %v2614 = vpop.permute.xlu0 %2613
      %2615 = vrot.lane.b32.xlu0 %v2442, 96
      %v2616 = vpop.permute.xlu0 %2615
      %2617 = vrot.lane.b32.xlu0 %v2443, 96
      %v2618 = vpop.permute.xlu0 %2617
      %2619 = vrot.lane.b32.xlu0 %v2456, 96
      %v2620 = vpop.permute.xlu0 %2619
      %2621 = vrot.lane.b32.xlu0 %v2457, 96
      %v2622 = vpop.permute.xlu0 %2621
      %2623 = vrot.lane.b32.xlu0 %v2470, 96
      %v2624 = vpop.permute.xlu0 %2623
      %2625 = vrot.lane.b32.xlu0 %v2471, 96
      %v2626 = vpop.permute.xlu0 %2625
      %2627 = vrot.lane.b32.xlu0 %v2484, 96
      %v2628 = vpop.permute.xlu0 %2627
      %2629 = vrot.lane.b32.xlu0 %v2485, 96
      %v2630 = vpop.permute.xlu0 %2629
      %2631 = vrot.lane.b32.xlu0 %v2498, 96
      %v2632 = vpop.permute.xlu0 %2631
      %2633 = vrot.lane.b32.xlu0 %v2499, 96
      %v2634 = vpop.permute.xlu0 %2633
      %2635 = vrot.lane.b32.xlu0 %v2512, 96
      %v2636 = vpop.permute.xlu0 %2635
      %2637 = vrot.lane.b32.xlu0 %v2513, 96
      %v2638 = vpop.permute.xlu0 %2637
      %2639 = vrot.lane.b32.xlu0 %v2526, 96
      %v2640 = vpop.permute.xlu0 %2639
      %2641 = vrot.lane.b32.xlu0 %v2527, 96
      %v2642 = vpop.permute.xlu0 %2641
      %2643 = vrot.lane.b32.xlu0 %v2540, 96
      %v2644 = vpop.permute.xlu0 %2643
      %2645 = vrot.lane.b32.xlu0 %v2541, 96
      %v2646 = vpop.permute.xlu0 %2645
      %2647 = vrot.lane.b32.xlu0 %v2554, 96
      %v2648 = vpop.permute.xlu0 %2647
      %2649 = vrot.lane.b32.xlu0 %v2555, 96
      %v2650 = vpop.permute.xlu0 %2649
      %2651 = vrot.lane.b32.xlu0 %v2568, 96
      %v2652 = vpop.permute.xlu0 %2651
      %2653 = vrot.lane.b32.xlu0 %v2569, 96
      %v2654 = vpop.permute.xlu0 %2653
      %2655 = vrot.lane.b32.xlu0 %v2582, 96
      %v2656 = vpop.permute.xlu0 %2655
      %2657 = vrot.lane.b32.xlu0 %v2583, 96
      %v2658 = vpop.permute.xlu0 %2657
      %2659 = vrot.lane.b32.xlu0 %v2596, 96
      %v2660 = vpop.permute.xlu0 %2659
      %2661 = vrot.lane.b32.xlu0 %v2597, 96
      %v2662 = vpop.permute.xlu0 %2661
      %v2665 = vsel %vm1011, %v1767, %v2072
      %v2667 = vsel %vm1011, %v1768, %v2074
      %v2670 = vsel %vm1011, %v1769, %v2076
      %v2672 = vsel %vm1011, %v1770, %v2078
      %v2675 = vsel %vm1011, %v1771, %v2080
      %v2677 = vsel %vm1011, %v1772, %v2082
      %v2680 = vsel %vm1011, %v1773, %v2084
      %v2682 = vsel %vm1011, %v1774, %v2086
      %v2685 = vsel %vm1011, %v1775, %v2088
      %v2687 = vsel %vm1011, %v1776, %v2090
      %v2690 = vsel %vm1011, %v1777, %v2092
      %v2692 = vsel %vm1011, %v1778, %v2094
      %v2695 = vsel %vm1011, %v1779, %v2096
      %v2697 = vsel %vm1011, %v1780, %v2098
      %v2700 = vsel %vm1011, %v1781, %v2100
      %v2702 = vsel %vm1011, %v1782, %v2102
      %v2705 = vsel %vm1011, %v1783, %v2104
      %v2707 = vsel %vm1011, %v1784, %v2106
      %v2710 = vsel %vm1011, %v1785, %v2108
      %v2712 = vsel %vm1011, %v1786, %v2110
      %v2715 = vsel %vm1011, %v1787, %v2112
      %v2717 = vsel %vm1011, %v1788, %v2114
      %v2720 = vsel %vm1011, %v1789, %v2116
      %v2722 = vsel %vm1011, %v1790, %v2118
      %v2725 = vsel %vm1011, %v1791, %v2120
      %v2727 = vsel %vm1011, %v1792, %v2122
      %v2730 = vsel %vm1011, %v1793, %v2124
      %v2732 = vsel %vm1011, %v1794, %v2126
      %v2735 = vsel %vm1011, %v1795, %v2128
      %v2737 = vsel %vm1011, %v1796, %v2130
      %v2740 = vsel %vm1011, %v1797, %v2132
      %v2742 = vsel %vm1011, %v1798, %v2134
      %v2744 = vsel %vm1044, %v2665, %v2264
      %v2746 = vsel %vm1044, %v2667, %v2266
      %v2748 = vsel %vm1044, %v2670, %v2268
      %v2750 = vsel %vm1044, %v2672, %v2270
      %v2752 = vsel %vm1044, %v2675, %v2272
      %v2754 = vsel %vm1044, %v2677, %v2274
      %v2756 = vsel %vm1044, %v2680, %v2276
      %v2758 = vsel %vm1044, %v2682, %v2278
      %v2760 = vsel %vm1044, %v2685, %v2280
      %v2762 = vsel %vm1044, %v2687, %v2282
      %v2764 = vsel %vm1044, %v2690, %v2284
      %v2766 = vsel %vm1044, %v2692, %v2286
      %v2768 = vsel %vm1044, %v2695, %v2288
      %v2770 = vsel %vm1044, %v2697, %v2290
      %v2772 = vsel %vm1044, %v2700, %v2292
      %v2774 = vsel %vm1044, %v2702, %v2294
      %v2776 = vsel %vm1044, %v2705, %v2296
      %v2778 = vsel %vm1044, %v2707, %v2298
      %v2780 = vsel %vm1044, %v2710, %v2300
      %v2782 = vsel %vm1044, %v2712, %v2302
      %v2784 = vsel %vm1044, %v2715, %v2304
      %v2786 = vsel %vm1044, %v2717, %v2306
      %v2788 = vsel %vm1044, %v2720, %v2308
      %v2790 = vsel %vm1044, %v2722, %v2310
      %v2792 = vsel %vm1044, %v2725, %v2312
      %v2794 = vsel %vm1044, %v2727, %v2314
      %v2796 = vsel %vm1044, %v2730, %v2316
      %v2798 = vsel %vm1044, %v2732, %v2318
      %v2800 = vsel %vm1044, %v2735, %v2320
      %v2802 = vsel %vm1044, %v2737, %v2322
      %v2804 = vsel %vm1044, %v2740, %v2324
      %v2806 = vsel %vm1044, %v2742, %v2326
      %v2808 = vsel %vm1077, %v2744, %v2600
      %v2810 = vsel %vm1077, %v2746, %v2602
      %v2812 = vsel %vm1077, %v2748, %v2604
      %v2814 = vsel %vm1077, %v2750, %v2606
      %v2816 = vsel %vm1077, %v2752, %v2608
      %v2818 = vsel %vm1077, %v2754, %v2610
      %v2820 = vsel %vm1077, %v2756, %v2612
      %v2822 = vsel %vm1077, %v2758, %v2614
      %v2824 = vsel %vm1077, %v2760, %v2616
      %v2826 = vsel %vm1077, %v2762, %v2618
      %v2828 = vsel %vm1077, %v2764, %v2620
      %v2830 = vsel %vm1077, %v2766, %v2622
      %v2832 = vsel %vm1077, %v2768, %v2624
      %v2834 = vsel %vm1077, %v2770, %v2626
      %v2836 = vsel %vm1077, %v2772, %v2628
      %v2838 = vsel %vm1077, %v2774, %v2630
      %v2840 = vsel %vm1077, %v2776, %v2632
      %v2842 = vsel %vm1077, %v2778, %v2634
      %v2844 = vsel %vm1077, %v2780, %v2636
      %v2846 = vsel %vm1077, %v2782, %v2638
      %v2848 = vsel %vm1077, %v2784, %v2640
      %v2850 = vsel %vm1077, %v2786, %v2642
      %v2852 = vsel %vm1077, %v2788, %v2644
      %v2854 = vsel %vm1077, %v2790, %v2646
      %v2856 = vsel %vm1077, %v2792, %v2648
      %v2858 = vsel %vm1077, %v2794, %v2650
      %v2860 = vsel %vm1077, %v2796, %v2652
      %v2862 = vsel %vm1077, %v2798, %v2654
      %v2864 = vsel %vm1077, %v2800, %v2656
      %v2866 = vsel %vm1077, %v2802, %v2658
      %v2868 = vsel %vm1077, %v2804, %v2660
      %v2870 = vsel %vm1077, %v2806, %v2662
      %v2871 = vshrl.u32 %v2808, 16
      %v2873 = vshll.u32 %v2808, 16
      %v2875 = vrot.slane %v2873, 1
      %v2876 = vor.u32 %v2871, %v2875
      %v2877 = vshll.u32 %v2810, 16
      %v2879 = vrot.slane %v2877, 1
      %v2880 = vsel %vm402, %v2876, %v2879
      %v2881 = vshrl.u32 %v2812, 16
      %v2883 = vshll.u32 %v2812, 16
      %v2885 = vrot.slane %v2883, 1
      %v2886 = vor.u32 %v2881, %v2885
      %v2887 = vshll.u32 %v2814, 16
      %v2889 = vrot.slane %v2887, 1
      %v2890 = vsel %vm402, %v2886, %v2889
      %v2891 = vshrl.u32 %v2816, 16
      %v2893 = vshll.u32 %v2816, 16
      %v2895 = vrot.slane %v2893, 1
      %v2896 = vor.u32 %v2891, %v2895
      %v2897 = vshll.u32 %v2818, 16
      %v2899 = vrot.slane %v2897, 1
      %v2900 = vsel %vm402, %v2896, %v2899
      %v2901 = vshrl.u32 %v2820, 16
      %v2903 = vshll.u32 %v2820, 16
      %v2905 = vrot.slane %v2903, 1
      %v2906 = vor.u32 %v2901, %v2905
      %v2907 = vshll.u32 %v2822, 16
      %v2909 = vrot.slane %v2907, 1
      %v2910 = vsel %vm402, %v2906, %v2909
      %v2911 = vshrl.u32 %v2824, 16
      %v2913 = vshll.u32 %v2824, 16
      %v2915 = vrot.slane %v2913, 1
      %v2916 = vor.u32 %v2911, %v2915
      %v2917 = vshll.u32 %v2826, 16
      %v2919 = vrot.slane %v2917, 1
      %v2920 = vsel %vm402, %v2916, %v2919
      %v2921 = vshrl.u32 %v2828, 16
      %v2923 = vshll.u32 %v2828, 16
      %v2925 = vrot.slane %v2923, 1
      %v2926 = vor.u32 %v2921, %v2925
      %v2927 = vshll.u32 %v2830, 16
      %v2929 = vrot.slane %v2927, 1
      %v2930 = vsel %vm402, %v2926, %v2929
      %v2931 = vshrl.u32 %v2832, 16
      %v2933 = vshll.u32 %v2832, 16
      %v2935 = vrot.slane %v2933, 1
      %v2936 = vor.u32 %v2931, %v2935
      %v2937 = vshll.u32 %v2834, 16
      %v2939 = vrot.slane %v2937, 1
      %v2940 = vsel %vm402, %v2936, %v2939
      %v2941 = vshrl.u32 %v2836, 16
      %v2943 = vshll.u32 %v2836, 16
      %v2945 = vrot.slane %v2943, 1
      %v2946 = vor.u32 %v2941, %v2945
      %v2947 = vshll.u32 %v2838, 16
      %v2949 = vrot.slane %v2947, 1
      %v2950 = vsel %vm402, %v2946, %v2949
      %v2951 = vshrl.u32 %v2840, 16
      %v2953 = vshll.u32 %v2840, 16
      %v2955 = vrot.slane %v2953, 1
      %v2956 = vor.u32 %v2951, %v2955
      %v2957 = vshll.u32 %v2842, 16
      %v2959 = vrot.slane %v2957, 1
      %v2960 = vsel %vm402, %v2956, %v2959
      %v2961 = vshrl.u32 %v2844, 16
      %v2963 = vshll.u32 %v2844, 16
      %v2965 = vrot.slane %v2963, 1
      %v2966 = vor.u32 %v2961, %v2965
      %v2967 = vshll.u32 %v2846, 16
      %v2969 = vrot.slane %v2967, 1
      %v2970 = vsel %vm402, %v2966, %v2969
      %v2971 = vshrl.u32 %v2848, 16
      %v2973 = vshll.u32 %v2848, 16
      %v2975 = vrot.slane %v2973, 1
      %v2976 = vor.u32 %v2971, %v2975
      %v2977 = vshll.u32 %v2850, 16
      %v2979 = vrot.slane %v2977, 1
      %v2980 = vsel %vm402, %v2976, %v2979
      %v2981 = vshrl.u32 %v2852, 16
      %v2983 = vshll.u32 %v2852, 16
      %v2985 = vrot.slane %v2983, 1
      %v2986 = vor.u32 %v2981, %v2985
      %v2987 = vshll.u32 %v2854, 16
      %v2989 = vrot.slane %v2987, 1
      %v2990 = vsel %vm402, %v2986, %v2989
      %v2991 = vshrl.u32 %v2856, 16
      %v2993 = vshll.u32 %v2856, 16
      %v2995 = vrot.slane %v2993, 1
      %v2996 = vor.u32 %v2991, %v2995
      %v2997 = vshll.u32 %v2858, 16
      %v2999 = vrot.slane %v2997, 1
      %v3000 = vsel %vm402, %v2996, %v2999
      %v3001 = vshrl.u32 %v2860, 16
      %v3003 = vshll.u32 %v2860, 16
      %v3005 = vrot.slane %v3003, 1
      %v3006 = vor.u32 %v3001, %v3005
      %v3007 = vshll.u32 %v2862, 16
      %v3009 = vrot.slane %v3007, 1
      %v3010 = vsel %vm402, %v3006, %v3009
      %v3011 = vshrl.u32 %v2864, 16
      %v3013 = vshll.u32 %v2864, 16
      %v3015 = vrot.slane %v3013, 1
      %v3016 = vor.u32 %v3011, %v3015
      %v3017 = vshll.u32 %v2866, 16
      %v3019 = vrot.slane %v3017, 1
      %v3020 = vsel %vm402, %v3016, %v3019
      %v3021 = vshrl.u32 %v2868, 16
      %v3023 = vshll.u32 %v2868, 16
      %v3025 = vrot.slane %v3023, 1
      %v3026 = vor.u32 %v3021, %v3025
      %v3027 = vshll.u32 %v2870, 16
      %v3029 = vrot.slane %v3027, 1
      %v3030 = vsel %vm402, %v3026, %v3029
      %s3047 = scalar_lea.vmem %s1, 64
      %v3048 = vld [vmem:[%s3047] sm:$0xf]
      %v3049 = vld [vmem:[%s3047 + $0x4] sm:$0xf]
      %v3050 = vld [vmem:[%s3047 + $0x8] sm:$0xf]
      %v3051 = vld [vmem:[%s3047 + $0xc] sm:$0xf]
      %v3052 = vld [vmem:[%s3047 + $0x10] sm:$0xf]
      %v3053 = vld [vmem:[%s3047 + $0x14] sm:$0xf]
      %v3054 = vld [vmem:[%s3047 + $0x18] sm:$0xf]
      %v3055 = vld [vmem:[%s3047 + $0x1c] sm:$0xf]
      %v3056 = vld [vmem:[%s3047 + $0x20] sm:$0xf]
      %v3057 = vld [vmem:[%s3047 + $0x24] sm:$0xf]
      %v3058 = vld [vmem:[%s3047 + $0x28] sm:$0xf]
      %v3059 = vld [vmem:[%s3047 + $0x2c] sm:$0xf]
      %v3060 = vld [vmem:[%s3047 + $0x30] sm:$0xf]
      %v3061 = vld [vmem:[%s3047 + $0x34] sm:$0xf]
      %v3062 = vld [vmem:[%s3047 + $0x38] sm:$0xf]
      %v3063 = vld [vmem:[%s3047 + $0x3c] sm:$0xf]
      %v3080 = vunpack.c.l.b16 %v3048
      %v3081 = vunpack.c.l.b16 %v3049
      %v3082 = vunpack.c.l.b16 %v3050
      %v3083 = vunpack.c.l.b16 %v3051
      %v3084 = vunpack.c.l.b16 %v3052
      %v3085 = vunpack.c.l.b16 %v3053
      %v3086 = vunpack.c.l.b16 %v3054
      %v3087 = vunpack.c.l.b16 %v3055
      %v3088 = vunpack.c.l.b16 %v3056
      %v3089 = vunpack.c.l.b16 %v3057
      %v3090 = vunpack.c.l.b16 %v3058
      %v3091 = vunpack.c.l.b16 %v3059
      %v3092 = vunpack.c.l.b16 %v3060
      %v3093 = vunpack.c.l.b16 %v3061
      %v3094 = vunpack.c.l.b16 %v3062
      %v3095 = vunpack.c.l.b16 %v3063
      %v3096 = vpack.c.b16 %v3081, %v3080
      %v3097 = vpack.c.b16 %v3083, %v3082
      %v3098 = vpack.c.b16 %v3085, %v3084
      %v3099 = vpack.c.b16 %v3087, %v3086
      %v3100 = vpack.c.b16 %v3089, %v3088
      %v3101 = vpack.c.b16 %v3091, %v3090
      %v3102 = vpack.c.b16 %v3093, %v3092
      %v3103 = vpack.c.b16 %v3095, %v3094
      %3112 = vmatprep.subr.bf16.mxu0 0
      %3113 = vmatpush1.bf16.msra.mxu0 %v3096
      %3114 = vmatprep.subr.bf16.mxu0 0
      %3115 = vmatpush1.bf16.msra.mxu0 %v3097
      %3116 = vmatprep.subr.bf16.mxu0 0
      %3117 = vmatpush1.bf16.msra.mxu0 %v3098
      %3118 = vmatprep.subr.bf16.mxu0 0
      %3119 = vmatpush1.bf16.msra.mxu0 %v3099
      %3120 = vmatprep.subr.bf16.mxu0 0
      %3121 = vmatpush1.bf16.msra.mxu0 %v3100
      %3122 = vmatprep.subr.bf16.mxu0 0
      %3123 = vmatpush1.bf16.msra.mxu0 %v3101
      %3124 = vmatprep.subr.bf16.mxu0 0
      %3125 = vmatpush1.bf16.msra.mxu0 %v3102
      %3126 = vmatprep.subr.bf16.mxu0 0
      %3127 = vmatpush1.bf16.msra.mxu0 %v3103
      %3128 = vmatprep.subr.bf16.mxu0 0
      %3129 = vmatpush1.bf16.msra.mxu0 0
      %3130 = vmatprep.subr.bf16.mxu0 0
      %3131 = vmatpush1.bf16.msra.mxu0 0
      %3132 = vmatprep.subr.bf16.mxu0 0
      %3133 = vmatpush1.bf16.msra.mxu0 0
      %3134 = vmatprep.subr.bf16.mxu0 0
      %3135 = vmatpush1.bf16.msra.mxu0 0
      %3136 = vmatprep.subr.bf16.mxu0 0
      %3137 = vmatpush1.bf16.msra.mxu0 0
      %3138 = vmatprep.subr.bf16.mxu0 0
      %3139 = vmatpush1.bf16.msra.mxu0 0
      %3140 = vmatprep.subr.bf16.mxu0 0
      %3141 = vmatpush1.bf16.msra.mxu0 0
      %3142 = vmatprep.subr.bf16.mxu0 0
      %3143 = vmatpush1.bf16.msra.mxu0 0
      %3144 = vmatprep.mubr.bf16.mxu0 0
      %3145 = vmatmul.mubr.bf16.gmra.mrb[0].mxu0 %v2880
      %v3146 = vpop.f32.mrb[0].mxu0
      %v3147 = vadd.f32 0.0, %v3146
      %v3148 = vpop.f32.mrb[0].mxu0
      %v3149 = vpop.f32.mrb[0].mxu0
      %v3150 = vadd.f32 0.0, %v3149
      %v3151 = vpop.f32.mrb[0].mxu0
      %3152 = vmatprep.mubr.bf16.mxu0 0
      %3153 = vmatmul.mubr.bf16.gmra.mrb[0].mxu0 %v2890
      %v3154 = vpop.f32.mrb[0].mxu0
      %v3155 = vadd.f32 0.0, %v3154
      %v3156 = vpop.f32.mrb[0].mxu0
      %v3157 = vpop.f32.mrb[0].mxu0
      %v3158 = vadd.f32 0.0, %v3157
      %v3159 = vpop.f32.mrb[0].mxu0
      %3160 = vmatprep.mubr.bf16.mxu0 0
      %3161 = vmatmul.mubr.bf16.gmra.mrb[0].mxu0 %v2900
      %v3162 = vpop.f32.mrb[0].mxu0
      %v3163 = vadd.f32 0.0, %v3162
      %v3164 = vpop.f32.mrb[0].mxu0
      %v3165 = vpop.f32.mrb[0].mxu0
      %v3166 = vadd.f32 0.0, %v3165
      %v3167 = vpop.f32.mrb[0].mxu0
      %3168 = vmatprep.mubr.bf16.mxu0 0
      %3169 = vmatmul.mubr.bf16.gmra.mrb[0].mxu0 %v2910
      %v3170 = vpop.f32.mrb[0].mxu0
      %v3171 = vadd.f32 0.0, %v3170
      %v3172 = vpop.f32.mrb[0].mxu0
      %v3173 = vpop.f32.mrb[0].mxu0
      %v3174 = vadd.f32 0.0, %v3173
      %v3175 = vpop.f32.mrb[0].mxu0
      %3176 = vmatprep.mubr.bf16.mxu0 0
      %3177 = vmatmul.mubr.bf16.gmra.mrb[0].mxu0 %v2920
      %v3178 = vpop.f32.mrb[0].mxu0
      %v3179 = vadd.f32 0.0, %v3178
      %v3180 = vpop.f32.mrb[0].mxu0
      %v3181 = vpop.f32.mrb[0].mxu0
      %v3182 = vadd.f32 0.0, %v3181
      %v3183 = vpop.f32.mrb[0].mxu0
      %3184 = vmatprep.mubr.bf16.mxu0 0
      %3185 = vmatmul.mubr.bf16.gmra.mrb[0].mxu0 %v2930
      %v3186 = vpop.f32.mrb[0].mxu0
      %v3187 = vadd.f32 0.0, %v3186
      %v3188 = vpop.f32.mrb[0].mxu0
      %v3189 = vpop.f32.mrb[0].mxu0
      %v3190 = vadd.f32 0.0, %v3189
      %v3191 = vpop.f32.mrb[0].mxu0
      %3192 = vmatprep.mubr.bf16.mxu0 0
      %3193 = vmatmul.mubr.bf16.gmra.mrb[0].mxu0 %v2940
      %v3194 = vpop.f32.mrb[0].mxu0
      %v3195 = vadd.f32 0.0, %v3194
      %v3196 = vpop.f32.mrb[0].mxu0
      %v3197 = vpop.f32.mrb[0].mxu0
      %v3198 = vadd.f32 0.0, %v3197
      %v3199 = vpop.f32.mrb[0].mxu0
      %3200 = vmatprep.mubr.bf16.mxu0 0
      %3201 = vmatmul.mubr.bf16.gmra.mrb[0].mxu0 %v2950
      %v3202 = vpop.f32.mrb[0].mxu0
      %v3203 = vadd.f32 0.0, %v3202
      %v3204 = vpop.f32.mrb[0].mxu0
      %v3205 = vpop.f32.mrb[0].mxu0
      %v3206 = vadd.f32 0.0, %v3205
      %v3207 = vpop.f32.mrb[0].mxu0
      %3208 = vmatprep.mubr.bf16.mxu0 0
      %3209 = vmatmul.mubr.bf16.gmra.mrb[0].mxu0 %v2960
      %v3210 = vpop.f32.mrb[0].mxu0
      %v3211 = vadd.f32 0.0, %v3210
      %v3212 = vpop.f32.mrb[0].mxu0
      %v3213 = vpop.f32.mrb[0].mxu0
      %v3214 = vadd.f32 0.0, %v3213
      %v3215 = vpop.f32.mrb[0].mxu0
      %3216 = vmatprep.mubr.bf16.mxu0 0
      %3217 = vmatmul.mubr.bf16.gmra.mrb[0].mxu0 %v2970
      %v3218 = vpop.f32.mrb[0].mxu0
      %v3219 = vadd.f32 0.0, %v3218
      %v3220 = vpop.f32.mrb[0].mxu0
      %v3221 = vpop.f32.mrb[0].mxu0
      %v3222 = vadd.f32 0.0, %v3221
      %v3223 = vpop.f32.mrb[0].mxu0
      %3224 = vmatprep.mubr.bf16.mxu0 0
      %3225 = vmatmul.mubr.bf16.gmra.mrb[0].mxu0 %v2980
      %v3226 = vpop.f32.mrb[0].mxu0
      %v3227 = vadd.f32 0.0, %v3226
      %v3228 = vpop.f32.mrb[0].mxu0
      %v3229 = vpop.f32.mrb[0].mxu0
      %v3230 = vadd.f32 0.0, %v3229
      %v3231 = vpop.f32.mrb[0].mxu0
      %3232 = vmatprep.mubr.bf16.mxu0 0
      %3233 = vmatmul.mubr.bf16.gmra.mrb[0].mxu0 %v2990
      %v3234 = vpop.f32.mrb[0].mxu0
      %v3235 = vadd.f32 0.0, %v3234
      %v3236 = vpop.f32.mrb[0].mxu0
      %v3237 = vpop.f32.mrb[0].mxu0
      %v3238 = vadd.f32 0.0, %v3237
      %v3239 = vpop.f32.mrb[0].mxu0
      %3240 = vmatprep.mubr.bf16.mxu0 0
      %3241 = vmatmul.mubr.bf16.gmra.mrb[0].mxu0 %v3000
      %v3242 = vpop.f32.mrb[0].mxu0
      %v3243 = vadd.f32 0.0, %v3242
      %v3244 = vpop.f32.mrb[0].mxu0
      %v3245 = vpop.f32.mrb[0].mxu0
      %v3246 = vadd.f32 0.0, %v3245
      %v3247 = vpop.f32.mrb[0].mxu0
      %3248 = vmatprep.mubr.bf16.mxu0 0
      %3249 = vmatmul.mubr.bf16.gmra.mrb[0].mxu0 %v3010
      %v3250 = vpop.f32.mrb[0].mxu0
      %v3251 = vadd.f32 0.0, %v3250
      %v3252 = vpop.f32.mrb[0].mxu0
      %v3253 = vpop.f32.mrb[0].mxu0
      %v3254 = vadd.f32 0.0, %v3253
      %v3255 = vpop.f32.mrb[0].mxu0
      %3256 = vmatprep.mubr.bf16.mxu0 0
      %3257 = vmatmul.mubr.bf16.gmra.mrb[0].mxu0 %v3020
      %v3258 = vpop.f32.mrb[0].mxu0
      %v3259 = vadd.f32 0.0, %v3258
      %v3260 = vpop.f32.mrb[0].mxu0
      %v3261 = vpop.f32.mrb[0].mxu0
      %v3262 = vadd.f32 0.0, %v3261
      %v3263 = vpop.f32.mrb[0].mxu0
      %3264 = vmatprep.mubr.bf16.mxu0 0
      %3265 = vmatmul.mubr.bf16.gmra.mrb[0].mxu0 %v3030
      %v3266 = vpop.f32.mrb[0].mxu0
      %v3267 = vadd.f32 0.0, %v3266
      %v3268 = vpop.f32.mrb[0].mxu0
      %v3269 = vpop.f32.mrb[0].mxu0
      %v3270 = vadd.f32 0.0, %v3269
      %v3271 = vpop.f32.mrb[0].mxu0
      %3272 = vdwg.mxu0
      %v3273 = vmax.f32 %v3147, 0.0
      %v3274 = vmax.f32 %v3150, 0.0
      %v3275 = vmax.f32 %v3155, 0.0
      %v3276 = vmax.f32 %v3158, 0.0
      %v3277 = vmax.f32 %v3163, 0.0
      %v3278 = vmax.f32 %v3166, 0.0
      %v3279 = vmax.f32 %v3171, 0.0
      %v3280 = vmax.f32 %v3174, 0.0
      %v3281 = vmax.f32 %v3179, 0.0
      %v3282 = vmax.f32 %v3182, 0.0
      %v3283 = vmax.f32 %v3187, 0.0
      %v3284 = vmax.f32 %v3190, 0.0
      %v3285 = vmax.f32 %v3195, 0.0
      %v3286 = vmax.f32 %v3198, 0.0
      %v3287 = vmax.f32 %v3203, 0.0
      %v3288 = vmax.f32 %v3206, 0.0
      %v3289 = vmax.f32 %v3211, 0.0
      %v3290 = vmax.f32 %v3214, 0.0
      %v3291 = vmax.f32 %v3219, 0.0
      %v3292 = vmax.f32 %v3222, 0.0
      %v3293 = vmax.f32 %v3227, 0.0
      %v3294 = vmax.f32 %v3230, 0.0
      %v3295 = vmax.f32 %v3235, 0.0
      %v3296 = vmax.f32 %v3238, 0.0
      %v3297 = vmax.f32 %v3243, 0.0
      %v3298 = vmax.f32 %v3246, 0.0
      %v3299 = vmax.f32 %v3251, 0.0
      %v3300 = vmax.f32 %v3254, 0.0
      %v3301 = vmax.f32 %v3259, 0.0
      %v3302 = vmax.f32 %v3262, 0.0
      %v3303 = vmax.f32 %v3267, 0.0
      %v3304 = vmax.f32 %v3270, 0.0
      %v3305 = vpack.c.bf16 %v3274, %v3273
      %v3306 = vpack.c.bf16 %v3276, %v3275
      %v3307 = vpack.c.bf16 %v3278, %v3277
      %v3308 = vpack.c.bf16 %v3280, %v3279
      %v3309 = vpack.c.bf16 %v3282, %v3281
      %v3310 = vpack.c.bf16 %v3284, %v3283
      %v3311 = vpack.c.bf16 %v3286, %v3285
      %v3312 = vpack.c.bf16 %v3288, %v3287
      %v3313 = vpack.c.bf16 %v3290, %v3289
      %v3314 = vpack.c.bf16 %v3292, %v3291
      %v3315 = vpack.c.bf16 %v3294, %v3293
      %v3316 = vpack.c.bf16 %v3296, %v3295
      %v3317 = vpack.c.bf16 %v3298, %v3297
      %v3318 = vpack.c.bf16 %v3300, %v3299
      %v3319 = vpack.c.bf16 %v3302, %v3301
      %v3320 = vpack.c.bf16 %v3304, %v3303
      %v3337 = vunpack.c.l.b16 %v3305
      %v3338 = vunpack.c.h.b16 %v3305
      %v3339 = vunpack.c.l.b16 %v3306
      %v3340 = vunpack.c.h.b16 %v3306
      %v3341 = vunpack.c.l.b16 %v3307
      %v3342 = vunpack.c.h.b16 %v3307
      %v3343 = vunpack.c.l.b16 %v3308
      %v3344 = vunpack.c.h.b16 %v3308
      %v3345 = vunpack.c.l.b16 %v3309
      %v3346 = vunpack.c.h.b16 %v3309
      %v3347 = vunpack.c.l.b16 %v3310
      %v3348 = vunpack.c.h.b16 %v3310
      %v3349 = vunpack.c.l.b16 %v3311
      %v3350 = vunpack.c.h.b16 %v3311
      %v3351 = vunpack.c.l.b16 %v3312
      %v3352 = vunpack.c.h.b16 %v3312
      %v3353 = vunpack.c.l.b16 %v3313
      %v3354 = vunpack.c.h.b16 %v3313
      %v3355 = vunpack.c.l.b16 %v3314
      %v3356 = vunpack.c.h.b16 %v3314
      %v3357 = vunpack.c.l.b16 %v3315
      %v3358 = vunpack.c.h.b16 %v3315
      %v3359 = vunpack.c.l.b16 %v3316
      %v3360 = vunpack.c.h.b16 %v3316
      %v3361 = vunpack.c.l.b16 %v3317
      %v3362 = vunpack.c.h.b16 %v3317
      %v3363 = vunpack.c.l.b16 %v3318
      %v3364 = vunpack.c.h.b16 %v3318
      %v3365 = vunpack.c.l.b16 %v3319
      %v3366 = vunpack.c.h.b16 %v3319
      %v3367 = vunpack.c.l.b16 %v3320
      %v3368 = vunpack.c.h.b16 %v3320
      %v3369 = vpack.c.b16 %v3337, %v3337
      %v3370 = vpack.c.b16 %v3338, %v3338
      %v3371 = vpack.c.b16 %v3339, %v3339
      %v3372 = vpack.c.b16 %v3340, %v3340
      %v3373 = vpack.c.b16 %v3341, %v3341
      %v3374 = vpack.c.b16 %v3342, %v3342
      %v3375 = vpack.c.b16 %v3343, %v3343
      %v3376 = vpack.c.b16 %v3344, %v3344
      %v3377 = vpack.c.b16 %v3345, %v3345
      %v3378 = vpack.c.b16 %v3346, %v3346
      %v3379 = vpack.c.b16 %v3347, %v3347
      %v3380 = vpack.c.b16 %v3348, %v3348
      %v3381 = vpack.c.b16 %v3349, %v3349
      %v3382 = vpack.c.b16 %v3350, %v3350
      %v3383 = vpack.c.b16 %v3351, %v3351
      %v3384 = vpack.c.b16 %v3352, %v3352
      %v3385 = vpack.c.b16 %v3353, %v3353
      %v3386 = vpack.c.b16 %v3354, %v3354
      %v3387 = vpack.c.b16 %v3355, %v3355
      %v3388 = vpack.c.b16 %v3356, %v3356
      %v3389 = vpack.c.b16 %v3357, %v3357
      %v3390 = vpack.c.b16 %v3358, %v3358
      %v3391 = vpack.c.b16 %v3359, %v3359
      %v3392 = vpack.c.b16 %v3360, %v3360
      %v3393 = vpack.c.b16 %v3361, %v3361
      %v3394 = vpack.c.b16 %v3362, %v3362
      %v3395 = vpack.c.b16 %v3363, %v3363
      %v3396 = vpack.c.b16 %v3364, %v3364
      %v3397 = vpack.c.b16 %v3365, %v3365
      %v3398 = vpack.c.b16 %v3366, %v3366
      %v3399 = vpack.c.b16 %v3367, %v3367
      %v3400 = vpack.c.b16 %v3368, %v3368
      %3433 = vst [vmem:[%s167 + $0x4] sm:$0xf] %v3369
      %3434 = vst [vmem:[%s167 + $0xc] sm:$0xf] %v3370
      %3435 = vst [vmem:[%s167 + $0x24] sm:$0xf] %v3371
      %3436 = vst [vmem:[%s167 + $0x2c] sm:$0xf] %v3372
      %3437 = vst [vmem:[%s167 + $0x44] sm:$0xf] %v3373
      %3438 = vst [vmem:[%s167 + $0x4c] sm:$0xf] %v3374
      %3439 = vst [vmem:[%s167 + $0x64] sm:$0xf] %v3375
      %3440 = vst [vmem:[%s167 + $0x6c] sm:$0xf] %v3376
      %3441 = vst [vmem:[%s167 + $0x84] sm:$0xf] %v3377
      %3442 = vst [vmem:[%s167 + $0x8c] sm:$0xf] %v3378
      %3443 = vst [vmem:[%s167 + $0xa4] sm:$0xf] %v3379
      %3444 = vst [vmem:[%s167 + $0xac] sm:$0xf] %v3380
      %3445 = vst [vmem:[%s167 + $0xc4] sm:$0xf] %v3381
      %3446 = vst [vmem:[%s167 + $0xcc] sm:$0xf] %v3382
      %3447 = vst [vmem:[%s167 + $0xe4] sm:$0xf] %v3383
      %3448 = vst [vmem:[%s167 + $0xec] sm:$0xf] %v3384
      %3449 = vst [vmem:[%s167 + $0x104] sm:$0xf] %v3385
      %3450 = vst [vmem:[%s167 + $0x10c] sm:$0xf] %v3386
      %3451 = vst [vmem:[%s167 + $0x124] sm:$0xf] %v3387
      %3452 = vst [vmem:[%s167 + $0x12c] sm:$0xf] %v3388
      %3453 = vst [vmem:[%s167 + $0x144] sm:$0xf] %v3389
      %3454 = vst [vmem:[%s167 + $0x14c] sm:$0xf] %v3390
      %3455 = vst [vmem:[%s167 + $0x164] sm:$0xf] %v3391
      %3456 = vst [vmem:[%s167 + $0x16c] sm:$0xf] %v3392
      %3457 = vst [vmem:[%s167 + $0x184] sm:$0xf] %v3393
      %3458 = vst [vmem:[%s167 + $0x18c] sm:$0xf] %v3394
      %3459 = vst [vmem:[%s167 + $0x1a4] sm:$0xf] %v3395
      %3460 = vst [vmem:[%s167 + $0x1ac] sm:$0xf] %v3396
      %3461 = vst [vmem:[%s167 + $0x1c4] sm:$0xf] %v3397
      %3462 = vst [vmem:[%s167 + $0x1cc] sm:$0xf] %v3398
      %3463 = vst [vmem:[%s167 + $0x1e4] sm:$0xf] %v3399
      %3464 = vst [vmem:[%s167 + $0x1ec] sm:$0xf] %v3400
      %v3465 = vld [vmem:[%s225] sm:$0xf]
      %v3466 = vld [vmem:[%s225 + $0x4] sm:$0xf]
      %v3467 = vld [vmem:[%s225 + $0xc] sm:$0xf]
      %v3468 = vld [vmem:[%s225 + $0x10] sm:$0xf]
      %v3469 = vld [vmem:[%s225 + $0x18] sm:$0xf]
      %v3470 = vld [vmem:[%s225 + $0x1c] sm:$0xf]
      %v3471 = vld [vmem:[%s225 + $0x24] sm:$0xf]
      %v3472 = vld [vmem:[%s225 + $0x28] sm:$0xf]
      %v3473 = vld [vmem:[%s225 + $0x30] sm:$0xf]
      %v3474 = vld [vmem:[%s225 + $0x34] sm:$0xf]
      %v3475 = vld [vmem:[%s225 + $0x3c] sm:$0xf]
      %v3476 = vld [vmem:[%s225 + $0x40] sm:$0xf]
      %v3477 = vld [vmem:[%s225 + $0x48] sm:$0xf]
      %v3478 = vld [vmem:[%s225 + $0x4c] sm:$0xf]
      %v3479 = vld [vmem:[%s225 + $0x54] sm:$0xf]
      %v3480 = vld [vmem:[%s225 + $0x58] sm:$0xf]
      %v3481 = vld [vmem:[%s225 + $0x60] sm:$0xf]
      %v3482 = vld [vmem:[%s225 + $0x64] sm:$0xf]
      %v3483 = vld [vmem:[%s225 + $0x6c] sm:$0xf]
      %v3484 = vld [vmem:[%s225 + $0x70] sm:$0xf]
      %v3485 = vld [vmem:[%s225 + $0x78] sm:$0xf]
      %v3486 = vld [vmem:[%s225 + $0x7c] sm:$0xf]
      %v3487 = vld [vmem:[%s225 + $0x84] sm:$0xf]
      %v3488 = vld [vmem:[%s225 + $0x88] sm:$0xf]
      %v3489 = vld [vmem:[%s225 + $0x90] sm:$0xf]
      %v3490 = vld [vmem:[%s225 + $0x94] sm:$0xf]
      %v3491 = vld [vmem:[%s225 + $0x9c] sm:$0xf]
      %v3492 = vld [vmem:[%s225 + $0xa0] sm:$0xf]
      %v3493 = vld [vmem:[%s225 + $0xa8] sm:$0xf]
      %v3494 = vld [vmem:[%s225 + $0xac] sm:$0xf]
      %v3495 = vld [vmem:[%s225 + $0xb4] sm:$0xf]
      %v3496 = vld [vmem:[%s225 + $0xb8] sm:$0xf]
      %v3497 = vld [vmem:[%s225 + $0x8] sm:$0x1]
      %v3498 = vld [vmem:[%s225 + $0x14] sm:$0x1]
      %v3499 = vld [vmem:[%s225 + $0x20] sm:$0x1]
      %v3500 = vld [vmem:[%s225 + $0x2c] sm:$0x1]
      %v3501 = vld [vmem:[%s225 + $0x38] sm:$0x1]
      %v3502 = vld [vmem:[%s225 + $0x44] sm:$0x1]
      %v3503 = vld [vmem:[%s225 + $0x50] sm:$0x1]
      %v3504 = vld [vmem:[%s225 + $0x5c] sm:$0x1]
      %v3505 = vld [vmem:[%s225 + $0x68] sm:$0x1]
      %v3506 = vld [vmem:[%s225 + $0x74] sm:$0x1]
      %v3507 = vld [vmem:[%s225 + $0x80] sm:$0x1]
      %v3508 = vld [vmem:[%s225 + $0x8c] sm:$0x1]
      %v3509 = vld [vmem:[%s225 + $0x98] sm:$0x1]
      %v3510 = vld [vmem:[%s225 + $0xa4] sm:$0x1]
      %v3511 = vld [vmem:[%s225 + $0xb0] sm:$0x1]
      %v3512 = vld [vmem:[%s225 + $0xbc] sm:$0x1]
      %s3513 = sadd.s32 %s170, 2
      %s3514 = smul.u32 %s3513, 3
      %s3515 = smul.addr %s3514, 4
      %s3516 = scalar_lea.vmem %s157, %s3515
      %v3517 = vld [vmem:[%s3516] sm:$0xf]
      %v3518 = vld [vmem:[%s3516 + $0x4] sm:$0xf]
      %v3519 = vld [vmem:[%s3516 + $0xc] sm:$0xf]
      %v3520 = vld [vmem:[%s3516 + $0x10] sm:$0xf]
      %v3521 = vld [vmem:[%s3516 + $0x18] sm:$0xf]
      %v3522 = vld [vmem:[%s3516 + $0x1c] sm:$0xf]
      %v3523 = vld [vmem:[%s3516 + $0x24] sm:$0xf]
      %v3524 = vld [vmem:[%s3516 + $0x28] sm:$0xf]
      %v3525 = vld [vmem:[%s3516 + $0x30] sm:$0xf]
      %v3526 = vld [vmem:[%s3516 + $0x34] sm:$0xf]
      %v3527 = vld [vmem:[%s3516 + $0x3c] sm:$0xf]
      %v3528 = vld [vmem:[%s3516 + $0x40] sm:$0xf]
      %v3529 = vld [vmem:[%s3516 + $0x48] sm:$0xf]
      %v3530 = vld [vmem:[%s3516 + $0x4c] sm:$0xf]
      %v3531 = vld [vmem:[%s3516 + $0x54] sm:$0xf]
      %v3532 = vld [vmem:[%s3516 + $0x58] sm:$0xf]
      %v3533 = vld [vmem:[%s3516 + $0x60] sm:$0xf]
      %v3534 = vld [vmem:[%s3516 + $0x64] sm:$0xf]
      %v3535 = vld [vmem:[%s3516 + $0x6c] sm:$0xf]
      %v3536 = vld [vmem:[%s3516 + $0x70] sm:$0xf]
      %v3537 = vld [vmem:[%s3516 + $0x78] sm:$0xf]
      %v3538 = vld [vmem:[%s3516 + $0x7c] sm:$0xf]
      %v3539 = vld [vmem:[%s3516 + $0x84] sm:$0xf]
      %v3540 = vld [vmem:[%s3516 + $0x88] sm:$0xf]
      %v3541 = vld [vmem:[%s3516 + $0x90] sm:$0xf]
      %v3542 = vld [vmem:[%s3516 + $0x94] sm:$0xf]
      %v3543 = vld [vmem:[%s3516 + $0x9c] sm:$0xf]
      %v3544 = vld [vmem:[%s3516 + $0xa0] sm:$0xf]
      %v3545 = vld [vmem:[%s3516 + $0xa8] sm:$0xf]
      %v3546 = vld [vmem:[%s3516 + $0xac] sm:$0xf]
      %v3547 = vld [vmem:[%s3516 + $0xb4] sm:$0xf]
      %v3548 = vld [vmem:[%s3516 + $0xb8] sm:$0xf]
      %v3549 = vld [vmem:[%s3516 + $0x8] sm:$0x1]
      %v3550 = vld [vmem:[%s3516 + $0x14] sm:$0x1]
      %v3551 = vld [vmem:[%s3516 + $0x20] sm:$0x1]
      %v3552 = vld [vmem:[%s3516 + $0x2c] sm:$0x1]
      %v3553 = vld [vmem:[%s3516 + $0x38] sm:$0x1]
      %v3554 = vld [vmem:[%s3516 + $0x44] sm:$0x1]
      %v3555 = vld [vmem:[%s3516 + $0x50] sm:$0x1]
      %v3556 = vld [vmem:[%s3516 + $0x5c] sm:$0x1]
      %v3557 = vld [vmem:[%s3516 + $0x68] sm:$0x1]
      %v3558 = vld [vmem:[%s3516 + $0x74] sm:$0x1]
      %v3559 = vld [vmem:[%s3516 + $0x80] sm:$0x1]
      %v3560 = vld [vmem:[%s3516 + $0x8c] sm:$0x1]
      %v3561 = vld [vmem:[%s3516 + $0x98] sm:$0x1]
      %v3562 = vld [vmem:[%s3516 + $0xa4] sm:$0x1]
      %v3563 = vld [vmem:[%s3516 + $0xb0] sm:$0x1]
      %v3564 = vld [vmem:[%s3516 + $0xbc] sm:$0x1]
      %v3597 = vunpack.c.l.b16 %v3465
      %v3598 = vunpack.c.l.b16 %v3466
      %v3599 = vunpack.c.l.b16 %v3467
      %v3600 = vunpack.c.l.b16 %v3468
      %v3601 = vunpack.c.l.b16 %v3469
      %v3602 = vunpack.c.l.b16 %v3470
      %v3603 = vunpack.c.l.b16 %v3471
      %v3604 = vunpack.c.l.b16 %v3472
      %v3605 = vunpack.c.l.b16 %v3473
      %v3606 = vunpack.c.l.b16 %v3474
      %v3607 = vunpack.c.l.b16 %v3475
      %v3608 = vunpack.c.l.b16 %v3476
      %v3609 = vunpack.c.l.b16 %v3477
      %v3610 = vunpack.c.l.b16 %v3478
      %v3611 = vunpack.c.l.b16 %v3479
      %v3612 = vunpack.c.l.b16 %v3480
      %v3613 = vunpack.c.l.b16 %v3481
      %v3614 = vunpack.c.l.b16 %v3482
      %v3615 = vunpack.c.l.b16 %v3483
      %v3616 = vunpack.c.l.b16 %v3484
      %v3617 = vunpack.c.l.b16 %v3485
      %v3618 = vunpack.c.l.b16 %v3486
      %v3619 = vunpack.c.l.b16 %v3487
      %v3620 = vunpack.c.l.b16 %v3488
      %v3621 = vunpack.c.l.b16 %v3489
      %v3622 = vunpack.c.l.b16 %v3490
      %v3623 = vunpack.c.l.b16 %v3491
      %v3624 = vunpack.c.l.b16 %v3492
      %v3625 = vunpack.c.l.b16 %v3493
      %v3626 = vunpack.c.l.b16 %v3494
      %v3627 = vunpack.c.l.b16 %v3495
      %v3628 = vunpack.c.l.b16 %v3496
      %v3629 = vpack.c.b16 %v3598, %v3597
      %v3630 = vpack.c.b16 %v3600, %v3599
      %v3631 = vpack.c.b16 %v3602, %v3601
      %v3632 = vpack.c.b16 %v3604, %v3603
      %v3633 = vpack.c.b16 %v3606, %v3605
      %v3634 = vpack.c.b16 %v3608, %v3607
      %v3635 = vpack.c.b16 %v3610, %v3609
      %v3636 = vpack.c.b16 %v3612, %v3611
      %v3637 = vpack.c.b16 %v3614, %v3613
      %v3638 = vpack.c.b16 %v3616, %v3615
      %v3639 = vpack.c.b16 %v3618, %v3617
      %v3640 = vpack.c.b16 %v3620, %v3619
      %v3641 = vpack.c.b16 %v3622, %v3621
      %v3642 = vpack.c.b16 %v3624, %v3623
      %v3643 = vpack.c.b16 %v3626, %v3625
      %v3644 = vpack.c.b16 %v3628, %v3627
      %v3661 = vunpack.c.l.b16 %v3497
      %v3662 = vunpack.c.l.b16 %v3498
      %v3663 = vunpack.c.l.b16 %v3499
      %v3664 = vunpack.c.l.b16 %v3500
      %v3665 = vunpack.c.l.b16 %v3501
      %v3666 = vunpack.c.l.b16 %v3502
      %v3667 = vunpack.c.l.b16 %v3503
      %v3668 = vunpack.c.l.b16 %v3504
      %v3669 = vunpack.c.l.b16 %v3505
      %v3670 = vunpack.c.l.b16 %v3506
      %v3671 = vunpack.c.l.b16 %v3507
      %v3672 = vunpack.c.l.b16 %v3508
      %v3673 = vunpack.c.l.b16 %v3509
      %v3674 = vunpack.c.l.b16 %v3510
      %v3675 = vunpack.c.l.b16 %v3511
      %v3676 = vunpack.c.l.b16 %v3512
      %v3677 = vpack.c.b16 %v3661, %v3661
      %v3678 = vpack.c.b16 %v3662, %v3662
      %v3679 = vpack.c.b16 %v3663, %v3663
      %v3680 = vpack.c.b16 %v3664, %v3664
      %v3681 = vpack.c.b16 %v3665, %v3665
      %v3682 = vpack.c.b16 %v3666, %v3666
      %v3683 = vpack.c.b16 %v3667, %v3667
      %v3684 = vpack.c.b16 %v3668, %v3668
      %v3685 = vpack.c.b16 %v3669, %v3669
      %v3686 = vpack.c.b16 %v3670, %v3670
      %v3687 = vpack.c.b16 %v3671, %v3671
      %v3688 = vpack.c.b16 %v3672, %v3672
      %v3689 = vpack.c.b16 %v3673, %v3673
      %v3690 = vpack.c.b16 %v3674, %v3674
      %v3691 = vpack.c.b16 %v3675, %v3675
      %v3692 = vpack.c.b16 %v3676, %v3676
      %v3694 = vshrl.u32 %v3629, 16
      %v3696 = vshll.u32 %v3629, 16
      %v3698 = vrot.slane %v3696, 1
      %v3699 = vor.u32 %v3694, %v3698
      %v3701 = vshll.u32 %v3677, 16
      %v3703 = vrot.slane %v3701, 1
      %v3704 = vsel %vm402, %v3699, %v3703
      %v3706 = vshrl.u32 %v3630, 16
      %v3708 = vshll.u32 %v3630, 16
      %v3710 = vrot.slane %v3708, 1
      %v3711 = vor.u32 %v3706, %v3710
      %v3713 = vshll.u32 %v3678, 16
      %v3715 = vrot.slane %v3713, 1
      %v3716 = vsel %vm402, %v3711, %v3715
      %v3718 = vshrl.u32 %v3631, 16
      %v3720 = vshll.u32 %v3631, 16
      %v3722 = vrot.slane %v3720, 1
      %v3723 = vor.u32 %v3718, %v3722
      %v3725 = vshll.u32 %v3679, 16
      %v3727 = vrot.slane %v3725, 1
      %v3728 = vsel %vm402, %v3723, %v3727
      %v3730 = vshrl.u32 %v3632, 16
      %v3732 = vshll.u32 %v3632, 16
      %v3734 = vrot.slane %v3732, 1
      %v3735 = vor.u32 %v3730, %v3734
      %v3737 = vshll.u32 %v3680, 16
      %v3739 = vrot.slane %v3737, 1
      %v3740 = vsel %vm402, %v3735, %v3739
      %v3742 = vshrl.u32 %v3633, 16
      %v3744 = vshll.u32 %v3633, 16
      %v3746 = vrot.slane %v3744, 1
      %v3747 = vor.u32 %v3742, %v3746
      %v3749 = vshll.u32 %v3681, 16
      %v3751 = vrot.slane %v3749, 1
      %v3752 = vsel %vm402, %v3747, %v3751
      %v3754 = vshrl.u32 %v3634, 16
      %v3756 = vshll.u32 %v3634, 16
      %v3758 = vrot.slane %v3756, 1
      %v3759 = vor.u32 %v3754, %v3758
      %v3761 = vshll.u32 %v3682, 16
      %v3763 = vrot.slane %v3761, 1
      %v3764 = vsel %vm402, %v3759, %v3763
      %v3766 = vshrl.u32 %v3635, 16
      %v3768 = vshll.u32 %v3635, 16
      %v3770 = vrot.slane %v3768, 1
      %v3771 = vor.u32 %v3766, %v3770
      %v3773 = vshll.u32 %v3683, 16
      %v3775 = vrot.slane %v3773, 1
      %v3776 = vsel %vm402, %v3771, %v3775
      %v3778 = vshrl.u32 %v3636, 16
      %v3780 = vshll.u32 %v3636, 16
      %v3782 = vrot.slane %v3780, 1
      %v3783 = vor.u32 %v3778, %v3782
      %v3785 = vshll.u32 %v3684, 16
      %v3787 = vrot.slane %v3785, 1
      %v3788 = vsel %vm402, %v3783, %v3787
      %v3790 = vshrl.u32 %v3637, 16
      %v3792 = vshll.u32 %v3637, 16
      %v3794 = vrot.slane %v3792, 1
      %v3795 = vor.u32 %v3790, %v3794
      %v3797 = vshll.u32 %v3685, 16
      %v3799 = vrot.slane %v3797, 1
      %v3800 = vsel %vm402, %v3795, %v3799
      %v3802 = vshrl.u32 %v3638, 16
      %v3804 = vshll.u32 %v3638, 16
      %v3806 = vrot.slane %v3804, 1
      %v3807 = vor.u32 %v3802, %v3806
      %v3809 = vshll.u32 %v3686, 16
      %v3811 = vrot.slane %v3809, 1
      %v3812 = vsel %vm402, %v3807, %v3811
      %v3814 = vshrl.u32 %v3639, 16
      %v3816 = vshll.u32 %v3639, 16
      %v3818 = vrot.slane %v3816, 1
      %v3819 = vor.u32 %v3814, %v3818
      %v3821 = vshll.u32 %v3687, 16
      %v3823 = vrot.slane %v3821, 1
      %v3824 = vsel %vm402, %v3819, %v3823
      %v3826 = vshrl.u32 %v3640, 16
      %v3828 = vshll.u32 %v3640, 16
      %v3830 = vrot.slane %v3828, 1
      %v3831 = vor.u32 %v3826, %v3830
      %v3833 = vshll.u32 %v3688, 16
      %v3835 = vrot.slane %v3833, 1
      %v3836 = vsel %vm402, %v3831, %v3835
      %v3838 = vshrl.u32 %v3641, 16
      %v3840 = vshll.u32 %v3641, 16
      %v3842 = vrot.slane %v3840, 1
      %v3843 = vor.u32 %v3838, %v3842
      %v3845 = vshll.u32 %v3689, 16
      %v3847 = vrot.slane %v3845, 1
      %v3848 = vsel %vm402, %v3843, %v3847
      %v3850 = vshrl.u32 %v3642, 16
      %v3852 = vshll.u32 %v3642, 16
      %v3854 = vrot.slane %v3852, 1
      %v3855 = vor.u32 %v3850, %v3854
      %v3857 = vshll.u32 %v3690, 16
      %v3859 = vrot.slane %v3857, 1
      %v3860 = vsel %vm402, %v3855, %v3859
      %v3862 = vshrl.u32 %v3643, 16
      %v3864 = vshll.u32 %v3643, 16
      %v3866 = vrot.slane %v3864, 1
      %v3867 = vor.u32 %v3862, %v3866
      %v3869 = vshll.u32 %v3691, 16
      %v3871 = vrot.slane %v3869, 1
      %v3872 = vsel %vm402, %v3867, %v3871
      %v3874 = vshrl.u32 %v3644, 16
      %v3876 = vshll.u32 %v3644, 16
      %v3878 = vrot.slane %v3876, 1
      %v3879 = vor.u32 %v3874, %v3878
      %v3881 = vshll.u32 %v3692, 16
      %v3883 = vrot.slane %v3881, 1
      %v3884 = vsel %vm402, %v3879, %v3883
      %3885 = vrot.lane.b32.xlu0 %v3704, 32
      %v3886 = vpop.permute.xlu0 %3885
      %3887 = vrot.lane.b32.xlu0 %v3716, 32
      %v3888 = vpop.permute.xlu0 %3887
      %3889 = vrot.lane.b32.xlu0 %v3728, 32
      %v3890 = vpop.permute.xlu0 %3889
      %3891 = vrot.lane.b32.xlu0 %v3740, 32
      %v3892 = vpop.permute.xlu0 %3891
      %3893 = vrot.lane.b32.xlu0 %v3752, 32
      %v3894 = vpop.permute.xlu0 %3893
      %3895 = vrot.lane.b32.xlu0 %v3764, 32
      %v3896 = vpop.permute.xlu0 %3895
      %3897 = vrot.lane.b32.xlu0 %v3776, 32
      %v3898 = vpop.permute.xlu0 %3897
      %3899 = vrot.lane.b32.xlu0 %v3788, 32
      %v3900 = vpop.permute.xlu0 %3899
      %3901 = vrot.lane.b32.xlu0 %v3800, 32
      %v3902 = vpop.permute.xlu0 %3901
      %3903 = vrot.lane.b32.xlu0 %v3812, 32
      %v3904 = vpop.permute.xlu0 %3903
      %3905 = vrot.lane.b32.xlu0 %v3824, 32
      %v3906 = vpop.permute.xlu0 %3905
      %3907 = vrot.lane.b32.xlu0 %v3836, 32
      %v3908 = vpop.permute.xlu0 %3907
      %3909 = vrot.lane.b32.xlu0 %v3848, 32
      %v3910 = vpop.permute.xlu0 %3909
      %3911 = vrot.lane.b32.xlu0 %v3860, 32
      %v3912 = vpop.permute.xlu0 %3911
      %3913 = vrot.lane.b32.xlu0 %v3872, 32
      %v3914 = vpop.permute.xlu0 %3913
      %3915 = vrot.lane.b32.xlu0 %v3884, 32
      %v3916 = vpop.permute.xlu0 %3915
      %v3949 = vunpack.c.l.b16 %v3517
      %v3950 = vunpack.c.l.b16 %v3518
      %v3951 = vunpack.c.l.b16 %v3519
      %v3952 = vunpack.c.l.b16 %v3520
      %v3953 = vunpack.c.l.b16 %v3521
      %v3954 = vunpack.c.l.b16 %v3522
      %v3955 = vunpack.c.l.b16 %v3523
      %v3956 = vunpack.c.l.b16 %v3524
      %v3957 = vunpack.c.l.b16 %v3525
      %v3958 = vunpack.c.l.b16 %v3526
      %v3959 = vunpack.c.l.b16 %v3527
      %v3960 = vunpack.c.l.b16 %v3528
      %v3961 = vunpack.c.l.b16 %v3529
      %v3962 = vunpack.c.l.b16 %v3530
      %v3963 = vunpack.c.l.b16 %v3531
      %v3964 = vunpack.c.l.b16 %v3532
      %v3965 = vunpack.c.l.b16 %v3533
      %v3966 = vunpack.c.l.b16 %v3534
      %v3967 = vunpack.c.l.b16 %v3535
      %v3968 = vunpack.c.l.b16 %v3536
      %v3969 = vunpack.c.l.b16 %v3537
      %v3970 = vunpack.c.l.b16 %v3538
      %v3971 = vunpack.c.l.b16 %v3539
      %v3972 = vunpack.c.l.b16 %v3540
      %v3973 = vunpack.c.l.b16 %v3541
      %v3974 = vunpack.c.l.b16 %v3542
      %v3975 = vunpack.c.l.b16 %v3543
      %v3976 = vunpack.c.l.b16 %v3544
      %v3977 = vunpack.c.l.b16 %v3545
      %v3978 = vunpack.c.l.b16 %v3546
      %v3979 = vunpack.c.l.b16 %v3547
      %v3980 = vunpack.c.l.b16 %v3548
      %v3981 = vpack.c.b16 %v3950, %v3949
      %v3982 = vpack.c.b16 %v3952, %v3951
      %v3983 = vpack.c.b16 %v3954, %v3953
      %v3984 = vpack.c.b16 %v3956, %v3955
      %v3985 = vpack.c.b16 %v3958, %v3957
      %v3986 = vpack.c.b16 %v3960, %v3959
      %v3987 = vpack.c.b16 %v3962, %v3961
      %v3988 = vpack.c.b16 %v3964, %v3963
      %v3989 = vpack.c.b16 %v3966, %v3965
      %v3990 = vpack.c.b16 %v3968, %v3967
      %v3991 = vpack.c.b16 %v3970, %v3969
      %v3992 = vpack.c.b16 %v3972, %v3971
      %v3993 = vpack.c.b16 %v3974, %v3973
      %v3994 = vpack.c.b16 %v3976, %v3975
      %v3995 = vpack.c.b16 %v3978, %v3977
      %v3996 = vpack.c.b16 %v3980, %v3979
      %3997 = vrot.lane.b32.xlu0 %v3981, 64
      %v3998 = vpop.permute.xlu0 %3997
      %3999 = vrot.lane.b32.xlu0 %v3982, 64
      %v4000 = vpop.permute.xlu0 %3999
      %4001 = vrot.lane.b32.xlu0 %v3983, 64
      %v4002 = vpop.permute.xlu0 %4001
      %4003 = vrot.lane.b32.xlu0 %v3984, 64
      %v4004 = vpop.permute.xlu0 %4003
      %4005 = vrot.lane.b32.xlu0 %v3985, 64
      %v4006 = vpop.permute.xlu0 %4005
      %4007 = vrot.lane.b32.xlu0 %v3986, 64
      %v4008 = vpop.permute.xlu0 %4007
      %4009 = vrot.lane.b32.xlu0 %v3987, 64
      %v4010 = vpop.permute.xlu0 %4009
      %4011 = vrot.lane.b32.xlu0 %v3988, 64
      %v4012 = vpop.permute.xlu0 %4011
      %4013 = vrot.lane.b32.xlu0 %v3989, 64
      %v4014 = vpop.permute.xlu0 %4013
      %4015 = vrot.lane.b32.xlu0 %v3990, 64
      %v4016 = vpop.permute.xlu0 %4015
      %4017 = vrot.lane.b32.xlu0 %v3991, 64
      %v4018 = vpop.permute.xlu0 %4017
      %4019 = vrot.lane.b32.xlu0 %v3992, 64
      %v4020 = vpop.permute.xlu0 %4019
      %4021 = vrot.lane.b32.xlu0 %v3993, 64
      %v4022 = vpop.permute.xlu0 %4021
      %4023 = vrot.lane.b32.xlu0 %v3994, 64
      %v4024 = vpop.permute.xlu0 %4023
      %4025 = vrot.lane.b32.xlu0 %v3995, 64
      %v4026 = vpop.permute.xlu0 %4025
      %4027 = vrot.lane.b32.xlu0 %v3996, 64
      %v4028 = vpop.permute.xlu0 %4027
      %v4045 = vunpack.c.l.b16 %v3549
      %v4046 = vunpack.c.l.b16 %v3550
      %v4047 = vunpack.c.l.b16 %v3551
      %v4048 = vunpack.c.l.b16 %v3552
      %v4049 = vunpack.c.l.b16 %v3553
      %v4050 = vunpack.c.l.b16 %v3554
      %v4051 = vunpack.c.l.b16 %v3555
      %v4052 = vunpack.c.l.b16 %v3556
      %v4053 = vunpack.c.l.b16 %v3557
      %v4054 = vunpack.c.l.b16 %v3558
      %v4055 = vunpack.c.l.b16 %v3559
      %v4056 = vunpack.c.l.b16 %v3560
      %v4057 = vunpack.c.l.b16 %v3561
      %v4058 = vunpack.c.l.b16 %v3562
      %v4059 = vunpack.c.l.b16 %v3563
      %v4060 = vunpack.c.l.b16 %v3564
      %v4061 = vpack.c.b16 %v4045, %v4045
      %v4062 = vpack.c.b16 %v4046, %v4046
      %v4063 = vpack.c.b16 %v4047, %v4047
      %v4064 = vpack.c.b16 %v4048, %v4048
      %v4065 = vpack.c.b16 %v4049, %v4049
      %v4066 = vpack.c.b16 %v4050, %v4050
      %v4067 = vpack.c.b16 %v4051, %v4051
      %v4068 = vpack.c.b16 %v4052, %v4052
      %v4069 = vpack.c.b16 %v4053, %v4053
      %v4070 = vpack.c.b16 %v4054, %v4054
      %v4071 = vpack.c.b16 %v4055, %v4055
      %v4072 = vpack.c.b16 %v4056, %v4056
      %v4073 = vpack.c.b16 %v4057, %v4057
      %v4074 = vpack.c.b16 %v4058, %v4058
      %v4075 = vpack.c.b16 %v4059, %v4059
      %v4076 = vpack.c.b16 %v4060, %v4060
      %v4078 = vshrl.u32 %v3981, 16
      %v4080 = vshll.u32 %v3981, 16
      %v4082 = vrot.slane %v4080, 1
      %v4083 = vor.u32 %v4078, %v4082
      %v4085 = vshll.u32 %v4061, 16
      %v4087 = vrot.slane %v4085, 1
      %v4088 = vsel %vm402, %v4083, %v4087
      %v4090 = vshrl.u32 %v3982, 16
      %v4092 = vshll.u32 %v3982, 16
      %v4094 = vrot.slane %v4092, 1
      %v4095 = vor.u32 %v4090, %v4094
      %v4097 = vshll.u32 %v4062, 16
      %v4099 = vrot.slane %v4097, 1
      %v4100 = vsel %vm402, %v4095, %v4099
      %v4102 = vshrl.u32 %v3983, 16
      %v4104 = vshll.u32 %v3983, 16
      %v4106 = vrot.slane %v4104, 1
      %v4107 = vor.u32 %v4102, %v4106
      %v4109 = vshll.u32 %v4063, 16
      %v4111 = vrot.slane %v4109, 1
      %v4112 = vsel %vm402, %v4107, %v4111
      %v4114 = vshrl.u32 %v3984, 16
      %v4116 = vshll.u32 %v3984, 16
      %v4118 = vrot.slane %v4116, 1
      %v4119 = vor.u32 %v4114, %v4118
      %v4121 = vshll.u32 %v4064, 16
      %v4123 = vrot.slane %v4121, 1
      %v4124 = vsel %vm402, %v4119, %v4123
      %v4126 = vshrl.u32 %v3985, 16
      %v4128 = vshll.u32 %v3985, 16
      %v4130 = vrot.slane %v4128, 1
      %v4131 = vor.u32 %v4126, %v4130
      %v4133 = vshll.u32 %v4065, 16
      %v4135 = vrot.slane %v4133, 1
      %v4136 = vsel %vm402, %v4131, %v4135
      %v4138 = vshrl.u32 %v3986, 16
      %v4140 = vshll.u32 %v3986, 16
      %v4142 = vrot.slane %v4140, 1
      %v4143 = vor.u32 %v4138, %v4142
      %v4145 = vshll.u32 %v4066, 16
      %v4147 = vrot.slane %v4145, 1
      %v4148 = vsel %vm402, %v4143, %v4147
      %v4150 = vshrl.u32 %v3987, 16
      %v4152 = vshll.u32 %v3987, 16
      %v4154 = vrot.slane %v4152, 1
      %v4155 = vor.u32 %v4150, %v4154
      %v4157 = vshll.u32 %v4067, 16
      %v4159 = vrot.slane %v4157, 1
      %v4160 = vsel %vm402, %v4155, %v4159
      %v4162 = vshrl.u32 %v3988, 16
      %v4164 = vshll.u32 %v3988, 16
      %v4166 = vrot.slane %v4164, 1
      %v4167 = vor.u32 %v4162, %v4166
      %v4169 = vshll.u32 %v4068, 16
      %v4171 = vrot.slane %v4169, 1
      %v4172 = vsel %vm402, %v4167, %v4171
      %v4174 = vshrl.u32 %v3989, 16
      %v4176 = vshll.u32 %v3989, 16
      %v4178 = vrot.slane %v4176, 1
      %v4179 = vor.u32 %v4174, %v4178
      %v4181 = vshll.u32 %v4069, 16
      %v4183 = vrot.slane %v4181, 1
      %v4184 = vsel %vm402, %v4179, %v4183
      %v4186 = vshrl.u32 %v3990, 16
      %v4188 = vshll.u32 %v3990, 16
      %v4190 = vrot.slane %v4188, 1
      %v4191 = vor.u32 %v4186, %v4190
      %v4193 = vshll.u32 %v4070, 16
      %v4195 = vrot.slane %v4193, 1
      %v4196 = vsel %vm402, %v4191, %v4195
      %v4198 = vshrl.u32 %v3991, 16
      %v4200 = vshll.u32 %v3991, 16
      %v4202 = vrot.slane %v4200, 1
      %v4203 = vor.u32 %v4198, %v4202
      %v4205 = vshll.u32 %v4071, 16
      %v4207 = vrot.slane %v4205, 1
      %v4208 = vsel %vm402, %v4203, %v4207
      %v4210 = vshrl.u32 %v3992, 16
      %v4212 = vshll.u32 %v3992, 16
      %v4214 = vrot.slane %v4212, 1
      %v4215 = vor.u32 %v4210, %v4214
      %v4217 = vshll.u32 %v4072, 16
      %v4219 = vrot.slane %v4217, 1
      %v4220 = vsel %vm402, %v4215, %v4219
      %v4222 = vshrl.u32 %v3993, 16
      %v4224 = vshll.u32 %v3993, 16
      %v4226 = vrot.slane %v4224, 1
      %v4227 = vor.u32 %v4222, %v4226
      %v4229 = vshll.u32 %v4073, 16
      %v4231 = vrot.slane %v4229, 1
      %v4232 = vsel %vm402, %v4227, %v4231
      %v4234 = vshrl.u32 %v3994, 16
      %v4236 = vshll.u32 %v3994, 16
      %v4238 = vrot.slane %v4236, 1
      %v4239 = vor.u32 %v4234, %v4238
      %v4241 = vshll.u32 %v4074, 16
      %v4243 = vrot.slane %v4241, 1
      %v4244 = vsel %vm402, %v4239, %v4243
      %v4246 = vshrl.u32 %v3995, 16
      %v4248 = vshll.u32 %v3995, 16
      %v4250 = vrot.slane %v4248, 1
      %v4251 = vor.u32 %v4246, %v4250
      %v4253 = vshll.u32 %v4075, 16
      %v4255 = vrot.slane %v4253, 1
      %v4256 = vsel %vm402, %v4251, %v4255
      %v4258 = vshrl.u32 %v3996, 16
      %v4260 = vshll.u32 %v3996, 16
      %v4262 = vrot.slane %v4260, 1
      %v4263 = vor.u32 %v4258, %v4262
      %v4265 = vshll.u32 %v4076, 16
      %v4267 = vrot.slane %v4265, 1
      %v4268 = vsel %vm402, %v4263, %v4267
      %4269 = vrot.lane.b32.xlu0 %v4088, 96
      %v4270 = vpop.permute.xlu0 %4269
      %4271 = vrot.lane.b32.xlu0 %v4100, 96
      %v4272 = vpop.permute.xlu0 %4271
      %4273 = vrot.lane.b32.xlu0 %v4112, 96
      %v4274 = vpop.permute.xlu0 %4273
      %4275 = vrot.lane.b32.xlu0 %v4124, 96
      %v4276 = vpop.permute.xlu0 %4275
      %4277 = vrot.lane.b32.xlu0 %v4136, 96
      %v4278 = vpop.permute.xlu0 %4277
      %4279 = vrot.lane.b32.xlu0 %v4148, 96
      %v4280 = vpop.permute.xlu0 %4279
      %4281 = vrot.lane.b32.xlu0 %v4160, 96
      %v4282 = vpop.permute.xlu0 %4281
      %4283 = vrot.lane.b32.xlu0 %v4172, 96
      %v4284 = vpop.permute.xlu0 %4283
      %4285 = vrot.lane.b32.xlu0 %v4184, 96
      %v4286 = vpop.permute.xlu0 %4285
      %4287 = vrot.lane.b32.xlu0 %v4196, 96
      %v4288 = vpop.permute.xlu0 %4287
      %4289 = vrot.lane.b32.xlu0 %v4208, 96
      %v4290 = vpop.permute.xlu0 %4289
      %4291 = vrot.lane.b32.xlu0 %v4220, 96
      %v4292 = vpop.permute.xlu0 %4291
      %4293 = vrot.lane.b32.xlu0 %v4232, 96
      %v4294 = vpop.permute.xlu0 %4293
      %4295 = vrot.lane.b32.xlu0 %v4244, 96
      %v4296 = vpop.permute.xlu0 %4295
      %4297 = vrot.lane.b32.xlu0 %v4256, 96
      %v4298 = vpop.permute.xlu0 %4297
      %4299 = vrot.lane.b32.xlu0 %v4268, 96
      %v4300 = vpop.permute.xlu0 %4299
      %v4302 = vsel %vm1011, %v3629, %v3886
      %v4304 = vsel %vm1011, %v3630, %v3888
      %v4306 = vsel %vm1011, %v3631, %v3890
      %v4308 = vsel %vm1011, %v3632, %v3892
      %v4310 = vsel %vm1011, %v3633, %v3894
      %v4312 = vsel %vm1011, %v3634, %v3896
      %v4314 = vsel %vm1011, %v3635, %v3898
      %v4316 = vsel %vm1011, %v3636, %v3900
      %v4318 = vsel %vm1011, %v3637, %v3902
      %v4320 = vsel %vm1011, %v3638, %v3904
      %v4322 = vsel %vm1011, %v3639, %v3906
      %v4324 = vsel %vm1011, %v3640, %v3908
      %v4326 = vsel %vm1011, %v3641, %v3910
      %v4328 = vsel %vm1011, %v3642, %v3912
      %v4330 = vsel %vm1011, %v3643, %v3914
      %v4332 = vsel %vm1011, %v3644, %v3916
      %v4334 = vsel %vm1044, %v4302, %v3998
      %v4336 = vsel %vm1044, %v4304, %v4000
      %v4338 = vsel %vm1044, %v4306, %v4002
      %v4340 = vsel %vm1044, %v4308, %v4004
      %v4342 = vsel %vm1044, %v4310, %v4006
      %v4344 = vsel %vm1044, %v4312, %v4008
      %v4346 = vsel %vm1044, %v4314, %v4010
      %v4348 = vsel %vm1044, %v4316, %v4012
      %v4350 = vsel %vm1044, %v4318, %v4014
      %v4352 = vsel %vm1044, %v4320, %v4016
      %v4354 = vsel %vm1044, %v4322, %v4018
      %v4356 = vsel %vm1044, %v4324, %v4020
      %v4358 = vsel %vm1044, %v4326, %v4022
      %v4360 = vsel %vm1044, %v4328, %v4024
      %v4362 = vsel %vm1044, %v4330, %v4026
      %v4364 = vsel %vm1044, %v4332, %v4028
      %v4366 = vsel %vm1077, %v4334, %v4270
      %v4369 = vsel %vm1077, %v4336, %v4272
      %v4372 = vsel %vm1077, %v4338, %v4274
      %v4375 = vsel %vm1077, %v4340, %v4276
      %v4378 = vsel %vm1077, %v4342, %v4278
      %v4381 = vsel %vm1077, %v4344, %v4280
      %v4384 = vsel %vm1077, %v4346, %v4282
      %v4387 = vsel %vm1077, %v4348, %v4284
      %v4390 = vsel %vm1077, %v4350, %v4286
      %v4393 = vsel %vm1077, %v4352, %v4288
      %v4396 = vsel %vm1077, %v4354, %v4290
      %v4399 = vsel %vm1077, %v4356, %v4292
      %v4402 = vsel %vm1077, %v4358, %v4294
      %v4405 = vsel %vm1077, %v4360, %v4296
      %v4408 = vsel %vm1077, %v4362, %v4298
      %v4411 = vsel %vm1077, %v4364, %v4300
      %s4413 = scalar_lea.vmem %s1, 128
      %v4414 = vld [vmem:[%s4413] sm:$0xf]
      %v4415 = vld [vmem:[%s4413 + $0x4] sm:$0xf]
      %v4416 = vld [vmem:[%s4413 + $0x8] sm:$0xf]
      %v4417 = vld [vmem:[%s4413 + $0xc] sm:$0xf]
      %v4418 = vld [vmem:[%s4413 + $0x10] sm:$0xf]
      %v4419 = vld [vmem:[%s4413 + $0x14] sm:$0xf]
      %v4420 = vld [vmem:[%s4413 + $0x18] sm:$0xf]
      %v4421 = vld [vmem:[%s4413 + $0x1c] sm:$0xf]
      %v4422 = vld [vmem:[%s4413 + $0x20] sm:$0xf]
      %v4423 = vld [vmem:[%s4413 + $0x24] sm:$0xf]
      %v4424 = vld [vmem:[%s4413 + $0x28] sm:$0xf]
      %v4425 = vld [vmem:[%s4413 + $0x2c] sm:$0xf]
      %v4426 = vld [vmem:[%s4413 + $0x30] sm:$0xf]
      %v4427 = vld [vmem:[%s4413 + $0x34] sm:$0xf]
      %v4428 = vld [vmem:[%s4413 + $0x38] sm:$0xf]
      %v4429 = vld [vmem:[%s4413 + $0x3c] sm:$0xf]
      %v4446 = vunpack.c.l.b16 %v4414
      %v4447 = vunpack.c.l.b16 %v4415
      %v4448 = vunpack.c.l.b16 %v4416
      %v4449 = vunpack.c.l.b16 %v4417
      %v4450 = vunpack.c.l.b16 %v4418
      %v4451 = vunpack.c.l.b16 %v4419
      %v4452 = vunpack.c.l.b16 %v4420
      %v4453 = vunpack.c.l.b16 %v4421
      %v4454 = vunpack.c.l.b16 %v4422
      %v4455 = vunpack.c.l.b16 %v4423
      %v4456 = vunpack.c.l.b16 %v4424
      %v4457 = vunpack.c.l.b16 %v4425
      %v4458 = vunpack.c.l.b16 %v4426
      %v4459 = vunpack.c.l.b16 %v4427
      %v4460 = vunpack.c.l.b16 %v4428
      %v4461 = vunpack.c.l.b16 %v4429
      %v4462 = vpack.c.b16 %v4447, %v4446
      %v4463 = vpack.c.b16 %v4449, %v4448
      %v4464 = vpack.c.b16 %v4451, %v4450
      %v4465 = vpack.c.b16 %v4453, %v4452
      %v4466 = vpack.c.b16 %v4455, %v4454
      %v4467 = vpack.c.b16 %v4457, %v4456
      %v4468 = vpack.c.b16 %v4459, %v4458
      %v4469 = vpack.c.b16 %v4461, %v4460
      %4478 = vmatprep.subr.bf16.mxu0 0
      %4479 = vmatpush1.bf16.msra.mxu0 %v4462
      %4480 = vmatprep.subr.bf16.mxu0 0
      %4481 = vmatpush1.bf16.msra.mxu0 %v4463
      %4482 = vmatprep.subr.bf16.mxu0 0
      %4483 = vmatpush1.bf16.msra.mxu0 %v4464
      %4484 = vmatprep.subr.bf16.mxu0 0
      %4485 = vmatpush1.bf16.msra.mxu0 %v4465
      %4486 = vmatprep.subr.bf16.mxu0 0
      %4487 = vmatpush1.bf16.msra.mxu0 %v4466
      %4488 = vmatprep.subr.bf16.mxu0 0
      %4489 = vmatpush1.bf16.msra.mxu0 %v4467
      %4490 = vmatprep.subr.bf16.mxu0 0
      %4491 = vmatpush1.bf16.msra.mxu0 %v4468
      %4492 = vmatprep.subr.bf16.mxu0 0
      %4493 = vmatpush1.bf16.msra.mxu0 %v4469
      %4494 = vmatprep.subr.bf16.mxu0 0
      %4495 = vmatpush1.bf16.msra.mxu0 0
      %4496 = vmatprep.subr.bf16.mxu0 0
      %4497 = vmatpush1.bf16.msra.mxu0 0
      %4498 = vmatprep.subr.bf16.mxu0 0
      %4499 = vmatpush1.bf16.msra.mxu0 0
      %4500 = vmatprep.subr.bf16.mxu0 0
      %4501 = vmatpush1.bf16.msra.mxu0 0
      %4502 = vmatprep.subr.bf16.mxu0 0
      %4503 = vmatpush1.bf16.msra.mxu0 0
      %4504 = vmatprep.subr.bf16.mxu0 0
      %4505 = vmatpush1.bf16.msra.mxu0 0
      %4506 = vmatprep.subr.bf16.mxu0 0
      %4507 = vmatpush1.bf16.msra.mxu0 0
      %4508 = vmatprep.subr.bf16.mxu0 0
      %4509 = vmatpush1.bf16.msra.mxu0 0
      %4510 = vmatprep.mubr.bf16.mxu0 0
      %4511 = vmatmul.mubr.bf16.gmra.mrb[0].mxu0 %v4366
      %v4512 = vpop.f32.mrb[0].mxu0
      %v4513 = vadd.f32 0.0, %v4512
      %v4514 = vpop.f32.mrb[0].mxu0
      %v4515 = vpop.f32.mrb[0].mxu0
      %v4516 = vadd.f32 0.0, %v4515
      %v4517 = vpop.f32.mrb[0].mxu0
      %4518 = vmatprep.mubr.bf16.mxu0 0
      %4519 = vmatmul.mubr.bf16.gmra.mrb[0].mxu0 %v4369
      %v4520 = vpop.f32.mrb[0].mxu0
      %v4521 = vadd.f32 0.0, %v4520
      %v4522 = vpop.f32.mrb[0].mxu0
      %v4523 = vpop.f32.mrb[0].mxu0
      %v4524 = vadd.f32 0.0, %v4523
      %v4525 = vpop.f32.mrb[0].mxu0
      %4526 = vmatprep.mubr.bf16.mxu0 0
      %4527 = vmatmul.mubr.bf16.gmra.mrb[0].mxu0 %v4372
      %v4528 = vpop.f32.mrb[0].mxu0
      %v4529 = vadd.f32 0.0, %v4528
      %v4530 = vpop.f32.mrb[0].mxu0
      %v4531 = vpop.f32.mrb[0].mxu0
      %v4532 = vadd.f32 0.0, %v4531
      %v4533 = vpop.f32.mrb[0].mxu0
      %4534 = vmatprep.mubr.bf16.mxu0 0
      %4535 = vmatmul.mubr.bf16.gmra.mrb[0].mxu0 %v4375
      %v4536 = vpop.f32.mrb[0].mxu0
      %v4537 = vadd.f32 0.0, %v4536
      %v4538 = vpop.f32.mrb[0].mxu0
      %v4539 = vpop.f32.mrb[0].mxu0
      %v4540 = vadd.f32 0.0, %v4539
      %v4541 = vpop.f32.mrb[0].mxu0
      %4542 = vmatprep.mubr.bf16.mxu0 0
      %4543 = vmatmul.mubr.bf16.gmra.mrb[0].mxu0 %v4378
      %v4544 = vpop.f32.mrb[0].mxu0
      %v4545 = vadd.f32 0.0, %v4544
      %v4546 = vpop.f32.mrb[0].mxu0
      %v4547 = vpop.f32.mrb[0].mxu0
      %v4548 = vadd.f32 0.0, %v4547
      %v4549 = vpop.f32.mrb[0].mxu0
      %4550 = vmatprep.mubr.bf16.mxu0 0
      %4551 = vmatmul.mubr.bf16.gmra.mrb[0].mxu0 %v4381
      %v4552 = vpop.f32.mrb[0].mxu0
      %v4553 = vadd.f32 0.0, %v4552
      %v4554 = vpop.f32.mrb[0].mxu0
      %v4555 = vpop.f32.mrb[0].mxu0
      %v4556 = vadd.f32 0.0, %v4555
      %v4557 = vpop.f32.mrb[0].mxu0
      %4558 = vmatprep.mubr.bf16.mxu0 0
      %4559 = vmatmul.mubr.bf16.gmra.mrb[0].mxu0 %v4384
      %v4560 = vpop.f32.mrb[0].mxu0
      %v4561 = vadd.f32 0.0, %v4560
      %v4562 = vpop.f32.mrb[0].mxu0
      %v4563 = vpop.f32.mrb[0].mxu0
      %v4564 = vadd.f32 0.0, %v4563
      %v4565 = vpop.f32.mrb[0].mxu0
      %4566 = vmatprep.mubr.bf16.mxu0 0
      %4567 = vmatmul.mubr.bf16.gmra.mrb[0].mxu0 %v4387
      %v4568 = vpop.f32.mrb[0].mxu0
      %v4569 = vadd.f32 0.0, %v4568
      %v4570 = vpop.f32.mrb[0].mxu0
      %v4571 = vpop.f32.mrb[0].mxu0
      %v4572 = vadd.f32 0.0, %v4571
      %v4573 = vpop.f32.mrb[0].mxu0
      %4574 = vmatprep.mubr.bf16.mxu0 0
      %4575 = vmatmul.mubr.bf16.gmra.mrb[0].mxu0 %v4390
      %v4576 = vpop.f32.mrb[0].mxu0
      %v4577 = vadd.f32 0.0, %v4576
      %v4578 = vpop.f32.mrb[0].mxu0
      %v4579 = vpop.f32.mrb[0].mxu0
      %v4580 = vadd.f32 0.0, %v4579
      %v4581 = vpop.f32.mrb[0].mxu0
      %4582 = vmatprep.mubr.bf16.mxu0 0
      %4583 = vmatmul.mubr.bf16.gmra.mrb[0].mxu0 %v4393
      %v4584 = vpop.f32.mrb[0].mxu0
      %v4585 = vadd.f32 0.0, %v4584
      %v4586 = vpop.f32.mrb[0].mxu0
      %v4587 = vpop.f32.mrb[0].mxu0
      %v4588 = vadd.f32 0.0, %v4587
      %v4589 = vpop.f32.mrb[0].mxu0
      %4590 = vmatprep.mubr.bf16.mxu0 0
      %4591 = vmatmul.mubr.bf16.gmra.mrb[0].mxu0 %v4396
      %v4592 = vpop.f32.mrb[0].mxu0
      %v4593 = vadd.f32 0.0, %v4592
      %v4594 = vpop.f32.mrb[0].mxu0
      %v4595 = vpop.f32.mrb[0].mxu0
      %v4596 = vadd.f32 0.0, %v4595
      %v4597 = vpop.f32.mrb[0].mxu0
      %4598 = vmatprep.mubr.bf16.mxu0 0
      %4599 = vmatmul.mubr.bf16.gmra.mrb[0].mxu0 %v4399
      %v4600 = vpop.f32.mrb[0].mxu0
      %v4601 = vadd.f32 0.0, %v4600
      %v4602 = vpop.f32.mrb[0].mxu0
      %v4603 = vpop.f32.mrb[0].mxu0
      %v4604 = vadd.f32 0.0, %v4603
      %v4605 = vpop.f32.mrb[0].mxu0
      %4606 = vmatprep.mubr.bf16.mxu0 0
      %4607 = vmatmul.mubr.bf16.gmra.mrb[0].mxu0 %v4402
      %v4608 = vpop.f32.mrb[0].mxu0
      %v4609 = vadd.f32 0.0, %v4608
      %v4610 = vpop.f32.mrb[0].mxu0
      %v4611 = vpop.f32.mrb[0].mxu0
      %v4612 = vadd.f32 0.0, %v4611
      %v4613 = vpop.f32.mrb[0].mxu0
      %4614 = vmatprep.mubr.bf16.mxu0 0
      %4615 = vmatmul.mubr.bf16.gmra.mrb[0].mxu0 %v4405
      %v4616 = vpop.f32.mrb[0].mxu0
      %v4617 = vadd.f32 0.0, %v4616
      %v4618 = vpop.f32.mrb[0].mxu0
      %v4619 = vpop.f32.mrb[0].mxu0
      %v4620 = vadd.f32 0.0, %v4619
      %v4621 = vpop.f32.mrb[0].mxu0
      %4622 = vmatprep.mubr.bf16.mxu0 0
      %4623 = vmatmul.mubr.bf16.gmra.mrb[0].mxu0 %v4408
      %v4624 = vpop.f32.mrb[0].mxu0
      %v4625 = vadd.f32 0.0, %v4624
      %v4626 = vpop.f32.mrb[0].mxu0
      %v4627 = vpop.f32.mrb[0].mxu0
      %v4628 = vadd.f32 0.0, %v4627
      %v4629 = vpop.f32.mrb[0].mxu0
      %4630 = vmatprep.mubr.bf16.mxu0 0
      %4631 = vmatmul.mubr.bf16.gmra.mrb[0].mxu0 %v4411
      %v4632 = vpop.f32.mrb[0].mxu0
      %v4633 = vadd.f32 0.0, %v4632
      %v4634 = vpop.f32.mrb[0].mxu0
      %v4635 = vpop.f32.mrb[0].mxu0
      %v4636 = vadd.f32 0.0, %v4635
      %v4637 = vpop.f32.mrb[0].mxu0
      %4638 = vdwg.mxu0
      %v4639 = vmax.f32 %v4513, 0.0
      %v4640 = vmax.f32 %v4516, 0.0
      %v4641 = vmax.f32 %v4521, 0.0
      %v4642 = vmax.f32 %v4524, 0.0
      %v4643 = vmax.f32 %v4529, 0.0
      %v4644 = vmax.f32 %v4532, 0.0
      %v4645 = vmax.f32 %v4537, 0.0
      %v4646 = vmax.f32 %v4540, 0.0
      %v4647 = vmax.f32 %v4545, 0.0
      %v4648 = vmax.f32 %v4548, 0.0
      %v4649 = vmax.f32 %v4553, 0.0
      %v4650 = vmax.f32 %v4556, 0.0
      %v4651 = vmax.f32 %v4561, 0.0
      %v4652 = vmax.f32 %v4564, 0.0
      %v4653 = vmax.f32 %v4569, 0.0
      %v4654 = vmax.f32 %v4572, 0.0
      %v4655 = vmax.f32 %v4577, 0.0
      %v4656 = vmax.f32 %v4580, 0.0
      %v4657 = vmax.f32 %v4585, 0.0
      %v4658 = vmax.f32 %v4588, 0.0
      %v4659 = vmax.f32 %v4593, 0.0
      %v4660 = vmax.f32 %v4596, 0.0
      %v4661 = vmax.f32 %v4601, 0.0
      %v4662 = vmax.f32 %v4604, 0.0
      %v4663 = vmax.f32 %v4609, 0.0
      %v4664 = vmax.f32 %v4612, 0.0
      %v4665 = vmax.f32 %v4617, 0.0
      %v4666 = vmax.f32 %v4620, 0.0
      %v4667 = vmax.f32 %v4625, 0.0
      %v4668 = vmax.f32 %v4628, 0.0
      %v4669 = vmax.f32 %v4633, 0.0
      %v4670 = vmax.f32 %v4636, 0.0
      %v4671 = vpack.c.bf16 %v4640, %v4639
      %v4672 = vpack.c.bf16 %v4642, %v4641
      %v4673 = vpack.c.bf16 %v4644, %v4643
      %v4674 = vpack.c.bf16 %v4646, %v4645
      %v4675 = vpack.c.bf16 %v4648, %v4647
      %v4676 = vpack.c.bf16 %v4650, %v4649
      %v4677 = vpack.c.bf16 %v4652, %v4651
      %v4678 = vpack.c.bf16 %v4654, %v4653
      %v4679 = vpack.c.bf16 %v4656, %v4655
      %v4680 = vpack.c.bf16 %v4658, %v4657
      %v4681 = vpack.c.bf16 %v4660, %v4659
      %v4682 = vpack.c.bf16 %v4662, %v4661
      %v4683 = vpack.c.bf16 %v4664, %v4663
      %v4684 = vpack.c.bf16 %v4666, %v4665
      %v4685 = vpack.c.bf16 %v4668, %v4667
      %v4686 = vpack.c.bf16 %v4670, %v4669
      %v4703 = vunpack.c.l.b16 %v4671
      %v4704 = vunpack.c.h.b16 %v4671
      %v4705 = vunpack.c.l.b16 %v4672
      %v4706 = vunpack.c.h.b16 %v4672
      %v4707 = vunpack.c.l.b16 %v4673
      %v4708 = vunpack.c.h.b16 %v4673
      %v4709 = vunpack.c.l.b16 %v4674
      %v4710 = vunpack.c.h.b16 %v4674
      %v4711 = vunpack.c.l.b16 %v4675
      %v4712 = vunpack.c.h.b16 %v4675
      %v4713 = vunpack.c.l.b16 %v4676
      %v4714 = vunpack.c.h.b16 %v4676
      %v4715 = vunpack.c.l.b16 %v4677
      %v4716 = vunpack.c.h.b16 %v4677
      %v4717 = vunpack.c.l.b16 %v4678
      %v4718 = vunpack.c.h.b16 %v4678
      %v4719 = vunpack.c.l.b16 %v4679
      %v4720 = vunpack.c.h.b16 %v4679
      %v4721 = vunpack.c.l.b16 %v4680
      %v4722 = vunpack.c.h.b16 %v4680
      %v4723 = vunpack.c.l.b16 %v4681
      %v4724 = vunpack.c.h.b16 %v4681
      %v4725 = vunpack.c.l.b16 %v4682
      %v4726 = vunpack.c.h.b16 %v4682
      %v4727 = vunpack.c.l.b16 %v4683
      %v4728 = vunpack.c.h.b16 %v4683
      %v4729 = vunpack.c.l.b16 %v4684
      %v4730 = vunpack.c.h.b16 %v4684
      %v4731 = vunpack.c.l.b16 %v4685
      %v4732 = vunpack.c.h.b16 %v4685
      %v4733 = vunpack.c.l.b16 %v4686
      %v4734 = vunpack.c.h.b16 %v4686
      %v4735 = vpack.c.b16 %v4703, %v4703
      %v4736 = vpack.c.b16 %v4704, %v4704
      %v4737 = vpack.c.b16 %v4705, %v4705
      %v4738 = vpack.c.b16 %v4706, %v4706
      %v4739 = vpack.c.b16 %v4707, %v4707
      %v4740 = vpack.c.b16 %v4708, %v4708
      %v4741 = vpack.c.b16 %v4709, %v4709
      %v4742 = vpack.c.b16 %v4710, %v4710
      %v4743 = vpack.c.b16 %v4711, %v4711
      %v4744 = vpack.c.b16 %v4712, %v4712
      %v4745 = vpack.c.b16 %v4713, %v4713
      %v4746 = vpack.c.b16 %v4714, %v4714
      %v4747 = vpack.c.b16 %v4715, %v4715
      %v4748 = vpack.c.b16 %v4716, %v4716
      %v4749 = vpack.c.b16 %v4717, %v4717
      %v4750 = vpack.c.b16 %v4718, %v4718
      %v4751 = vpack.c.b16 %v4719, %v4719
      %v4752 = vpack.c.b16 %v4720, %v4720
      %v4753 = vpack.c.b16 %v4721, %v4721
      %v4754 = vpack.c.b16 %v4722, %v4722
      %v4755 = vpack.c.b16 %v4723, %v4723
      %v4756 = vpack.c.b16 %v4724, %v4724
      %v4757 = vpack.c.b16 %v4725, %v4725
      %v4758 = vpack.c.b16 %v4726, %v4726
      %v4759 = vpack.c.b16 %v4727, %v4727
      %v4760 = vpack.c.b16 %v4728, %v4728
      %v4761 = vpack.c.b16 %v4729, %v4729
      %v4762 = vpack.c.b16 %v4730, %v4730
      %v4763 = vpack.c.b16 %v4731, %v4731
      %v4764 = vpack.c.b16 %v4732, %v4732
      %v4765 = vpack.c.b16 %v4733, %v4733
      %v4766 = vpack.c.b16 %v4734, %v4734
      %s4799 = scalar_lea.vmem %s167, 16
      %4800 = vst [vmem:[%s4799] sm:$0xf] %v4735
      %4801 = vst [vmem:[%s4799 + $0x8] sm:$0xf] %v4736
      %4802 = vst [vmem:[%s4799 + $0x20] sm:$0xf] %v4737
      %4803 = vst [vmem:[%s4799 + $0x28] sm:$0xf] %v4738
      %4804 = vst [vmem:[%s4799 + $0x40] sm:$0xf] %v4739
      %4805 = vst [vmem:[%s4799 + $0x48] sm:$0xf] %v4740
      %4806 = vst [vmem:[%s4799 + $0x60] sm:$0xf] %v4741
      %4807 = vst [vmem:[%s4799 + $0x68] sm:$0xf] %v4742
      %4808 = vst [vmem:[%s4799 + $0x80] sm:$0xf] %v4743
      %4809 = vst [vmem:[%s4799 + $0x88] sm:$0xf] %v4744
      %4810 = vst [vmem:[%s4799 + $0xa0] sm:$0xf] %v4745
      %4811 = vst [vmem:[%s4799 + $0xa8] sm:$0xf] %v4746
      %4812 = vst [vmem:[%s4799 + $0xc0] sm:$0xf] %v4747
      %4813 = vst [vmem:[%s4799 + $0xc8] sm:$0xf] %v4748
      %4814 = vst [vmem:[%s4799 + $0xe0] sm:$0xf] %v4749
      %4815 = vst [vmem:[%s4799 + $0xe8] sm:$0xf] %v4750
      %4816 = vst [vmem:[%s4799 + $0x100] sm:$0xf] %v4751
      %4817 = vst [vmem:[%s4799 + $0x108] sm:$0xf] %v4752
      %4818 = vst [vmem:[%s4799 + $0x120] sm:$0xf] %v4753
      %4819 = vst [vmem:[%s4799 + $0x128] sm:$0xf] %v4754
      %4820 = vst [vmem:[%s4799 + $0x140] sm:$0xf] %v4755
      %4821 = vst [vmem:[%s4799 + $0x148] sm:$0xf] %v4756
      %4822 = vst [vmem:[%s4799 + $0x160] sm:$0xf] %v4757
      %4823 = vst [vmem:[%s4799 + $0x168] sm:$0xf] %v4758
      %4824 = vst [vmem:[%s4799 + $0x180] sm:$0xf] %v4759
      %4825 = vst [vmem:[%s4799 + $0x188] sm:$0xf] %v4760
      %4826 = vst [vmem:[%s4799 + $0x1a0] sm:$0xf] %v4761
      %4827 = vst [vmem:[%s4799 + $0x1a8] sm:$0xf] %v4762
      %4828 = vst [vmem:[%s4799 + $0x1c0] sm:$0xf] %v4763
      %4829 = vst [vmem:[%s4799 + $0x1c8] sm:$0xf] %v4764
      %4830 = vst [vmem:[%s4799 + $0x1e0] sm:$0xf] %v4765
      %4831 = vst [vmem:[%s4799 + $0x1e8] sm:$0xf] %v4766
      %v4832 = vld [vmem:[%s225] sm:$0xf]
      %v4833 = vld [vmem:[%s225 + $0x4] sm:$0xf]
      %v4834 = vld [vmem:[%s225 + $0x8] sm:$0x1]
      %v4835 = vld [vmem:[%s225 + $0xc] sm:$0xf]
      %v4836 = vld [vmem:[%s225 + $0x10] sm:$0xf]
      %v4837 = vld [vmem:[%s225 + $0x14] sm:$0x1]
      %v4838 = vld [vmem:[%s225 + $0x18] sm:$0xf]
      %v4839 = vld [vmem:[%s225 + $0x1c] sm:$0xf]
      %v4840 = vld [vmem:[%s225 + $0x20] sm:$0x1]
      %v4841 = vld [vmem:[%s225 + $0x24] sm:$0xf]
      %v4842 = vld [vmem:[%s225 + $0x28] sm:$0xf]
      %v4843 = vld [vmem:[%s225 + $0x2c] sm:$0x1]
      %v4844 = vld [vmem:[%s225 + $0x30] sm:$0xf]
      %v4845 = vld [vmem:[%s225 + $0x34] sm:$0xf]
      %v4846 = vld [vmem:[%s225 + $0x38] sm:$0x1]
      %v4847 = vld [vmem:[%s225 + $0x3c] sm:$0xf]
      %v4848 = vld [vmem:[%s225 + $0x40] sm:$0xf]
      %v4849 = vld [vmem:[%s225 + $0x44] sm:$0x1]
      %v4850 = vld [vmem:[%s225 + $0x48] sm:$0xf]
      %v4851 = vld [vmem:[%s225 + $0x4c] sm:$0xf]
      %v4852 = vld [vmem:[%s225 + $0x50] sm:$0x1]
      %v4853 = vld [vmem:[%s225 + $0x54] sm:$0xf]
      %v4854 = vld [vmem:[%s225 + $0x58] sm:$0xf]
      %v4855 = vld [vmem:[%s225 + $0x5c] sm:$0x1]
      %v4856 = vld [vmem:[%s225 + $0x60] sm:$0xf]
      %v4857 = vld [vmem:[%s225 + $0x64] sm:$0xf]
      %v4858 = vld [vmem:[%s225 + $0x68] sm:$0x1]
      %v4859 = vld [vmem:[%s225 + $0x6c] sm:$0xf]
      %v4860 = vld [vmem:[%s225 + $0x70] sm:$0xf]
      %v4861 = vld [vmem:[%s225 + $0x74] sm:$0x1]
      %v4862 = vld [vmem:[%s225 + $0x78] sm:$0xf]
      %v4863 = vld [vmem:[%s225 + $0x7c] sm:$0xf]
      %v4864 = vld [vmem:[%s225 + $0x80] sm:$0x1]
      %v4865 = vld [vmem:[%s225 + $0x84] sm:$0xf]
      %v4866 = vld [vmem:[%s225 + $0x88] sm:$0xf]
      %v4867 = vld [vmem:[%s225 + $0x8c] sm:$0x1]
      %v4868 = vld [vmem:[%s225 + $0x90] sm:$0xf]
      %v4869 = vld [vmem:[%s225 + $0x94] sm:$0xf]
      %v4870 = vld [vmem:[%s225 + $0x98] sm:$0x1]
      %v4871 = vld [vmem:[%s225 + $0x9c] sm:$0xf]
      %v4872 = vld [vmem:[%s225 + $0xa0] sm:$0xf]
      %v4873 = vld [vmem:[%s225 + $0xa4] sm:$0x1]
      %v4874 = vld [vmem:[%s225 + $0xa8] sm:$0xf]
      %v4875 = vld [vmem:[%s225 + $0xac] sm:$0xf]
      %v4876 = vld [vmem:[%s225 + $0xb0] sm:$0x1]
      %v4877 = vld [vmem:[%s225 + $0xb4] sm:$0xf]
      %v4878 = vld [vmem:[%s225 + $0xb8] sm:$0xf]
      %v4879 = vld [vmem:[%s225 + $0xbc] sm:$0x1]
      %v4880 = vld [vmem:[%s225] sm:$0xe]
      %v4881 = vld [vmem:[%s225 + $0xc] sm:$0xe]
      %v4882 = vld [vmem:[%s225 + $0x18] sm:$0xe]
      %v4883 = vld [vmem:[%s225 + $0x24] sm:$0xe]
      %v4884 = vld [vmem:[%s225 + $0x30] sm:$0xe]
      %v4885 = vld [vmem:[%s225 + $0x3c] sm:$0xe]
      %v4886 = vld [vmem:[%s225 + $0x48] sm:$0xe]
      %v4887 = vld [vmem:[%s225 + $0x54] sm:$0xe]
      %v4888 = vld [vmem:[%s225 + $0x60] sm:$0xe]
      %v4889 = vld [vmem:[%s225 + $0x6c] sm:$0xe]
      %v4890 = vld [vmem:[%s225 + $0x78] sm:$0xe]
      %v4891 = vld [vmem:[%s225 + $0x84] sm:$0xe]
      %v4892 = vld [vmem:[%s225 + $0x90] sm:$0xe]
      %v4893 = vld [vmem:[%s225 + $0x9c] sm:$0xe]
      %v4894 = vld [vmem:[%s225 + $0xa8] sm:$0xe]
      %v4895 = vld [vmem:[%s225 + $0xb4] sm:$0xe]
      %v4896 = vld [vmem:[%s3516] sm:$0xf]
      %v4897 = vld [vmem:[%s3516 + $0x4] sm:$0xf]
      %v4898 = vld [vmem:[%s3516 + $0x8] sm:$0x1]
      %v4899 = vld [vmem:[%s3516 + $0xc] sm:$0xf]
      %v4900 = vld [vmem:[%s3516 + $0x10] sm:$0xf]
      %v4901 = vld [vmem:[%s3516 + $0x14] sm:$0x1]
      %v4902 = vld [vmem:[%s3516 + $0x18] sm:$0xf]
      %v4903 = vld [vmem:[%s3516 + $0x1c] sm:$0xf]
      %v4904 = vld [vmem:[%s3516 + $0x20] sm:$0x1]
      %v4905 = vld [vmem:[%s3516 + $0x24] sm:$0xf]
      %v4906 = vld [vmem:[%s3516 + $0x28] sm:$0xf]
      %v4907 = vld [vmem:[%s3516 + $0x2c] sm:$0x1]
      %v4908 = vld [vmem:[%s3516 + $0x30] sm:$0xf]
      %v4909 = vld [vmem:[%s3516 + $0x34] sm:$0xf]
      %v4910 = vld [vmem:[%s3516 + $0x38] sm:$0x1]
      %v4911 = vld [vmem:[%s3516 + $0x3c] sm:$0xf]
      %v4912 = vld [vmem:[%s3516 + $0x40] sm:$0xf]
      %v4913 = vld [vmem:[%s3516 + $0x44] sm:$0x1]
      %v4914 = vld [vmem:[%s3516 + $0x48] sm:$0xf]
      %v4915 = vld [vmem:[%s3516 + $0x4c] sm:$0xf]
      %v4916 = vld [vmem:[%s3516 + $0x50] sm:$0x1]
      %v4917 = vld [vmem:[%s3516 + $0x54] sm:$0xf]
      %v4918 = vld [vmem:[%s3516 + $0x58] sm:$0xf]
      %v4919 = vld [vmem:[%s3516 + $0x5c] sm:$0x1]
      %v4920 = vld [vmem:[%s3516 + $0x60] sm:$0xf]
      %v4921 = vld [vmem:[%s3516 + $0x64] sm:$0xf]
      %v4922 = vld [vmem:[%s3516 + $0x68] sm:$0x1]
      %v4923 = vld [vmem:[%s3516 + $0x6c] sm:$0xf]
      %v4924 = vld [vmem:[%s3516 + $0x70] sm:$0xf]
      %v4925 = vld [vmem:[%s3516 + $0x74] sm:$0x1]
      %v4926 = vld [vmem:[%s3516 + $0x78] sm:$0xf]
      %v4927 = vld [vmem:[%s3516 + $0x7c] sm:$0xf]
      %v4928 = vld [vmem:[%s3516 + $0x80] sm:$0x1]
      %v4929 = vld [vmem:[%s3516 + $0x84] sm:$0xf]
      %v4930 = vld [vmem:[%s3516 + $0x88] sm:$0xf]
      %v4931 = vld [vmem:[%s3516 + $0x8c] sm:$0x1]
      %v4932 = vld [vmem:[%s3516 + $0x90] sm:$0xf]
      %v4933 = vld [vmem:[%s3516 + $0x94] sm:$0xf]
      %v4934 = vld [vmem:[%s3516 + $0x98] sm:$0x1]
      %v4935 = vld [vmem:[%s3516 + $0x9c] sm:$0xf]
      %v4936 = vld [vmem:[%s3516 + $0xa0] sm:$0xf]
      %v4937 = vld [vmem:[%s3516 + $0xa4] sm:$0x1]
      %v4938 = vld [vmem:[%s3516 + $0xa8] sm:$0xf]
      %v4939 = vld [vmem:[%s3516 + $0xac] sm:$0xf]
      %v4940 = vld [vmem:[%s3516 + $0xb0] sm:$0x1]
      %v4941 = vld [vmem:[%s3516 + $0xb4] sm:$0xf]
      %v4942 = vld [vmem:[%s3516 + $0xb8] sm:$0xf]
      %v4943 = vld [vmem:[%s3516 + $0xbc] sm:$0x1]
      %v4944 = vld [vmem:[%s3516] sm:$0xe]
      %v4945 = vld [vmem:[%s3516 + $0xc] sm:$0xe]
      %v4946 = vld [vmem:[%s3516 + $0x18] sm:$0xe]
      %v4947 = vld [vmem:[%s3516 + $0x24] sm:$0xe]
      %v4948 = vld [vmem:[%s3516 + $0x30] sm:$0xe]
      %v4949 = vld [vmem:[%s3516 + $0x3c] sm:$0xe]
      %v4950 = vld [vmem:[%s3516 + $0x48] sm:$0xe]
      %v4951 = vld [vmem:[%s3516 + $0x54] sm:$0xe]
      %v4952 = vld [vmem:[%s3516 + $0x60] sm:$0xe]
      %v4953 = vld [vmem:[%s3516 + $0x6c] sm:$0xe]
      %v4954 = vld [vmem:[%s3516 + $0x78] sm:$0xe]
      %v4955 = vld [vmem:[%s3516 + $0x84] sm:$0xe]
      %v4956 = vld [vmem:[%s3516 + $0x90] sm:$0xe]
      %v4957 = vld [vmem:[%s3516 + $0x9c] sm:$0xe]
      %v4958 = vld [vmem:[%s3516 + $0xa8] sm:$0xe]
      %v4959 = vld [vmem:[%s3516 + $0xb4] sm:$0xe]
      %v5008 = vunpack.c.l.b16 %v4832
      %v5009 = vunpack.c.l.b16 %v4833
      %v5010 = vunpack.c.l.b16 %v4834
      %v5011 = vunpack.c.l.b16 %v4835
      %v5012 = vunpack.c.l.b16 %v4836
      %v5013 = vunpack.c.l.b16 %v4837
      %v5014 = vunpack.c.l.b16 %v4838
      %v5015 = vunpack.c.l.b16 %v4839
      %v5016 = vunpack.c.l.b16 %v4840
      %v5017 = vunpack.c.l.b16 %v4841
      %v5018 = vunpack.c.l.b16 %v4842
      %v5019 = vunpack.c.l.b16 %v4843
      %v5020 = vunpack.c.l.b16 %v4844
      %v5021 = vunpack.c.l.b16 %v4845
      %v5022 = vunpack.c.l.b16 %v4846
      %v5023 = vunpack.c.l.b16 %v4847
      %v5024 = vunpack.c.l.b16 %v4848
      %v5025 = vunpack.c.l.b16 %v4849
      %v5026 = vunpack.c.l.b16 %v4850
      %v5027 = vunpack.c.l.b16 %v4851
      %v5028 = vunpack.c.l.b16 %v4852
      %v5029 = vunpack.c.l.b16 %v4853
      %v5030 = vunpack.c.l.b16 %v4854
      %v5031 = vunpack.c.l.b16 %v4855
      %v5032 = vunpack.c.l.b16 %v4856
      %v5033 = vunpack.c.l.b16 %v4857
      %v5034 = vunpack.c.l.b16 %v4858
      %v5035 = vunpack.c.l.b16 %v4859
      %v5036 = vunpack.c.l.b16 %v4860
      %v5037 = vunpack.c.l.b16 %v4861
      %v5038 = vunpack.c.l.b16 %v4862
      %v5039 = vunpack.c.l.b16 %v4863
      %v5040 = vunpack.c.l.b16 %v4864
      %v5041 = vunpack.c.l.b16 %v4865
      %v5042 = vunpack.c.l.b16 %v4866
      %v5043 = vunpack.c.l.b16 %v4867
      %v5044 = vunpack.c.l.b16 %v4868
      %v5045 = vunpack.c.l.b16 %v4869
      %v5046 = vunpack.c.l.b16 %v4870
      %v5047 = vunpack.c.l.b16 %v4871
      %v5048 = vunpack.c.l.b16 %v4872
      %v5049 = vunpack.c.l.b16 %v4873
      %v5050 = vunpack.c.l.b16 %v4874
      %v5051 = vunpack.c.l.b16 %v4875
      %v5052 = vunpack.c.l.b16 %v4876
      %v5053 = vunpack.c.l.b16 %v4877
      %v5054 = vunpack.c.l.b16 %v4878
      %v5055 = vunpack.c.l.b16 %v4879
      %v5056 = vpack.c.b16 %v5009, %v5008
      %v5057 = vpack.c.b16 %v5010, %v5010
      %v5058 = vpack.c.b16 %v5012, %v5011
      %v5059 = vpack.c.b16 %v5013, %v5013
      %v5060 = vpack.c.b16 %v5015, %v5014
      %v5061 = vpack.c.b16 %v5016, %v5016
      %v5062 = vpack.c.b16 %v5018, %v5017
      %v5063 = vpack.c.b16 %v5019, %v5019
      %v5064 = vpack.c.b16 %v5021, %v5020
      %v5065 = vpack.c.b16 %v5022, %v5022
      %v5066 = vpack.c.b16 %v5024, %v5023
      %v5067 = vpack.c.b16 %v5025, %v5025
      %v5068 = vpack.c.b16 %v5027, %v5026
      %v5069 = vpack.c.b16 %v5028, %v5028
      %v5070 = vpack.c.b16 %v5030, %v5029
      %v5071 = vpack.c.b16 %v5031, %v5031
      %v5072 = vpack.c.b16 %v5033, %v5032
      %v5073 = vpack.c.b16 %v5034, %v5034
      %v5074 = vpack.c.b16 %v5036, %v5035
      %v5075 = vpack.c.b16 %v5037, %v5037
      %v5076 = vpack.c.b16 %v5039, %v5038
      %v5077 = vpack.c.b16 %v5040, %v5040
      %v5078 = vpack.c.b16 %v5042, %v5041
      %v5079 = vpack.c.b16 %v5043, %v5043
      %v5080 = vpack.c.b16 %v5045, %v5044
      %v5081 = vpack.c.b16 %v5046, %v5046
      %v5082 = vpack.c.b16 %v5048, %v5047
      %v5083 = vpack.c.b16 %v5049, %v5049
      %v5084 = vpack.c.b16 %v5051, %v5050
      %v5085 = vpack.c.b16 %v5052, %v5052
      %v5086 = vpack.c.b16 %v5054, %v5053
      %v5087 = vpack.c.b16 %v5055, %v5055
      %v5104 = vunpack.c.l.b16 %v4880
      %v5105 = vunpack.c.l.b16 %v4881
      %v5106 = vunpack.c.l.b16 %v4882
      %v5107 = vunpack.c.l.b16 %v4883
      %v5108 = vunpack.c.l.b16 %v4884
      %v5109 = vunpack.c.l.b16 %v4885
      %v5110 = vunpack.c.l.b16 %v4886
      %v5111 = vunpack.c.l.b16 %v4887
      %v5112 = vunpack.c.l.b16 %v4888
      %v5113 = vunpack.c.l.b16 %v4889
      %v5114 = vunpack.c.l.b16 %v4890
      %v5115 = vunpack.c.l.b16 %v4891
      %v5116 = vunpack.c.l.b16 %v4892
      %v5117 = vunpack.c.l.b16 %v4893
      %v5118 = vunpack.c.l.b16 %v4894
      %v5119 = vunpack.c.l.b16 %v4895
      %v5120 = vpack.c.b16 %v5009, %v5104
      %v5121 = vpack.c.b16 %v5012, %v5105
      %v5122 = vpack.c.b16 %v5015, %v5106
      %v5123 = vpack.c.b16 %v5018, %v5107
      %v5124 = vpack.c.b16 %v5021, %v5108
      %v5125 = vpack.c.b16 %v5024, %v5109
      %v5126 = vpack.c.b16 %v5027, %v5110
      %v5127 = vpack.c.b16 %v5030, %v5111
      %v5128 = vpack.c.b16 %v5033, %v5112
      %v5129 = vpack.c.b16 %v5036, %v5113
      %v5130 = vpack.c.b16 %v5039, %v5114
      %v5131 = vpack.c.b16 %v5042, %v5115
      %v5132 = vpack.c.b16 %v5045, %v5116
      %v5133 = vpack.c.b16 %v5048, %v5117
      %v5134 = vpack.c.b16 %v5051, %v5118
      %v5135 = vpack.c.b16 %v5054, %v5119
      %v5137 = vshrl.u32 %v5120, 16
      %v5139 = vshll.u32 %v5120, 16
      %v5141 = vrot.slane %v5139, 1
      %v5142 = vor.u32 %v5137, %v5141
      %v5144 = vshll.u32 %v5057, 16
      %v5146 = vrot.slane %v5144, 1
      %v5147 = vsel %vm402, %v5142, %v5146
      %v5148 = vshrl.u32 %v5057, 16
      %v5151 = vshrl.u32 %v5121, 16
      %v5153 = vshll.u32 %v5121, 16
      %v5155 = vrot.slane %v5153, 1
      %v5156 = vor.u32 %v5151, %v5155
      %v5158 = vshll.u32 %v5059, 16
      %v5160 = vrot.slane %v5158, 1
      %v5161 = vsel %vm402, %v5156, %v5160
      %v5162 = vshrl.u32 %v5059, 16
      %v5165 = vshrl.u32 %v5122, 16
      %v5167 = vshll.u32 %v5122, 16
      %v5169 = vrot.slane %v5167, 1
      %v5170 = vor.u32 %v5165, %v5169
      %v5172 = vshll.u32 %v5061, 16
      %v5174 = vrot.slane %v5172, 1
      %v5175 = vsel %vm402, %v5170, %v5174
      %v5176 = vshrl.u32 %v5061, 16
      %v5179 = vshrl.u32 %v5123, 16
      %v5181 = vshll.u32 %v5123, 16
      %v5183 = vrot.slane %v5181, 1
      %v5184 = vor.u32 %v5179, %v5183
      %v5186 = vshll.u32 %v5063, 16
      %v5188 = vrot.slane %v5186, 1
      %v5189 = vsel %vm402, %v5184, %v5188
      %v5190 = vshrl.u32 %v5063, 16
      %v5193 = vshrl.u32 %v5124, 16
      %v5195 = vshll.u32 %v5124, 16
      %v5197 = vrot.slane %v5195, 1
      %v5198 = vor.u32 %v5193, %v5197
      %v5200 = vshll.u32 %v5065, 16
      %v5202 = vrot.slane %v5200, 1
      %v5203 = vsel %vm402, %v5198, %v5202
      %v5204 = vshrl.u32 %v5065, 16
      %v5207 = vshrl.u32 %v5125, 16
      %v5209 = vshll.u32 %v5125, 16
      %v5211 = vrot.slane %v5209, 1
      %v5212 = vor.u32 %v5207, %v5211
      %v5214 = vshll.u32 %v5067, 16
      %v5216 = vrot.slane %v5214, 1
      %v5217 = vsel %vm402, %v5212, %v5216
      %v5218 = vshrl.u32 %v5067, 16
      %v5221 = vshrl.u32 %v5126, 16
      %v5223 = vshll.u32 %v5126, 16
      %v5225 = vrot.slane %v5223, 1
      %v5226 = vor.u32 %v5221, %v5225
      %v5228 = vshll.u32 %v5069, 16
      %v5230 = vrot.slane %v5228, 1
      %v5231 = vsel %vm402, %v5226, %v5230
      %v5232 = vshrl.u32 %v5069, 16
      %v5235 = vshrl.u32 %v5127, 16
      %v5237 = vshll.u32 %v5127, 16
      %v5239 = vrot.slane %v5237, 1
      %v5240 = vor.u32 %v5235, %v5239
      %v5242 = vshll.u32 %v5071, 16
      %v5244 = vrot.slane %v5242, 1
      %v5245 = vsel %vm402, %v5240, %v5244
      %v5246 = vshrl.u32 %v5071, 16
      %v5249 = vshrl.u32 %v5128, 16
      %v5251 = vshll.u32 %v5128, 16
      %v5253 = vrot.slane %v5251, 1
      %v5254 = vor.u32 %v5249, %v5253
      %v5256 = vshll.u32 %v5073, 16
      %v5258 = vrot.slane %v5256, 1
      %v5259 = vsel %vm402, %v5254, %v5258
      %v5260 = vshrl.u32 %v5073, 16
      %v5263 = vshrl.u32 %v5129, 16
      %v5265 = vshll.u32 %v5129, 16
      %v5267 = vrot.slane %v5265, 1
      %v5268 = vor.u32 %v5263, %v5267
      %v5270 = vshll.u32 %v5075, 16
      %v5272 = vrot.slane %v5270, 1
      %v5273 = vsel %vm402, %v5268, %v5272
      %v5274 = vshrl.u32 %v5075, 16
      %v5277 = vshrl.u32 %v5130, 16
      %v5279 = vshll.u32 %v5130, 16
      %v5281 = vrot.slane %v5279, 1
      %v5282 = vor.u32 %v5277, %v5281
      %v5284 = vshll.u32 %v5077, 16
      %v5286 = vrot.slane %v5284, 1
      %v5287 = vsel %vm402, %v5282, %v5286
      %v5288 = vshrl.u32 %v5077, 16
      %v5291 = vshrl.u32 %v5131, 16
      %v5293 = vshll.u32 %v5131, 16
      %v5295 = vrot.slane %v5293, 1
      %v5296 = vor.u32 %v5291, %v5295
      %v5298 = vshll.u32 %v5079, 16
      %v5300 = vrot.slane %v5298, 1
      %v5301 = vsel %vm402, %v5296, %v5300
      %v5302 = vshrl.u32 %v5079, 16
      %v5305 = vshrl.u32 %v5132, 16
      %v5307 = vshll.u32 %v5132, 16
      %v5309 = vrot.slane %v5307, 1
      %v5310 = vor.u32 %v5305, %v5309
      %v5312 = vshll.u32 %v5081, 16
      %v5314 = vrot.slane %v5312, 1
      %v5315 = vsel %vm402, %v5310, %v5314
      %v5316 = vshrl.u32 %v5081, 16
      %v5319 = vshrl.u32 %v5133, 16
      %v5321 = vshll.u32 %v5133, 16
      %v5323 = vrot.slane %v5321, 1
      %v5324 = vor.u32 %v5319, %v5323
      %v5326 = vshll.u32 %v5083, 16
      %v5328 = vrot.slane %v5326, 1
      %v5329 = vsel %vm402, %v5324, %v5328
      %v5330 = vshrl.u32 %v5083, 16
      %v5333 = vshrl.u32 %v5134, 16
      %v5335 = vshll.u32 %v5134, 16
      %v5337 = vrot.slane %v5335, 1
      %v5338 = vor.u32 %v5333, %v5337
      %v5340 = vshll.u32 %v5085, 16
      %v5342 = vrot.slane %v5340, 1
      %v5343 = vsel %vm402, %v5338, %v5342
      %v5344 = vshrl.u32 %v5085, 16
      %v5347 = vshrl.u32 %v5135, 16
      %v5349 = vshll.u32 %v5135, 16
      %v5351 = vrot.slane %v5349, 1
      %v5352 = vor.u32 %v5347, %v5351
      %v5354 = vshll.u32 %v5087, 16
      %v5356 = vrot.slane %v5354, 1
      %v5357 = vsel %vm402, %v5352, %v5356
      %v5358 = vshrl.u32 %v5087, 16
      %5360 = vrot.lane.b32.xlu0 %v5147, 32
      %v5361 = vpop.permute.xlu0 %5360
      %5362 = vrot.lane.b32.xlu0 %v5148, 32
      %v5363 = vpop.permute.xlu0 %5362
      %5364 = vrot.lane.b32.xlu0 %v5161, 32
      %v5365 = vpop.permute.xlu0 %5364
      %5366 = vrot.lane.b32.xlu0 %v5162, 32
      %v5367 = vpop.permute.xlu0 %5366
      %5368 = vrot.lane.b32.xlu0 %v5175, 32
      %v5369 = vpop.permute.xlu0 %5368
      %5370 = vrot.lane.b32.xlu0 %v5176, 32
      %v5371 = vpop.permute.xlu0 %5370
      %5372 = vrot.lane.b32.xlu0 %v5189, 32
      %v5373 = vpop.permute.xlu0 %5372
      %5374 = vrot.lane.b32.xlu0 %v5190, 32
      %v5375 = vpop.permute.xlu0 %5374
      %5376 = vrot.lane.b32.xlu0 %v5203, 32
      %v5377 = vpop.permute.xlu0 %5376
      %5378 = vrot.lane.b32.xlu0 %v5204, 32
      %v5379 = vpop.permute.xlu0 %5378
      %5380 = vrot.lane.b32.xlu0 %v5217, 32
      %v5381 = vpop.permute.xlu0 %5380
      %5382 = vrot.lane.b32.xlu0 %v5218, 32
      %v5383 = vpop.permute.xlu0 %5382
      %5384 = vrot.lane.b32.xlu0 %v5231, 32
      %v5385 = vpop.permute.xlu0 %5384
      %5386 = vrot.lane.b32.xlu0 %v5232, 32
      %v5387 = vpop.permute.xlu0 %5386
      %5388 = vrot.lane.b32.xlu0 %v5245, 32
      %v5389 = vpop.permute.xlu0 %5388
      %5390 = vrot.lane.b32.xlu0 %v5246, 32
      %v5391 = vpop.permute.xlu0 %5390
      %5392 = vrot.lane.b32.xlu0 %v5259, 32
      %v5393 = vpop.permute.xlu0 %5392
      %5394 = vrot.lane.b32.xlu0 %v5260, 32
      %v5395 = vpop.permute.xlu0 %5394
      %5396 = vrot.lane.b32.xlu0 %v5273, 32
      %v5397 = vpop.permute.xlu0 %5396
      %5398 = vrot.lane.b32.xlu0 %v5274, 32
      %v5399 = vpop.permute.xlu0 %5398
      %5400 = vrot.lane.b32.xlu0 %v5287, 32
      %v5401 = vpop.permute.xlu0 %5400
      %5402 = vrot.lane.b32.xlu0 %v5288, 32
      %v5403 = vpop.permute.xlu0 %5402
      %5404 = vrot.lane.b32.xlu0 %v5301, 32
      %v5405 = vpop.permute.xlu0 %5404
      %5406 = vrot.lane.b32.xlu0 %v5302, 32
      %v5407 = vpop.permute.xlu0 %5406
      %5408 = vrot.lane.b32.xlu0 %v5315, 32
      %v5409 = vpop.permute.xlu0 %5408
      %5410 = vrot.lane.b32.xlu0 %v5316, 32
      %v5411 = vpop.permute.xlu0 %5410
      %5412 = vrot.lane.b32.xlu0 %v5329, 32
      %v5413 = vpop.permute.xlu0 %5412
      %5414 = vrot.lane.b32.xlu0 %v5330, 32
      %v5415 = vpop.permute.xlu0 %5414
      %5416 = vrot.lane.b32.xlu0 %v5343, 32
      %v5417 = vpop.permute.xlu0 %5416
      %5418 = vrot.lane.b32.xlu0 %v5344, 32
      %v5419 = vpop.permute.xlu0 %5418
      %5420 = vrot.lane.b32.xlu0 %v5357, 32
      %v5421 = vpop.permute.xlu0 %5420
      %5422 = vrot.lane.b32.xlu0 %v5358, 32
      %v5423 = vpop.permute.xlu0 %5422
      %v5472 = vunpack.c.l.b16 %v4896
      %v5473 = vunpack.c.l.b16 %v4897
      %v5474 = vunpack.c.l.b16 %v4898
      %v5475 = vunpack.c.l.b16 %v4899
      %v5476 = vunpack.c.l.b16 %v4900
      %v5477 = vunpack.c.l.b16 %v4901
      %v5478 = vunpack.c.l.b16 %v4902
      %v5479 = vunpack.c.l.b16 %v4903
      %v5480 = vunpack.c.l.b16 %v4904
      %v5481 = vunpack.c.l.b16 %v4905
      %v5482 = vunpack.c.l.b16 %v4906
      %v5483 = vunpack.c.l.b16 %v4907
      %v5484 = vunpack.c.l.b16 %v4908
      %v5485 = vunpack.c.l.b16 %v4909
      %v5486 = vunpack.c.l.b16 %v4910
      %v5487 = vunpack.c.l.b16 %v4911
      %v5488 = vunpack.c.l.b16 %v4912
      %v5489 = vunpack.c.l.b16 %v4913
      %v5490 = vunpack.c.l.b16 %v4914
      %v5491 = vunpack.c.l.b16 %v4915
      %v5492 = vunpack.c.l.b16 %v4916
      %v5493 = vunpack.c.l.b16 %v4917
      %v5494 = vunpack.c.l.b16 %v4918
      %v5495 = vunpack.c.l.b16 %v4919
      %v5496 = vunpack.c.l.b16 %v4920
      %v5497 = vunpack.c.l.b16 %v4921
      %v5498 = vunpack.c.l.b16 %v4922
      %v5499 = vunpack.c.l.b16 %v4923
      %v5500 = vunpack.c.l.b16 %v4924
      %v5501 = vunpack.c.l.b16 %v4925
      %v5502 = vunpack.c.l.b16 %v4926
      %v5503 = vunpack.c.l.b16 %v4927
      %v5504 = vunpack.c.l.b16 %v4928
      %v5505 = vunpack.c.l.b16 %v4929
      %v5506 = vunpack.c.l.b16 %v4930
      %v5507 = vunpack.c.l.b16 %v4931
      %v5508 = vunpack.c.l.b16 %v4932
      %v5509 = vunpack.c.l.b16 %v4933
      %v5510 = vunpack.c.l.b16 %v4934
      %v5511 = vunpack.c.l.b16 %v4935
      %v5512 = vunpack.c.l.b16 %v4936
      %v5513 = vunpack.c.l.b16 %v4937
      %v5514 = vunpack.c.l.b16 %v4938
      %v5515 = vunpack.c.l.b16 %v4939
      %v5516 = vunpack.c.l.b16 %v4940
      %v5517 = vunpack.c.l.b16 %v4941
      %v5518 = vunpack.c.l.b16 %v4942
      %v5519 = vunpack.c.l.b16 %v4943
      %v5520 = vpack.c.b16 %v5473, %v5472
      %v5521 = vpack.c.b16 %v5474, %v5474
      %v5522 = vpack.c.b16 %v5476, %v5475
      %v5523 = vpack.c.b16 %v5477, %v5477
      %v5524 = vpack.c.b16 %v5479, %v5478
      %v5525 = vpack.c.b16 %v5480, %v5480
      %v5526 = vpack.c.b16 %v5482, %v5481
      %v5527 = vpack.c.b16 %v5483, %v5483
      %v5528 = vpack.c.b16 %v5485, %v5484
      %v5529 = vpack.c.b16 %v5486, %v5486
      %v5530 = vpack.c.b16 %v5488, %v5487
      %v5531 = vpack.c.b16 %v5489, %v5489
      %v5532 = vpack.c.b16 %v5491, %v5490
      %v5533 = vpack.c.b16 %v5492, %v5492
      %v5534 = vpack.c.b16 %v5494, %v5493
      %v5535 = vpack.c.b16 %v5495, %v5495
      %v5536 = vpack.c.b16 %v5497, %v5496
      %v5537 = vpack.c.b16 %v5498, %v5498
      %v5538 = vpack.c.b16 %v5500, %v5499
      %v5539 = vpack.c.b16 %v5501, %v5501
      %v5540 = vpack.c.b16 %v5503, %v5502
      %v5541 = vpack.c.b16 %v5504, %v5504
      %v5542 = vpack.c.b16 %v5506, %v5505
      %v5543 = vpack.c.b16 %v5507, %v5507
      %v5544 = vpack.c.b16 %v5509, %v5508
      %v5545 = vpack.c.b16 %v5510, %v5510
      %v5546 = vpack.c.b16 %v5512, %v5511
      %v5547 = vpack.c.b16 %v5513, %v5513
      %v5548 = vpack.c.b16 %v5515, %v5514
      %v5549 = vpack.c.b16 %v5516, %v5516
      %v5550 = vpack.c.b16 %v5518, %v5517
      %v5551 = vpack.c.b16 %v5519, %v5519
      %5552 = vrot.lane.b32.xlu0 %v5520, 64
      %v5553 = vpop.permute.xlu0 %5552
      %5554 = vrot.lane.b32.xlu0 %v5521, 64
      %v5555 = vpop.permute.xlu0 %5554
      %5556 = vrot.lane.b32.xlu0 %v5522, 64
      %v5557 = vpop.permute.xlu0 %5556
      %5558 = vrot.lane.b32.xlu0 %v5523, 64
      %v5559 = vpop.permute.xlu0 %5558
      %5560 = vrot.lane.b32.xlu0 %v5524, 64
      %v5561 = vpop.permute.xlu0 %5560
      %5562 = vrot.lane.b32.xlu0 %v5525, 64
      %v5563 = vpop.permute.xlu0 %5562
      %5564 = vrot.lane.b32.xlu0 %v5526, 64
      %v5565 = vpop.permute.xlu0 %5564
      %5566 = vrot.lane.b32.xlu0 %v5527, 64
      %v5567 = vpop.permute.xlu0 %5566
      %5568 = vrot.lane.b32.xlu0 %v5528, 64
      %v5569 = vpop.permute.xlu0 %5568
      %5570 = vrot.lane.b32.xlu0 %v5529, 64
      %v5571 = vpop.permute.xlu0 %5570
      %5572 = vrot.lane.b32.xlu0 %v5530, 64
      %v5573 = vpop.permute.xlu0 %5572
      %5574 = vrot.lane.b32.xlu0 %v5531, 64
      %v5575 = vpop.permute.xlu0 %5574
      %5576 = vrot.lane.b32.xlu0 %v5532, 64
      %v5577 = vpop.permute.xlu0 %5576
      %5578 = vrot.lane.b32.xlu0 %v5533, 64
      %v5579 = vpop.permute.xlu0 %5578
      %5580 = vrot.lane.b32.xlu0 %v5534, 64
      %v5581 = vpop.permute.xlu0 %5580
      %5582 = vrot.lane.b32.xlu0 %v5535, 64
      %v5583 = vpop.permute.xlu0 %5582
      %5584 = vrot.lane.b32.xlu0 %v5536, 64
      %v5585 = vpop.permute.xlu0 %5584
      %5586 = vrot.lane.b32.xlu0 %v5537, 64
      %v5587 = vpop.permute.xlu0 %5586
      %5588 = vrot.lane.b32.xlu0 %v5538, 64
      %v5589 = vpop.permute.xlu0 %5588
      %5590 = vrot.lane.b32.xlu0 %v5539, 64
      %v5591 = vpop.permute.xlu0 %5590
      %5592 = vrot.lane.b32.xlu0 %v5540, 64
      %v5593 = vpop.permute.xlu0 %5592
      %5594 = vrot.lane.b32.xlu0 %v5541, 64
      %v5595 = vpop.permute.xlu0 %5594
      %5596 = vrot.lane.b32.xlu0 %v5542, 64
      %v5597 = vpop.permute.xlu0 %5596
      %5598 = vrot.lane.b32.xlu0 %v5543, 64
      %v5599 = vpop.permute.xlu0 %5598
      %5600 = vrot.lane.b32.xlu0 %v5544, 64
      %v5601 = vpop.permute.xlu0 %5600
      %5602 = vrot.lane.b32.xlu0 %v5545, 64
      %v5603 = vpop.permute.xlu0 %5602
      %5604 = vrot.lane.b32.xlu0 %v5546, 64
      %v5605 = vpop.permute.xlu0 %5604
      %5606 = vrot.lane.b32.xlu0 %v5547, 64
      %v5607 = vpop.permute.xlu0 %5606
      %5608 = vrot.lane.b32.xlu0 %v5548, 64
      %v5609 = vpop.permute.xlu0 %5608
      %5610 = vrot.lane.b32.xlu0 %v5549, 64
      %v5611 = vpop.permute.xlu0 %5610
      %5612 = vrot.lane.b32.xlu0 %v5550, 64
      %v5613 = vpop.permute.xlu0 %5612
      %5614 = vrot.lane.b32.xlu0 %v5551, 64
      %v5615 = vpop.permute.xlu0 %5614
      %v5632 = vunpack.c.l.b16 %v4944
      %v5633 = vunpack.c.l.b16 %v4945
      %v5634 = vunpack.c.l.b16 %v4946
      %v5635 = vunpack.c.l.b16 %v4947
      %v5636 = vunpack.c.l.b16 %v4948
      %v5637 = vunpack.c.l.b16 %v4949
      %v5638 = vunpack.c.l.b16 %v4950
      %v5639 = vunpack.c.l.b16 %v4951
      %v5640 = vunpack.c.l.b16 %v4952
      %v5641 = vunpack.c.l.b16 %v4953
      %v5642 = vunpack.c.l.b16 %v4954
      %v5643 = vunpack.c.l.b16 %v4955
      %v5644 = vunpack.c.l.b16 %v4956
      %v5645 = vunpack.c.l.b16 %v4957
      %v5646 = vunpack.c.l.b16 %v4958
      %v5647 = vunpack.c.l.b16 %v4959
      %v5648 = vpack.c.b16 %v5473, %v5632
      %v5649 = vpack.c.b16 %v5476, %v5633
      %v5650 = vpack.c.b16 %v5479, %v5634
      %v5651 = vpack.c.b16 %v5482, %v5635
      %v5652 = vpack.c.b16 %v5485, %v5636
      %v5653 = vpack.c.b16 %v5488, %v5637
      %v5654 = vpack.c.b16 %v5491, %v5638
      %v5655 = vpack.c.b16 %v5494, %v5639
      %v5656 = vpack.c.b16 %v5497, %v5640
      %v5657 = vpack.c.b16 %v5500, %v5641
      %v5658 = vpack.c.b16 %v5503, %v5642
      %v5659 = vpack.c.b16 %v5506, %v5643
      %v5660 = vpack.c.b16 %v5509, %v5644
      %v5661 = vpack.c.b16 %v5512, %v5645
      %v5662 = vpack.c.b16 %v5515, %v5646
      %v5663 = vpack.c.b16 %v5518, %v5647
      %v5665 = vshrl.u32 %v5648, 16
      %v5667 = vshll.u32 %v5648, 16
      %v5669 = vrot.slane %v5667, 1
      %v5670 = vor.u32 %v5665, %v5669
      %v5672 = vshll.u32 %v5521, 16
      %v5674 = vrot.slane %v5672, 1
      %v5675 = vsel %vm402, %v5670, %v5674
      %v5676 = vshrl.u32 %v5521, 16
      %v5679 = vshrl.u32 %v5649, 16
      %v5681 = vshll.u32 %v5649, 16
      %v5683 = vrot.slane %v5681, 1
      %v5684 = vor.u32 %v5679, %v5683
      %v5686 = vshll.u32 %v5523, 16
      %v5688 = vrot.slane %v5686, 1
      %v5689 = vsel %vm402, %v5684, %v5688
      %v5690 = vshrl.u32 %v5523, 16
      %v5693 = vshrl.u32 %v5650, 16
      %v5695 = vshll.u32 %v5650, 16
      %v5697 = vrot.slane %v5695, 1
      %v5698 = vor.u32 %v5693, %v5697
      %v5700 = vshll.u32 %v5525, 16
      %v5702 = vrot.slane %v5700, 1
      %v5703 = vsel %vm402, %v5698, %v5702
      %v5704 = vshrl.u32 %v5525, 16
      %v5707 = vshrl.u32 %v5651, 16
      %v5709 = vshll.u32 %v5651, 16
      %v5711 = vrot.slane %v5709, 1
      %v5712 = vor.u32 %v5707, %v5711
      %v5714 = vshll.u32 %v5527, 16
      %v5716 = vrot.slane %v5714, 1
      %v5717 = vsel %vm402, %v5712, %v5716
      %v5718 = vshrl.u32 %v5527, 16
      %v5721 = vshrl.u32 %v5652, 16
      %v5723 = vshll.u32 %v5652, 16
      %v5725 = vrot.slane %v5723, 1
      %v5726 = vor.u32 %v5721, %v5725
      %v5728 = vshll.u32 %v5529, 16
      %v5730 = vrot.slane %v5728, 1
      %v5731 = vsel %vm402, %v5726, %v5730
      %v5732 = vshrl.u32 %v5529, 16
      %v5735 = vshrl.u32 %v5653, 16
      %v5737 = vshll.u32 %v5653, 16
      %v5739 = vrot.slane %v5737, 1
      %v5740 = vor.u32 %v5735, %v5739
      %v5742 = vshll.u32 %v5531, 16
      %v5744 = vrot.slane %v5742, 1
      %v5745 = vsel %vm402, %v5740, %v5744
      %v5746 = vshrl.u32 %v5531, 16
      %v5749 = vshrl.u32 %v5654, 16
      %v5751 = vshll.u32 %v5654, 16
      %v5753 = vrot.slane %v5751, 1
      %v5754 = vor.u32 %v5749, %v5753
      %v5756 = vshll.u32 %v5533, 16
      %v5758 = vrot.slane %v5756, 1
      %v5759 = vsel %vm402, %v5754, %v5758
      %v5760 = vshrl.u32 %v5533, 16
      %v5763 = vshrl.u32 %v5655, 16
      %v5765 = vshll.u32 %v5655, 16
      %v5767 = vrot.slane %v5765, 1
      %v5768 = vor.u32 %v5763, %v5767
      %v5770 = vshll.u32 %v5535, 16
      %v5772 = vrot.slane %v5770, 1
      %v5773 = vsel %vm402, %v5768, %v5772
      %v5774 = vshrl.u32 %v5535, 16
      %v5777 = vshrl.u32 %v5656, 16
      %v5779 = vshll.u32 %v5656, 16
      %v5781 = vrot.slane %v5779, 1
      %v5782 = vor.u32 %v5777, %v5781
      %v5784 = vshll.u32 %v5537, 16
      %v5786 = vrot.slane %v5784, 1
      %v5787 = vsel %vm402, %v5782, %v5786
      %v5788 = vshrl.u32 %v5537, 16
      %v5791 = vshrl.u32 %v5657, 16
      %v5793 = vshll.u32 %v5657, 16
      %v5795 = vrot.slane %v5793, 1
      %v5796 = vor.u32 %v5791, %v5795
      %v5798 = vshll.u32 %v5539, 16
      %v5800 = vrot.slane %v5798, 1
      %v5801 = vsel %vm402, %v5796, %v5800
      %v5802 = vshrl.u32 %v5539, 16
      %v5805 = vshrl.u32 %v5658, 16
      %v5807 = vshll.u32 %v5658, 16
      %v5809 = vrot.slane %v5807, 1
      %v5810 = vor.u32 %v5805, %v5809
      %v5812 = vshll.u32 %v5541, 16
      %v5814 = vrot.slane %v5812, 1
      %v5815 = vsel %vm402, %v5810, %v5814
      %v5816 = vshrl.u32 %v5541, 16
      %v5819 = vshrl.u32 %v5659, 16
      %v5821 = vshll.u32 %v5659, 16
      %v5823 = vrot.slane %v5821, 1
      %v5824 = vor.u32 %v5819, %v5823
      %v5826 = vshll.u32 %v5543, 16
      %v5828 = vrot.slane %v5826, 1
      %v5829 = vsel %vm402, %v5824, %v5828
      %v5830 = vshrl.u32 %v5543, 16
      %v5833 = vshrl.u32 %v5660, 16
      %v5835 = vshll.u32 %v5660, 16
      %v5837 = vrot.slane %v5835, 1
      %v5838 = vor.u32 %v5833, %v5837
      %v5840 = vshll.u32 %v5545, 16
      %v5842 = vrot.slane %v5840, 1
      %v5843 = vsel %vm402, %v5838, %v5842
      %v5844 = vshrl.u32 %v5545, 16
      %v5847 = vshrl.u32 %v5661, 16
      %v5849 = vshll.u32 %v5661, 16
      %v5851 = vrot.slane %v5849, 1
      %v5852 = vor.u32 %v5847, %v5851
      %v5854 = vshll.u32 %v5547, 16
      %v5856 = vrot.slane %v5854, 1
      %v5857 = vsel %vm402, %v5852, %v5856
      %v5858 = vshrl.u32 %v5547, 16
      %v5861 = vshrl.u32 %v5662, 16
      %v5863 = vshll.u32 %v5662, 16
      %v5865 = vrot.slane %v5863, 1
      %v5866 = vor.u32 %v5861, %v5865
      %v5868 = vshll.u32 %v5549, 16
      %v5870 = vrot.slane %v5868, 1
      %v5871 = vsel %vm402, %v5866, %v5870
      %v5872 = vshrl.u32 %v5549, 16
      %v5875 = vshrl.u32 %v5663, 16
      %v5877 = vshll.u32 %v5663, 16
      %v5879 = vrot.slane %v5877, 1
      %v5880 = vor.u32 %v5875, %v5879
      %v5882 = vshll.u32 %v5551, 16
      %v5884 = vrot.slane %v5882, 1
      %v5885 = vsel %vm402, %v5880, %v5884
      %v5886 = vshrl.u32 %v5551, 16
      %5888 = vrot.lane.b32.xlu0 %v5675, 96
      %v5889 = vpop.permute.xlu0 %5888
      %5890 = vrot.lane.b32.xlu0 %v5676, 96
      %v5891 = vpop.permute.xlu0 %5890
      %5892 = vrot.lane.b32.xlu0 %v5689, 96
      %v5893 = vpop.permute.xlu0 %5892
      %5894 = vrot.lane.b32.xlu0 %v5690, 96
      %v5895 = vpop.permute.xlu0 %5894
      %5896 = vrot.lane.b32.xlu0 %v5703, 96
      %v5897 = vpop.permute.xlu0 %5896
      %5898 = vrot.lane.b32.xlu0 %v5704, 96
      %v5899 = vpop.permute.xlu0 %5898
      %5900 = vrot.lane.b32.xlu0 %v5717, 96
      %v5901 = vpop.permute.xlu0 %5900
      %5902 = vrot.lane.b32.xlu0 %v5718, 96
      %v5903 = vpop.permute.xlu0 %5902
      %5904 = vrot.lane.b32.xlu0 %v5731, 96
      %v5905 = vpop.permute.xlu0 %5904
      %5906 = vrot.lane.b32.xlu0 %v5732, 96
      %v5907 = vpop.permute.xlu0 %5906
      %5908 = vrot.lane.b32.xlu0 %v5745, 96
      %v5909 = vpop.permute.xlu0 %5908
      %5910 = vrot.lane.b32.xlu0 %v5746, 96
      %v5911 = vpop.permute.xlu0 %5910
      %5912 = vrot.lane.b32.xlu0 %v5759, 96
      %v5913 = vpop.permute.xlu0 %5912
      %5914 = vrot.lane.b32.xlu0 %v5760, 96
      %v5915 = vpop.permute.xlu0 %5914
      %5916 = vrot.lane.b32.xlu0 %v5773, 96
      %v5917 = vpop.permute.xlu0 %5916
      %5918 = vrot.lane.b32.xlu0 %v5774, 96
      %v5919 = vpop.permute.xlu0 %5918
      %5920 = vrot.lane.b32.xlu0 %v5787, 96
      %v5921 = vpop.permute.xlu0 %5920
      %5922 = vrot.lane.b32.xlu0 %v5788, 96
      %v5923 = vpop.permute.xlu0 %5922
      %5924 = vrot.lane.b32.xlu0 %v5801, 96
      %v5925 = vpop.permute.xlu0 %5924
      %5926 = vrot.lane.b32.xlu0 %v5802, 96
      %v5927 = vpop.permute.xlu0 %5926
      %5928 = vrot.lane.b32.xlu0 %v5815, 96
      %v5929 = vpop.permute.xlu0 %5928
      %5930 = vrot.lane.b32.xlu0 %v5816, 96
      %v5931 = vpop.permute.xlu0 %5930
      %5932 = vrot.lane.b32.xlu0 %v5829, 96
      %v5933 = vpop.permute.xlu0 %5932
      %5934 = vrot.lane.b32.xlu0 %v5830, 96
      %v5935 = vpop.permute.xlu0 %5934
      %5936 = vrot.lane.b32.xlu0 %v5843, 96
      %v5937 = vpop.permute.xlu0 %5936
      %5938 = vrot.lane.b32.xlu0 %v5844, 96
      %v5939 = vpop.permute.xlu0 %5938
      %5940 = vrot.lane.b32.xlu0 %v5857, 96
      %v5941 = vpop.permute.xlu0 %5940
      %5942 = vrot.lane.b32.xlu0 %v5858, 96
      %v5943 = vpop.permute.xlu0 %5942
      %5944 = vrot.lane.b32.xlu0 %v5871, 96
      %v5945 = vpop.permute.xlu0 %5944
      %5946 = vrot.lane.b32.xlu0 %v5872, 96
      %v5947 = vpop.permute.xlu0 %5946
      %5948 = vrot.lane.b32.xlu0 %v5885, 96
      %v5949 = vpop.permute.xlu0 %5948
      %5950 = vrot.lane.b32.xlu0 %v5886, 96
      %v5951 = vpop.permute.xlu0 %5950
      %v5954 = vsel %vm1011, %v5056, %v5361
      %v5956 = vsel %vm1011, %v5057, %v5363
      %v5959 = vsel %vm1011, %v5058, %v5365
      %v5961 = vsel %vm1011, %v5059, %v5367
      %v5964 = vsel %vm1011, %v5060, %v5369
      %v5966 = vsel %vm1011, %v5061, %v5371
      %v5969 = vsel %vm1011, %v5062, %v5373
      %v5971 = vsel %vm1011, %v5063, %v5375
      %v5974 = vsel %vm1011, %v5064, %v5377
      %v5976 = vsel %vm1011, %v5065, %v5379
      %v5979 = vsel %vm1011, %v5066, %v5381
      %v5981 = vsel %vm1011, %v5067, %v5383
      %v5984 = vsel %vm1011, %v5068, %v5385
      %v5986 = vsel %vm1011, %v5069, %v5387
      %v5989 = vsel %vm1011, %v5070, %v5389
      %v5991 = vsel %vm1011, %v5071, %v5391
      %v5994 = vsel %vm1011, %v5072, %v5393
      %v5996 = vsel %vm1011, %v5073, %v5395
      %v5999 = vsel %vm1011, %v5074, %v5397
      %v6001 = vsel %vm1011, %v5075, %v5399
      %v6004 = vsel %vm1011, %v5076, %v5401
      %v6006 = vsel %vm1011, %v5077, %v5403
      %v6009 = vsel %vm1011, %v5078, %v5405
      %v6011 = vsel %vm1011, %v5079, %v5407
      %v6014 = vsel %vm1011, %v5080, %v5409
      %v6016 = vsel %vm1011, %v5081, %v5411
      %v6019 = vsel %vm1011, %v5082, %v5413
      %v6021 = vsel %vm1011, %v5083, %v5415
      %v6024 = vsel %vm1011, %v5084, %v5417
      %v6026 = vsel %vm1011, %v5085, %v5419
      %v6029 = vsel %vm1011, %v5086, %v5421
      %v6031 = vsel %vm1011, %v5087, %v5423
      %v6033 = vsel %vm1044, %v5954, %v5553
      %v6035 = vsel %vm1044, %v5956, %v5555
      %v6037 = vsel %vm1044, %v5959, %v5557
      %v6039 = vsel %vm1044, %v5961, %v5559
      %v6041 = vsel %vm1044, %v5964, %v5561
      %v6043 = vsel %vm1044, %v5966, %v5563
      %v6045 = vsel %vm1044, %v5969, %v5565
      %v6047 = vsel %vm1044, %v5971, %v5567
      %v6049 = vsel %vm1044, %v5974, %v5569
      %v6051 = vsel %vm1044, %v5976, %v5571
      %v6053 = vsel %vm1044, %v5979, %v5573
      %v6055 = vsel %vm1044, %v5981, %v5575
      %v6057 = vsel %vm1044, %v5984, %v5577
      %v6059 = vsel %vm1044, %v5986, %v5579
      %v6061 = vsel %vm1044, %v5989, %v5581
      %v6063 = vsel %vm1044, %v5991, %v5583
      %v6065 = vsel %vm1044, %v5994, %v5585
      %v6067 = vsel %vm1044, %v5996, %v5587
      %v6069 = vsel %vm1044, %v5999, %v5589
      %v6071 = vsel %vm1044, %v6001, %v5591
      %v6073 = vsel %vm1044, %v6004, %v5593
      %v6075 = vsel %vm1044, %v6006, %v5595
      %v6077 = vsel %vm1044, %v6009, %v5597
      %v6079 = vsel %vm1044, %v6011, %v5599
      %v6081 = vsel %vm1044, %v6014, %v5601
      %v6083 = vsel %vm1044, %v6016, %v5603
      %v6085 = vsel %vm1044, %v6019, %v5605
      %v6087 = vsel %vm1044, %v6021, %v5607
      %v6089 = vsel %vm1044, %v6024, %v5609
      %v6091 = vsel %vm1044, %v6026, %v5611
      %v6093 = vsel %vm1044, %v6029, %v5613
      %v6095 = vsel %vm1044, %v6031, %v5615
      %v6097 = vsel %vm1077, %v6033, %v5889
      %v6099 = vsel %vm1077, %v6035, %v5891
      %v6101 = vsel %vm1077, %v6037, %v5893
      %v6103 = vsel %vm1077, %v6039, %v5895
      %v6105 = vsel %vm1077, %v6041, %v5897
      %v6107 = vsel %vm1077, %v6043, %v5899
      %v6109 = vsel %vm1077, %v6045, %v5901
      %v6111 = vsel %vm1077, %v6047, %v5903
      %v6113 = vsel %vm1077, %v6049, %v5905
      %v6115 = vsel %vm1077, %v6051, %v5907
      %v6117 = vsel %vm1077, %v6053, %v5909
      %v6119 = vsel %vm1077, %v6055, %v5911
      %v6121 = vsel %vm1077, %v6057, %v5913
      %v6123 = vsel %vm1077, %v6059, %v5915
      %v6125 = vsel %vm1077, %v6061, %v5917
      %v6127 = vsel %vm1077, %v6063, %v5919
      %v6129 = vsel %vm1077, %v6065, %v5921
      %v6131 = vsel %vm1077, %v6067, %v5923
      %v6133 = vsel %vm1077, %v6069, %v5925
      %v6135 = vsel %vm1077, %v6071, %v5927
      %v6137 = vsel %vm1077, %v6073, %v5929
      %v6139 = vsel %vm1077, %v6075, %v5931
      %v6141 = vsel %vm1077, %v6077, %v5933
      %v6143 = vsel %vm1077, %v6079, %v5935
      %v6145 = vsel %vm1077, %v6081, %v5937
      %v6147 = vsel %vm1077, %v6083, %v5939
      %v6149 = vsel %vm1077, %v6085, %v5941
      %v6151 = vsel %vm1077, %v6087, %v5943
      %v6153 = vsel %vm1077, %v6089, %v5945
      %v6155 = vsel %vm1077, %v6091, %v5947
      %v6157 = vsel %vm1077, %v6093, %v5949
      %v6159 = vsel %vm1077, %v6095, %v5951
      %v6160 = vshrl.u32 %v6097, 16
      %v6162 = vshll.u32 %v6097, 16
      %v6164 = vrot.slane %v6162, 1
      %v6165 = vor.u32 %v6160, %v6164
      %v6166 = vshll.u32 %v6099, 16
      %v6168 = vrot.slane %v6166, 1
      %v6169 = vsel %vm402, %v6165, %v6168
      %v6170 = vshrl.u32 %v6101, 16
      %v6172 = vshll.u32 %v6101, 16
      %v6174 = vrot.slane %v6172, 1
      %v6175 = vor.u32 %v6170, %v6174
      %v6176 = vshll.u32 %v6103, 16
      %v6178 = vrot.slane %v6176, 1
      %v6179 = vsel %vm402, %v6175, %v6178
      %v6180 = vshrl.u32 %v6105, 16
      %v6182 = vshll.u32 %v6105, 16
      %v6184 = vrot.slane %v6182, 1
      %v6185 = vor.u32 %v6180, %v6184
      %v6186 = vshll.u32 %v6107, 16
      %v6188 = vrot.slane %v6186, 1
      %v6189 = vsel %vm402, %v6185, %v6188
      %v6190 = vshrl.u32 %v6109, 16
      %v6192 = vshll.u32 %v6109, 16
      %v6194 = vrot.slane %v6192, 1
      %v6195 = vor.u32 %v6190, %v6194
      %v6196 = vshll.u32 %v6111, 16
      %v6198 = vrot.slane %v6196, 1
      %v6199 = vsel %vm402, %v6195, %v6198
      %v6200 = vshrl.u32 %v6113, 16
      %v6202 = vshll.u32 %v6113, 16
      %v6204 = vrot.slane %v6202, 1
      %v6205 = vor.u32 %v6200, %v6204
      %v6206 = vshll.u32 %v6115, 16
      %v6208 = vrot.slane %v6206, 1
      %v6209 = vsel %vm402, %v6205, %v6208
      %v6210 = vshrl.u32 %v6117, 16
      %v6212 = vshll.u32 %v6117, 16
      %v6214 = vrot.slane %v6212, 1
      %v6215 = vor.u32 %v6210, %v6214
      %v6216 = vshll.u32 %v6119, 16
      %v6218 = vrot.slane %v6216, 1
      %v6219 = vsel %vm402, %v6215, %v6218
      %v6220 = vshrl.u32 %v6121, 16
      %v6222 = vshll.u32 %v6121, 16
      %v6224 = vrot.slane %v6222, 1
      %v6225 = vor.u32 %v6220, %v6224
      %v6226 = vshll.u32 %v6123, 16
      %v6228 = vrot.slane %v6226, 1
      %v6229 = vsel %vm402, %v6225, %v6228
      %v6230 = vshrl.u32 %v6125, 16
      %v6232 = vshll.u32 %v6125, 16
      %v6234 = vrot.slane %v6232, 1
      %v6235 = vor.u32 %v6230, %v6234
      %v6236 = vshll.u32 %v6127, 16
      %v6238 = vrot.slane %v6236, 1
      %v6239 = vsel %vm402, %v6235, %v6238
      %v6240 = vshrl.u32 %v6129, 16
      %v6242 = vshll.u32 %v6129, 16
      %v6244 = vrot.slane %v6242, 1
      %v6245 = vor.u32 %v6240, %v6244
      %v6246 = vshll.u32 %v6131, 16
      %v6248 = vrot.slane %v6246, 1
      %v6249 = vsel %vm402, %v6245, %v6248
      %v6250 = vshrl.u32 %v6133, 16
      %v6252 = vshll.u32 %v6133, 16
      %v6254 = vrot.slane %v6252, 1
      %v6255 = vor.u32 %v6250, %v6254
      %v6256 = vshll.u32 %v6135, 16
      %v6258 = vrot.slane %v6256, 1
      %v6259 = vsel %vm402, %v6255, %v6258
      %v6260 = vshrl.u32 %v6137, 16
      %v6262 = vshll.u32 %v6137, 16
      %v6264 = vrot.slane %v6262, 1
      %v6265 = vor.u32 %v6260, %v6264
      %v6266 = vshll.u32 %v6139, 16
      %v6268 = vrot.slane %v6266, 1
      %v6269 = vsel %vm402, %v6265, %v6268
      %v6270 = vshrl.u32 %v6141, 16
      %v6272 = vshll.u32 %v6141, 16
      %v6274 = vrot.slane %v6272, 1
      %v6275 = vor.u32 %v6270, %v6274
      %v6276 = vshll.u32 %v6143, 16
      %v6278 = vrot.slane %v6276, 1
      %v6279 = vsel %vm402, %v6275, %v6278
      %v6280 = vshrl.u32 %v6145, 16
      %v6282 = vshll.u32 %v6145, 16
      %v6284 = vrot.slane %v6282, 1
      %v6285 = vor.u32 %v6280, %v6284
      %v6286 = vshll.u32 %v6147, 16
      %v6288 = vrot.slane %v6286, 1
      %v6289 = vsel %vm402, %v6285, %v6288
      %v6290 = vshrl.u32 %v6149, 16
      %v6292 = vshll.u32 %v6149, 16
      %v6294 = vrot.slane %v6292, 1
      %v6295 = vor.u32 %v6290, %v6294
      %v6296 = vshll.u32 %v6151, 16
      %v6298 = vrot.slane %v6296, 1
      %v6299 = vsel %vm402, %v6295, %v6298
      %v6300 = vshrl.u32 %v6153, 16
      %v6302 = vshll.u32 %v6153, 16
      %v6304 = vrot.slane %v6302, 1
      %v6305 = vor.u32 %v6300, %v6304
      %v6306 = vshll.u32 %v6155, 16
      %v6308 = vrot.slane %v6306, 1
      %v6309 = vsel %vm402, %v6305, %v6308
      %v6310 = vshrl.u32 %v6157, 16
      %v6312 = vshll.u32 %v6157, 16
      %v6314 = vrot.slane %v6312, 1
      %v6315 = vor.u32 %v6310, %v6314
      %v6316 = vshll.u32 %v6159, 16
      %v6318 = vrot.slane %v6316, 1
      %v6319 = vsel %vm402, %v6315, %v6318
      %s6336 = scalar_lea.vmem %s1, 192
      %v6337 = vld [vmem:[%s6336] sm:$0xf]
      %v6338 = vld [vmem:[%s6336 + $0x4] sm:$0xf]
      %v6339 = vld [vmem:[%s6336 + $0x8] sm:$0xf]
      %v6340 = vld [vmem:[%s6336 + $0xc] sm:$0xf]
      %v6341 = vld [vmem:[%s6336 + $0x10] sm:$0xf]
      %v6342 = vld [vmem:[%s6336 + $0x14] sm:$0xf]
      %v6343 = vld [vmem:[%s6336 + $0x18] sm:$0xf]
      %v6344 = vld [vmem:[%s6336 + $0x1c] sm:$0xf]
      %v6345 = vld [vmem:[%s6336 + $0x20] sm:$0xf]
      %v6346 = vld [vmem:[%s6336 + $0x24] sm:$0xf]
      %v6347 = vld [vmem:[%s6336 + $0x28] sm:$0xf]
      %v6348 = vld [vmem:[%s6336 + $0x2c] sm:$0xf]
      %v6349 = vld [vmem:[%s6336 + $0x30] sm:$0xf]
      %v6350 = vld [vmem:[%s6336 + $0x34] sm:$0xf]
      %v6351 = vld [vmem:[%s6336 + $0x38] sm:$0xf]
      %v6352 = vld [vmem:[%s6336 + $0x3c] sm:$0xf]
      %v6369 = vunpack.c.l.b16 %v6337
      %v6370 = vunpack.c.l.b16 %v6338
      %v6371 = vunpack.c.l.b16 %v6339
      %v6372 = vunpack.c.l.b16 %v6340
      %v6373 = vunpack.c.l.b16 %v6341
      %v6374 = vunpack.c.l.b16 %v6342
      %v6375 = vunpack.c.l.b16 %v6343
      %v6376 = vunpack.c.l.b16 %v6344
      %v6377 = vunpack.c.l.b16 %v6345
      %v6378 = vunpack.c.l.b16 %v6346
      %v6379 = vunpack.c.l.b16 %v6347
      %v6380 = vunpack.c.l.b16 %v6348
      %v6381 = vunpack.c.l.b16 %v6349
      %v6382 = vunpack.c.l.b16 %v6350
      %v6383 = vunpack.c.l.b16 %v6351
      %v6384 = vunpack.c.l.b16 %v6352
      %v6385 = vpack.c.b16 %v6370, %v6369
      %v6386 = vpack.c.b16 %v6372, %v6371
      %v6387 = vpack.c.b16 %v6374, %v6373
      %v6388 = vpack.c.b16 %v6376, %v6375
      %v6389 = vpack.c.b16 %v6378, %v6377
      %v6390 = vpack.c.b16 %v6380, %v6379
      %v6391 = vpack.c.b16 %v6382, %v6381
      %v6392 = vpack.c.b16 %v6384, %v6383
      %6401 = vmatprep.subr.bf16.mxu0 0
      %6402 = vmatpush1.bf16.msra.mxu0 %v6385
      %6403 = vmatprep.subr.bf16.mxu0 0
      %6404 = vmatpush1.bf16.msra.mxu0 %v6386
      %6405 = vmatprep.subr.bf16.mxu0 0
      %6406 = vmatpush1.bf16.msra.mxu0 %v6387
      %6407 = vmatprep.subr.bf16.mxu0 0
      %6408 = vmatpush1.bf16.msra.mxu0 %v6388
      %6409 = vmatprep.subr.bf16.mxu0 0
      %6410 = vmatpush1.bf16.msra.mxu0 %v6389
      %6411 = vmatprep.subr.bf16.mxu0 0
      %6412 = vmatpush1.bf16.msra.mxu0 %v6390
      %6413 = vmatprep.subr.bf16.mxu0 0
      %6414 = vmatpush1.bf16.msra.mxu0 %v6391
      %6415 = vmatprep.subr.bf16.mxu0 0
      %6416 = vmatpush1.bf16.msra.mxu0 %v6392
      %6417 = vmatprep.subr.bf16.mxu0 0
      %6418 = vmatpush1.bf16.msra.mxu0 0
      %6419 = vmatprep.subr.bf16.mxu0 0
      %6420 = vmatpush1.bf16.msra.mxu0 0
      %6421 = vmatprep.subr.bf16.mxu0 0
      %6422 = vmatpush1.bf16.msra.mxu0 0
      %6423 = vmatprep.subr.bf16.mxu0 0
      %6424 = vmatpush1.bf16.msra.mxu0 0
      %6425 = vmatprep.subr.bf16.mxu0 0
      %6426 = vmatpush1.bf16.msra.mxu0 0
      %6427 = vmatprep.subr.bf16.mxu0 0
      %6428 = vmatpush1.bf16.msra.mxu0 0
      %6429 = vmatprep.subr.bf16.mxu0 0
      %6430 = vmatpush1.bf16.msra.mxu0 0
      %6431 = vmatprep.subr.bf16.mxu0 0
      %6432 = vmatpush1.bf16.msra.mxu0 0
      %6433 = vmatprep.mubr.bf16.mxu0 0
      %6434 = vmatmul.mubr.bf16.gmra.mrb[0].mxu0 %v6169
      %v6435 = vpop.f32.mrb[0].mxu0
      %v6436 = vadd.f32 0.0, %v6435
      %v6437 = vpop.f32.mrb[0].mxu0
      %v6438 = vpop.f32.mrb[0].mxu0
      %v6439 = vadd.f32 0.0, %v6438
      %v6440 = vpop.f32.mrb[0].mxu0
      %6441 = vmatprep.mubr.bf16.mxu0 0
      %6442 = vmatmul.mubr.bf16.gmra.mrb[0].mxu0 %v6179
      %v6443 = vpop.f32.mrb[0].mxu0
      %v6444 = vadd.f32 0.0, %v6443
      %v6445 = vpop.f32.mrb[0].mxu0
      %v6446 = vpop.f32.mrb[0].mxu0
      %v6447 = vadd.f32 0.0, %v6446
      %v6448 = vpop.f32.mrb[0].mxu0
      %6449 = vmatprep.mubr.bf16.mxu0 0
      %6450 = vmatmul.mubr.bf16.gmra.mrb[0].mxu0 %v6189
      %v6451 = vpop.f32.mrb[0].mxu0
      %v6452 = vadd.f32 0.0, %v6451
      %v6453 = vpop.f32.mrb[0].mxu0
      %v6454 = vpop.f32.mrb[0].mxu0
      %v6455 = vadd.f32 0.0, %v6454
      %v6456 = vpop.f32.mrb[0].mxu0
      %6457 = vmatprep.mubr.bf16.mxu0 0
      %6458 = vmatmul.mubr.bf16.gmra.mrb[0].mxu0 %v6199
      %v6459 = vpop.f32.mrb[0].mxu0
      %v6460 = vadd.f32 0.0, %v6459
      %v6461 = vpop.f32.mrb[0].mxu0
      %v6462 = vpop.f32.mrb[0].mxu0
      %v6463 = vadd.f32 0.0, %v6462
      %v6464 = vpop.f32.mrb[0].mxu0
      %6465 = vmatprep.mubr.bf16.mxu0 0
      %6466 = vmatmul.mubr.bf16.gmra.mrb[0].mxu0 %v6209
      %v6467 = vpop.f32.mrb[0].mxu0
      %v6468 = vadd.f32 0.0, %v6467
      %v6469 = vpop.f32.mrb[0].mxu0
      %v6470 = vpop.f32.mrb[0].mxu0
      %v6471 = vadd.f32 0.0, %v6470
      %v6472 = vpop.f32.mrb[0].mxu0
      %6473 = vmatprep.mubr.bf16.mxu0 0
      %6474 = vmatmul.mubr.bf16.gmra.mrb[0].mxu0 %v6219
      %v6475 = vpop.f32.mrb[0].mxu0
      %v6476 = vadd.f32 0.0, %v6475
      %v6477 = vpop.f32.mrb[0].mxu0
      %v6478 = vpop.f32.mrb[0].mxu0
      %v6479 = vadd.f32 0.0, %v6478
      %v6480 = vpop.f32.mrb[0].mxu0
      %6481 = vmatprep.mubr.bf16.mxu0 0
      %6482 = vmatmul.mubr.bf16.gmra.mrb[0].mxu0 %v6229
      %v6483 = vpop.f32.mrb[0].mxu0
      %v6484 = vadd.f32 0.0, %v6483
      %v6485 = vpop.f32.mrb[0].mxu0
      %v6486 = vpop.f32.mrb[0].mxu0
      %v6487 = vadd.f32 0.0, %v6486
      %v6488 = vpop.f32.mrb[0].mxu0
      %6489 = vmatprep.mubr.bf16.mxu0 0
      %6490 = vmatmul.mubr.bf16.gmra.mrb[0].mxu0 %v6239
      %v6491 = vpop.f32.mrb[0].mxu0
      %v6492 = vadd.f32 0.0, %v6491
      %v6493 = vpop.f32.mrb[0].mxu0
      %v6494 = vpop.f32.mrb[0].mxu0
      %v6495 = vadd.f32 0.0, %v6494
      %v6496 = vpop.f32.mrb[0].mxu0
      %6497 = vmatprep.mubr.bf16.mxu0 0
      %6498 = vmatmul.mubr.bf16.gmra.mrb[0].mxu0 %v6249
      %v6499 = vpop.f32.mrb[0].mxu0
      %v6500 = vadd.f32 0.0, %v6499
      %v6501 = vpop.f32.mrb[0].mxu0
      %v6502 = vpop.f32.mrb[0].mxu0
      %v6503 = vadd.f32 0.0, %v6502
      %v6504 = vpop.f32.mrb[0].mxu0
      %6505 = vmatprep.mubr.bf16.mxu0 0
      %6506 = vmatmul.mubr.bf16.gmra.mrb[0].mxu0 %v6259
      %v6507 = vpop.f32.mrb[0].mxu0
      %v6508 = vadd.f32 0.0, %v6507
      %v6509 = vpop.f32.mrb[0].mxu0
      %v6510 = vpop.f32.mrb[0].mxu0
      %v6511 = vadd.f32 0.0, %v6510
      %v6512 = vpop.f32.mrb[0].mxu0
      %6513 = vmatprep.mubr.bf16.mxu0 0
      %6514 = vmatmul.mubr.bf16.gmra.mrb[0].mxu0 %v6269
      %v6515 = vpop.f32.mrb[0].mxu0
      %v6516 = vadd.f32 0.0, %v6515
      %v6517 = vpop.f32.mrb[0].mxu0
      %v6518 = vpop.f32.mrb[0].mxu0
      %v6519 = vadd.f32 0.0, %v6518
      %v6520 = vpop.f32.mrb[0].mxu0
      %6521 = vmatprep.mubr.bf16.mxu0 0
      %6522 = vmatmul.mubr.bf16.gmra.mrb[0].mxu0 %v6279
      %v6523 = vpop.f32.mrb[0].mxu0
      %v6524 = vadd.f32 0.0, %v6523
      %v6525 = vpop.f32.mrb[0].mxu0
      %v6526 = vpop.f32.mrb[0].mxu0
      %v6527 = vadd.f32 0.0, %v6526
      %v6528 = vpop.f32.mrb[0].mxu0
      %6529 = vmatprep.mubr.bf16.mxu0 0
      %6530 = vmatmul.mubr.bf16.gmra.mrb[0].mxu0 %v6289
      %v6531 = vpop.f32.mrb[0].mxu0
      %v6532 = vadd.f32 0.0, %v6531
      %v6533 = vpop.f32.mrb[0].mxu0
      %v6534 = vpop.f32.mrb[0].mxu0
      %v6535 = vadd.f32 0.0, %v6534
      %v6536 = vpop.f32.mrb[0].mxu0
      %6537 = vmatprep.mubr.bf16.mxu0 0
      %6538 = vmatmul.mubr.bf16.gmra.mrb[0].mxu0 %v6299
      %v6539 = vpop.f32.mrb[0].mxu0
      %v6540 = vadd.f32 0.0, %v6539
      %v6541 = vpop.f32.mrb[0].mxu0
      %v6542 = vpop.f32.mrb[0].mxu0
      %v6543 = vadd.f32 0.0, %v6542
      %v6544 = vpop.f32.mrb[0].mxu0
      %6545 = vmatprep.mubr.bf16.mxu0 0
      %6546 = vmatmul.mubr.bf16.gmra.mrb[0].mxu0 %v6309
      %v6547 = vpop.f32.mrb[0].mxu0
      %v6548 = vadd.f32 0.0, %v6547
      %v6549 = vpop.f32.mrb[0].mxu0
      %v6550 = vpop.f32.mrb[0].mxu0
      %v6551 = vadd.f32 0.0, %v6550
      %v6552 = vpop.f32.mrb[0].mxu0
      %6553 = vmatprep.mubr.bf16.mxu0 0
      %6554 = vmatmul.mubr.bf16.gmra.mrb[0].mxu0 %v6319
      %v6555 = vpop.f32.mrb[0].mxu0
      %v6556 = vadd.f32 0.0, %v6555
      %v6557 = vpop.f32.mrb[0].mxu0
      %v6558 = vpop.f32.mrb[0].mxu0
      %v6559 = vadd.f32 0.0, %v6558
      %v6560 = vpop.f32.mrb[0].mxu0
      %6561 = vdwg.mxu0
      %v6562 = vmax.f32 %v6436, 0.0
      %v6563 = vmax.f32 %v6439, 0.0
      %v6564 = vmax.f32 %v6444, 0.0
      %v6565 = vmax.f32 %v6447, 0.0
      %v6566 = vmax.f32 %v6452, 0.0
      %v6567 = vmax.f32 %v6455, 0.0
      %v6568 = vmax.f32 %v6460, 0.0
      %v6569 = vmax.f32 %v6463, 0.0
      %v6570 = vmax.f32 %v6468, 0.0
      %v6571 = vmax.f32 %v6471, 0.0
      %v6572 = vmax.f32 %v6476, 0.0
      %v6573 = vmax.f32 %v6479, 0.0
      %v6574 = vmax.f32 %v6484, 0.0
      %v6575 = vmax.f32 %v6487, 0.0
      %v6576 = vmax.f32 %v6492, 0.0
      %v6577 = vmax.f32 %v6495, 0.0
      %v6578 = vmax.f32 %v6500, 0.0
      %v6579 = vmax.f32 %v6503, 0.0
      %v6580 = vmax.f32 %v6508, 0.0
      %v6581 = vmax.f32 %v6511, 0.0
      %v6582 = vmax.f32 %v6516, 0.0
      %v6583 = vmax.f32 %v6519, 0.0
      %v6584 = vmax.f32 %v6524, 0.0
      %v6585 = vmax.f32 %v6527, 0.0
      %v6586 = vmax.f32 %v6532, 0.0
      %v6587 = vmax.f32 %v6535, 0.0
      %v6588 = vmax.f32 %v6540, 0.0
      %v6589 = vmax.f32 %v6543, 0.0
      %v6590 = vmax.f32 %v6548, 0.0
      %v6591 = vmax.f32 %v6551, 0.0
      %v6592 = vmax.f32 %v6556, 0.0
      %v6593 = vmax.f32 %v6559, 0.0
      %v6594 = vpack.c.bf16 %v6563, %v6562
      %v6595 = vpack.c.bf16 %v6565, %v6564
      %v6596 = vpack.c.bf16 %v6567, %v6566
      %v6597 = vpack.c.bf16 %v6569, %v6568
      %v6598 = vpack.c.bf16 %v6571, %v6570
      %v6599 = vpack.c.bf16 %v6573, %v6572
      %v6600 = vpack.c.bf16 %v6575, %v6574
      %v6601 = vpack.c.bf16 %v6577, %v6576
      %v6602 = vpack.c.bf16 %v6579, %v6578
      %v6603 = vpack.c.bf16 %v6581, %v6580
      %v6604 = vpack.c.bf16 %v6583, %v6582
      %v6605 = vpack.c.bf16 %v6585, %v6584
      %v6606 = vpack.c.bf16 %v6587, %v6586
      %v6607 = vpack.c.bf16 %v6589, %v6588
      %v6608 = vpack.c.bf16 %v6591, %v6590
      %v6609 = vpack.c.bf16 %v6593, %v6592
      %v6626 = vunpack.c.l.b16 %v6594
      %v6627 = vunpack.c.h.b16 %v6594
      %v6628 = vunpack.c.l.b16 %v6595
      %v6629 = vunpack.c.h.b16 %v6595
      %v6630 = vunpack.c.l.b16 %v6596
      %v6631 = vunpack.c.h.b16 %v6596
      %v6632 = vunpack.c.l.b16 %v6597
      %v6633 = vunpack.c.h.b16 %v6597
      %v6634 = vunpack.c.l.b16 %v6598
      %v6635 = vunpack.c.h.b16 %v6598
      %v6636 = vunpack.c.l.b16 %v6599
      %v6637 = vunpack.c.h.b16 %v6599
      %v6638 = vunpack.c.l.b16 %v6600
      %v6639 = vunpack.c.h.b16 %v6600
      %v6640 = vunpack.c.l.b16 %v6601
      %v6641 = vunpack.c.h.b16 %v6601
      %v6642 = vunpack.c.l.b16 %v6602
      %v6643 = vunpack.c.h.b16 %v6602
      %v6644 = vunpack.c.l.b16 %v6603
      %v6645 = vunpack.c.h.b16 %v6603
      %v6646 = vunpack.c.l.b16 %v6604
      %v6647 = vunpack.c.h.b16 %v6604
      %v6648 = vunpack.c.l.b16 %v6605
      %v6649 = vunpack.c.h.b16 %v6605
      %v6650 = vunpack.c.l.b16 %v6606
      %v6651 = vunpack.c.h.b16 %v6606
      %v6652 = vunpack.c.l.b16 %v6607
      %v6653 = vunpack.c.h.b16 %v6607
      %v6654 = vunpack.c.l.b16 %v6608
      %v6655 = vunpack.c.h.b16 %v6608
      %v6656 = vunpack.c.l.b16 %v6609
      %v6657 = vunpack.c.h.b16 %v6609
      %v6658 = vpack.c.b16 %v6626, %v6626
      %v6659 = vpack.c.b16 %v6627, %v6627
      %v6660 = vpack.c.b16 %v6628, %v6628
      %v6661 = vpack.c.b16 %v6629, %v6629
      %v6662 = vpack.c.b16 %v6630, %v6630
      %v6663 = vpack.c.b16 %v6631, %v6631
      %v6664 = vpack.c.b16 %v6632, %v6632
      %v6665 = vpack.c.b16 %v6633, %v6633
      %v6666 = vpack.c.b16 %v6634, %v6634
      %v6667 = vpack.c.b16 %v6635, %v6635
      %v6668 = vpack.c.b16 %v6636, %v6636
      %v6669 = vpack.c.b16 %v6637, %v6637
      %v6670 = vpack.c.b16 %v6638, %v6638
      %v6671 = vpack.c.b16 %v6639, %v6639
      %v6672 = vpack.c.b16 %v6640, %v6640
      %v6673 = vpack.c.b16 %v6641, %v6641
      %v6674 = vpack.c.b16 %v6642, %v6642
      %v6675 = vpack.c.b16 %v6643, %v6643
      %v6676 = vpack.c.b16 %v6644, %v6644
      %v6677 = vpack.c.b16 %v6645, %v6645
      %v6678 = vpack.c.b16 %v6646, %v6646
      %v6679 = vpack.c.b16 %v6647, %v6647
      %v6680 = vpack.c.b16 %v6648, %v6648
      %v6681 = vpack.c.b16 %v6649, %v6649
      %v6682 = vpack.c.b16 %v6650, %v6650
      %v6683 = vpack.c.b16 %v6651, %v6651
      %v6684 = vpack.c.b16 %v6652, %v6652
      %v6685 = vpack.c.b16 %v6653, %v6653
      %v6686 = vpack.c.b16 %v6654, %v6654
      %v6687 = vpack.c.b16 %v6655, %v6655
      %v6688 = vpack.c.b16 %v6656, %v6656
      %v6689 = vpack.c.b16 %v6657, %v6657
      %6722 = vst [vmem:[%s4799 + $0x4] sm:$0xf] %v6658
      %6723 = vst [vmem:[%s4799 + $0xc] sm:$0xf] %v6659
      %6724 = vst [vmem:[%s4799 + $0x24] sm:$0xf] %v6660
      %6725 = vst [vmem:[%s4799 + $0x2c] sm:$0xf] %v6661
      %6726 = vst [vmem:[%s4799 + $0x44] sm:$0xf] %v6662
      %6727 = vst [vmem:[%s4799 + $0x4c] sm:$0xf] %v6663
      %6728 = vst [vmem:[%s4799 + $0x64] sm:$0xf] %v6664
      %6729 = vst [vmem:[%s4799 + $0x6c] sm:$0xf] %v6665
      %6730 = vst [vmem:[%s4799 + $0x84] sm:$0xf] %v6666
      %6731 = vst [vmem:[%s4799 + $0x8c] sm:$0xf] %v6667
      %6732 = vst [vmem:[%s4799 + $0xa4] sm:$0xf] %v6668
      %6733 = vst [vmem:[%s4799 + $0xac] sm:$0xf] %v6669
      %6734 = vst [vmem:[%s4799 + $0xc4] sm:$0xf] %v6670
      %6735 = vst [vmem:[%s4799 + $0xcc] sm:$0xf] %v6671
      %6736 = vst [vmem:[%s4799 + $0xe4] sm:$0xf] %v6672
      %6737 = vst [vmem:[%s4799 + $0xec] sm:$0xf] %v6673
      %6738 = vst [vmem:[%s4799 + $0x104] sm:$0xf] %v6674
      %6739 = vst [vmem:[%s4799 + $0x10c] sm:$0xf] %v6675
      %6740 = vst [vmem:[%s4799 + $0x124] sm:$0xf] %v6676
      %6741 = vst [vmem:[%s4799 + $0x12c] sm:$0xf] %v6677
      %6742 = vst [vmem:[%s4799 + $0x144] sm:$0xf] %v6678
      %6743 = vst [vmem:[%s4799 + $0x14c] sm:$0xf] %v6679
      %6744 = vst [vmem:[%s4799 + $0x164] sm:$0xf] %v6680
      %6745 = vst [vmem:[%s4799 + $0x16c] sm:$0xf] %v6681
      %6746 = vst [vmem:[%s4799 + $0x184] sm:$0xf] %v6682
      %6747 = vst [vmem:[%s4799 + $0x18c] sm:$0xf] %v6683
      %6748 = vst [vmem:[%s4799 + $0x1a4] sm:$0xf] %v6684
      %6749 = vst [vmem:[%s4799 + $0x1ac] sm:$0xf] %v6685
      %6750 = vst [vmem:[%s4799 + $0x1c4] sm:$0xf] %v6686
      %6751 = vst [vmem:[%s4799 + $0x1cc] sm:$0xf] %v6687
      %6752 = vst [vmem:[%s4799 + $0x1e4] sm:$0xf] %v6688
      %6753 = vst [vmem:[%s4799 + $0x1ec] sm:$0xf] %v6689
      %s6754 = smul.u32 16, %s18
      %p6755 = scmp.lt.s32.totalorder %s17, 1
      %s6756 = scalar_select %p6755, %s17, 1
      %p6757 = scmp.lt.s32.totalorder %s6754, 15
      %s6758 = scalar_select %p6757, %s6754, 15
      %s6759 = smul.addr %s6758, 8
      %s6760 = smul.addr %s6756, 128
      %s6761 = sadd.s32 %s6759, %s6760
      %s6762 = smul.addr %s6761, 4
      %s6763 = scalar_lea.vmem %s2, %s6762
      // Predicated region
      $region29: #{decoder_block_forward.1} parent=27 // pred_check
        %p6764 = pneg %p92
      $region30: #{decoder_block_forward.1} parent=27 // pred_check_branch
        %6766 = sbr.rel (%p6764) target = $region32
      $region31: #{decoder_block_forward.1} parent=27 // pred_region
        %s6767 = smul.u32 16, %s18
      $region32: #{decoder_block_forward.1} parent=27 // pred_fallthru
        _
    $region28: #{decoder_block_forward.1} parent=5 // pred_fallthru
      _
    %p6768 = scmp.le.s32.totalorder 2, %s8
    // Predicated region
    $region33: #{decoder_block_forward.1} parent=5 // pred_check
      %p6769 = pneg %p6768
    $region34: #{decoder_block_forward.1} parent=5 // pred_check_branch
      %6771 = sbr.rel (%p6769) target = $region36
    $region35: #{decoder_block_forward.1} parent=5 // pred_region
      %s6772 = ssub.s32 %s8, 2
      // Predicated region
      $region37: #{decoder_block_forward.1} parent=35 // pred_check
        %p6773 = pneg %p98
      $region38: #{decoder_block_forward.1} parent=35 // pred_check_branch
        %6775 = sbr.rel (%p6773) target = $region40
      $region39: #{decoder_block_forward.1} parent=35 // pred_region
        %s6776 = smul.u32 16, %s20
        %p6777 = scmp.lt.s32.totalorder %s19, 1
        %s6778 = scalar_select %p6777, %s19, 1
        %p6779 = scmp.lt.s32.totalorder %s6776, 15
        %s6780 = scalar_select %p6779, %s6776, 15
        %s6781 = smul.addr %s6780, 8
        %s6782 = smul.addr %s6778, 128
        %s6783 = sadd.s32 %s6781, %s6782
        %s6784 = smul.addr %s6783, 4
        %s6785 = scalar_lea.vmem %s2, %s6784
      $region40: #{decoder_block_forward.1} parent=35 // pred_fallthru
        _
    $region36: #{decoder_block_forward.1} parent=5 // pred_fallthru
      _
  $region6: #{decoder_block_forward.1} parent=0 // loop_footer
    %s12 = sadd.s32 1, %s8
  $region7: #{decoder_block_forward.1} parent=0 // loop_footer_branch
    %7 = sbr.rel target = $region3
  $region8: #{decoder_block_forward.1} parent=0 // loop_exit
    _

</llo_original>
